<compile_context>
chip_gen: v5e
topology: v5e:2x2
jax: 0.10.0
libtpu: 0.0.40
codegen_flags: <defaults>
</compile_context>

<pallas_src>
import functools

import jax
import jax.numpy as jnp
from jax.experimental import pallas as pl
from jax.experimental.pallas import tpu as pltpu


def _fused_lstm_stack_kernel(x_ref, w1x_ref, w1h_ref, b1_ref,
                             w2x_ref, w2h_ref, b2_ref,
                             w3x_ref, w3h_ref, b3_ref,
                             out_ref, *, T, B, H1, H2, H3):
    """Fused 3-layer LSTM over the full sequence.

    x_ref   : (T*B, F)   time-major input, flattened over (T, B)
    w?x_ref : (Fin, 4H)  fused input->gates weights (gate order i|f|g|o)
    w?h_ref : (H, 4H)    fused hidden->gates weights
    b?_ref  : (1, 4H)    fused bias (b_ih + b_hh)
    out_ref : (B, H3)    hidden state of layer 3 at the last time step
    """
    # Prologue: hoist the layer-1 input projection (and its bias) off the
    # serial recurrent path: one lane-dense GEMM over all time steps.
    xg1 = (jnp.dot(x_ref[...], w1x_ref[...],
                   preferred_element_type=jnp.float32) + b1_ref[...])

    # Load weights / biases once; they live in vregs/VMEM for the whole loop.
    w1h = w1h_ref[...]
    w2x = w2x_ref[...]
    w2h = w2h_ref[...]
    b2 = b2_ref[...]
    w3x = w3x_ref[...]
    w3h = w3h_ref[...]
    b3 = b3_ref[...]

    def cell(pre, c, h_sz):
        i = jax.nn.sigmoid(pre[:, 0 * h_sz:1 * h_sz])
        f = jax.nn.sigmoid(pre[:, 1 * h_sz:2 * h_sz])
        g = jnp.tanh(pre[:, 2 * h_sz:3 * h_sz])
        o = jax.nn.sigmoid(pre[:, 3 * h_sz:4 * h_sz])
        c_new = f * c + i * g
        h_new = o * jnp.tanh(c_new)
        return h_new, c_new

    def zeros(h_sz):
        return jnp.zeros((B, h_sz), jnp.float32)

    h1, c1 = zeros(H1), zeros(H1)
    h2, c2 = zeros(H2), zeros(H2)
    h3, c3 = zeros(H3), zeros(H3)

    # T is tiny and static: fully unrolled time loop; all three layers are
    # advanced within the same step so intermediate hidden sequences never
    # leave on-chip memory.
    for t in range(T):
        # layer 1: input projection precomputed, only h-recurrence here
        pre1 = xg1[t * B:(t + 1) * B, :] + jnp.dot(
            h1, w1h, preferred_element_type=jnp.float32)
        h1, c1 = cell(pre1, c1, H1)

        # dropout1: identity (eval)
        # layer 2 ("lstm", num_layers=1)
        pre2 = (jnp.dot(h1, w2x, preferred_element_type=jnp.float32)
                + jnp.dot(h2, w2h, preferred_element_type=jnp.float32) + b2)
        h2, c2 = cell(pre2, c2, H2)

        # dropout2: identity (eval)
        # layer 3 ("lstm2")
        pre3 = (jnp.dot(h2, w3x, preferred_element_type=jnp.float32)
                + jnp.dot(h3, w3h, preferred_element_type=jnp.float32) + b3)
        h3, c3 = cell(pre3, c3, H3)

    out_ref[...] = h3.astype(out_ref.dtype)


def pack_lstm_params(p):
    """Repack PyTorch-layout LSTM params (4H,F)/(4H,H)/(4H,) into the
    fused-gate, MXU-friendly layout (F,4H)/(H,4H)/(1,4H).  Done once at
    parameter-setup time, not per forward call."""
    return dict(
        w_x=jnp.asarray(p["w_ih"].T, jnp.float32),                     # (F, 4H)
        w_h=jnp.asarray(p["w_hh"].T, jnp.float32),                     # (H, 4H)
        b=jnp.asarray((p["b_ih"] + p["b_hh"])[None, :], jnp.float32),  # (1, 4H)
    )


def lstm_model_forward(packed, x_btf):
    """Forward pass of LSTMModel.  x_btf: (B, T, F) -> (B, out_features)."""
    B, T, F = x_btf.shape
    H1 = packed["lstm1"]["w_h"].shape[0]
    H2 = packed["lstm"]["w_h"].shape[0]
    H3 = packed["lstm2"]["w_h"].shape[0]

    # time-major and flattened over (T, B) so the in-kernel prologue matmul
    # is one contiguous (T*B, F) @ (F, 4H) GEMM.
    x_flat = jnp.transpose(x_btf, (1, 0, 2)).reshape(T * B, F).astype(jnp.float32)

    kernel = functools.partial(_fused_lstm_stack_kernel,
                               T=T, B=B, H1=H1, H2=H2, H3=H3)

    vmem_specs = [pl.BlockSpec(memory_space=pltpu.MemorySpace.VMEM)
                  for _ in range(10)]

    return pl.pallas_call(
        kernel,
        out_shape=jax.ShapeDtypeStruct((B, H3), jnp.float32),
        in_specs=vmem_specs,
        out_specs=pl.BlockSpec(memory_space=pltpu.MemorySpace.VMEM),
    )(x_flat,
      packed["lstm1"]["w_x"], packed["lstm1"]["w_h"], packed["lstm1"]["b"],
      packed["lstm"]["w_x"], packed["lstm"]["w_h"], packed["lstm"]["b"],
      packed["lstm2"]["w_x"], packed["lstm2"]["w_h"], packed["lstm2"]["b"])


def init_lstm_params(key, input_size, hidden_size):
    """Deterministic init matching PyTorch nn.LSTM param shapes."""
    bound = 1.0 / jnp.sqrt(jnp.float32(hidden_size))
    k1, k2, k3, k4 = jax.random.split(key, 4)
    return dict(
        w_ih=jax.random.uniform(k1, (4 * hidden_size, input_size),
                                jnp.float32, -bound, bound),
        w_hh=jax.random.uniform(k2, (4 * hidden_size, hidden_size),
                                jnp.float32, -bound, bound),
        b_ih=jax.random.uniform(k3, (4 * hidden_size,),
                                jnp.float32, -bound, bound),
        b_hh=jax.random.uniform(k4, (4 * hidden_size,),
                                jnp.float32, -bound, bound),
    )


# ---------------- pure-JAX reference (for correctness check) ----------------
def _lstm_layer_ref(x_tbf, w_ih, w_hh, b_ih, b_hh):
    T, B, F = x_tbf.shape
    H = w_hh.shape[1]

    def step(carry, x_t):
        h, c = carry
        gates = x_t @ w_ih.T + b_ih + h @ w_hh.T + b_hh
        i = jax.nn.sigmoid(gates[:, 0 * H:1 * H])
        f = jax.nn.sigmoid(gates[:, 1 * H:2 * H])
        g = jnp.tanh(gates[:, 2 * H:3 * H])
        o = jax.nn.sigmoid(gates[:, 3 * H:4 * H])
        c = f * c + i * g
        h = o * jnp.tanh(c)
        return (h, c), h

    h0 = jnp.zeros((B, H), jnp.float32)
    c0 = jnp.zeros((B, H), jnp.float32)
    _, ys = jax.lax.scan(step, (h0, c0), x_tbf)
    return ys


def lstm_model_ref(params, x_btf):
    x = jnp.transpose(x_btf, (1, 0, 2))
    for name in ("lstm1", "lstm", "lstm2"):
        p = params[name]
        x = _lstm_layer_ref(x, p["w_ih"], p["w_hh"], p["b_ih"], p["b_hh"])
    return x[-1]


if __name__ == "__main__":
    # Small shapes consistent with the module: batch=2, seq=8, features=16,
    # hidden=40, out=80 (module defaults for hidden/out).
    B, T, F = 2, 8, 16
    HIDDEN, OUT = 40, 80

    root = jax.random.PRNGKey(0)
    kx, k1, k2, k3 = jax.random.split(root, 4)

    params = {
        "lstm1": init_lstm_params(k1, F, HIDDEN),
        "lstm": init_lstm_params(k2, HIDDEN, HIDDEN),
        "lstm2": init_lstm_params(k3, HIDDEN, OUT),
    }
    # one-time weight repack (fused gates, pre-added biases)
    packed = {name: pack_lstm_params(p) for name, p in params.items()}

    x = jax.random.normal(kx, (B, T, F), jnp.float32)

    out = lstm_model_forward(packed, x)
    out = jax.block_until_ready(out)
    assert out.shape == (B, OUT), out.shape

    ref = jax.block_until_ready(lstm_model_ref(params, x))
    assert jnp.allclose(out, ref, atol=5e-3, rtol=5e-3), (
        float(jnp.max(jnp.abs(out - ref))))

    print("KERNEL_OK")
</pallas_src>

<mosaic_0001>
module attributes {stable_mosaic.version = 11 : i64} {
  func.func @_fused_lstm_stack_kernel(%arg0: memref<16x16xf32, #tpu.memory_space<vmem>>, %arg1: memref<16x160xf32, #tpu.memory_space<vmem>>, %arg2: memref<40x160xf32, #tpu.memory_space<vmem>>, %arg3: memref<1x160xf32, #tpu.memory_space<vmem>>, %arg4: memref<40x160xf32, #tpu.memory_space<vmem>>, %arg5: memref<40x160xf32, #tpu.memory_space<vmem>>, %arg6: memref<1x160xf32, #tpu.memory_space<vmem>>, %arg7: memref<40x320xf32, #tpu.memory_space<vmem>>, %arg8: memref<80x320xf32, #tpu.memory_space<vmem>>, %arg9: memref<1x320xf32, #tpu.memory_space<vmem>>, %arg10: memref<2x80xf32, #tpu.memory_space<vmem>>) attributes {dimension_semantics = [], scalar_prefetch = 0 : i64, scratch_operands = 0 : i64, tpu.core_type = #tpu.core_type<tc>} {
    %c0 = arith.constant 0 : index
    %c0_0 = arith.constant 0 : index
    %0 = vector.load %arg0[%c0, %c0_0] : memref<16x16xf32, #tpu.memory_space<vmem>>, vector<16x16xf32>
    %c0_1 = arith.constant 0 : index
    %c0_2 = arith.constant 0 : index
    %1 = vector.load %arg1[%c0_1, %c0_2] : memref<16x160xf32, #tpu.memory_space<vmem>>, vector<16x160xf32>
    %cst = arith.constant dense<0.000000e+00> : vector<16x160xf32>
    %2 = tpu.matmul %0, %1, %cst {dimension_numbers = #tpu.dot_dimension_numbers<[1], [0], [0], [1], [0, 0, 1, 1], [], []>} : vector<16x16xf32>, vector<16x160xf32>, vector<16x160xf32> -> vector<16x160xf32>
    %c0_3 = arith.constant 0 : index
    %c0_4 = arith.constant 0 : index
    %3 = vector.load %arg3[%c0_3, %c0_4] : memref<1x160xf32, #tpu.memory_space<vmem>>, vector<1x160xf32>
    %4 = vector.broadcast %3 : vector<1x160xf32> to vector<16x160xf32>
    %5 = arith.addf %2, %4 : vector<16x160xf32>
    %c0_5 = arith.constant 0 : index
    %c0_6 = arith.constant 0 : index
    %6 = vector.load %arg2[%c0_5, %c0_6] : memref<40x160xf32, #tpu.memory_space<vmem>>, vector<40x160xf32>
    %c0_7 = arith.constant 0 : index
    %c0_8 = arith.constant 0 : index
    %7 = vector.load %arg4[%c0_7, %c0_8] : memref<40x160xf32, #tpu.memory_space<vmem>>, vector<40x160xf32>
    %c0_9 = arith.constant 0 : index
    %c0_10 = arith.constant 0 : index
    %8 = vector.load %arg5[%c0_9, %c0_10] : memref<40x160xf32, #tpu.memory_space<vmem>>, vector<40x160xf32>
    %c0_11 = arith.constant 0 : index
    %c0_12 = arith.constant 0 : index
    %9 = vector.load %arg6[%c0_11, %c0_12] : memref<1x160xf32, #tpu.memory_space<vmem>>, vector<1x160xf32>
    %c0_13 = arith.constant 0 : index
    %c0_14 = arith.constant 0 : index
    %10 = vector.load %arg7[%c0_13, %c0_14] : memref<40x320xf32, #tpu.memory_space<vmem>>, vector<40x320xf32>
    %c0_15 = arith.constant 0 : index
    %c0_16 = arith.constant 0 : index
    %11 = vector.load %arg8[%c0_15, %c0_16] : memref<80x320xf32, #tpu.memory_space<vmem>>, vector<80x320xf32>
    %c0_17 = arith.constant 0 : index
    %c0_18 = arith.constant 0 : index
    %12 = vector.load %arg9[%c0_17, %c0_18] : memref<1x320xf32, #tpu.memory_space<vmem>>, vector<1x320xf32>
    %cst_19 = arith.constant 0.000000e+00 : f32
    %13 = vector.broadcast %cst_19 : f32 to vector<2x40xf32>
    %cst_20 = arith.constant 0.000000e+00 : f32
    %14 = vector.broadcast %cst_20 : f32 to vector<2x40xf32>
    %cst_21 = arith.constant 0.000000e+00 : f32
    %15 = vector.broadcast %cst_21 : f32 to vector<2x40xf32>
    %cst_22 = arith.constant 0.000000e+00 : f32
    %16 = vector.broadcast %cst_22 : f32 to vector<2x40xf32>
    %cst_23 = arith.constant 0.000000e+00 : f32
    %17 = vector.broadcast %cst_23 : f32 to vector<2x80xf32>
    %cst_24 = arith.constant 0.000000e+00 : f32
    %18 = vector.broadcast %cst_24 : f32 to vector<2x80xf32>
    %19 = vector.extract_strided_slice %5 {offsets = [0, 0], sizes = [2, 160], strides = [1, 1]} : vector<16x160xf32> to vector<2x160xf32>
    %cst_25 = arith.constant dense<0.000000e+00> : vector<2x160xf32>
    %20 = tpu.matmul %13, %6, %cst_25 {dimension_numbers = #tpu.dot_dimension_numbers<[1], [0], [0], [1], [0, 0, 1, 1], [], []>} : vector<2x40xf32>, vector<40x160xf32>, vector<2x160xf32> -> vector<2x160xf32>
    %21 = arith.addf %19, %20 : vector<2x160xf32>
    %22 = vector.extract_strided_slice %21 {offsets = [0, 0], sizes = [2, 40], strides = [1, 1]} : vector<2x160xf32> to vector<2x40xf32>
    %23 = arith.negf %22 : vector<2x40xf32>
    %24 = math.exp %23 : vector<2x40xf32>
    %cst_26 = arith.constant 1.000000e+00 : f32
    %25 = vector.broadcast %cst_26 : f32 to vector<2x40xf32>
    %26 = arith.addf %25, %24 : vector<2x40xf32>
    %27 = arith.divf %25, %26 : vector<2x40xf32>
    %28 = vector.extract_strided_slice %21 {offsets = [0, 40], sizes = [2, 40], strides = [1, 1]} : vector<2x160xf32> to vector<2x40xf32>
    %29 = arith.negf %28 : vector<2x40xf32>
    %30 = math.exp %29 : vector<2x40xf32>
    %cst_27 = arith.constant 1.000000e+00 : f32
    %31 = vector.broadcast %cst_27 : f32 to vector<2x40xf32>
    %32 = arith.addf %31, %30 : vector<2x40xf32>
    %33 = arith.divf %31, %32 : vector<2x40xf32>
    %34 = vector.extract_strided_slice %21 {offsets = [0, 80], sizes = [2, 40], strides = [1, 1]} : vector<2x160xf32> to vector<2x40xf32>
    %35 = math.tanh %34 : vector<2x40xf32>
    %36 = vector.extract_strided_slice %21 {offsets = [0, 120], sizes = [2, 40], strides = [1, 1]} : vector<2x160xf32> to vector<2x40xf32>
    %37 = arith.negf %36 : vector<2x40xf32>
    %38 = math.exp %37 : vector<2x40xf32>
    %cst_28 = arith.constant 1.000000e+00 : f32
    %39 = vector.broadcast %cst_28 : f32 to vector<2x40xf32>
    %40 = arith.addf %39, %38 : vector<2x40xf32>
    %41 = arith.divf %39, %40 : vector<2x40xf32>
    %42 = arith.mulf %33, %14 : vector<2x40xf32>
    %43 = arith.mulf %27, %35 : vector<2x40xf32>
    %44 = arith.addf %42, %43 : vector<2x40xf32>
    %45 = math.tanh %44 : vector<2x40xf32>
    %46 = arith.mulf %41, %45 : vector<2x40xf32>
    %cst_29 = arith.constant dense<0.000000e+00> : vector<2x160xf32>
    %47 = tpu.matmul %46, %7, %cst_29 {dimension_numbers = #tpu.dot_dimension_numbers<[1], [0], [0], [1], [0, 0, 1, 1], [], []>} : vector<2x40xf32>, vector<40x160xf32>, vector<2x160xf32> -> vector<2x160xf32>
    %cst_30 = arith.constant dense<0.000000e+00> : vector<2x160xf32>
    %48 = tpu.matmul %15, %8, %cst_30 {dimension_numbers = #tpu.dot_dimension_numbers<[1], [0], [0], [1], [0, 0, 1, 1], [], []>} : vector<2x40xf32>, vector<40x160xf32>, vector<2x160xf32> -> vector<2x160xf32>
    %49 = arith.addf %47, %48 : vector<2x160xf32>
    %50 = vector.broadcast %9 : vector<1x160xf32> to vector<2x160xf32>
    %51 = arith.addf %49, %50 : vector<2x160xf32>
    %52 = vector.extract_strided_slice %51 {offsets = [0, 0], sizes = [2, 40], strides = [1, 1]} : vector<2x160xf32> to vector<2x40xf32>
    %53 = arith.negf %52 : vector<2x40xf32>
    %54 = math.exp %53 : vector<2x40xf32>
    %cst_31 = arith.constant 1.000000e+00 : f32
    %55 = vector.broadcast %cst_31 : f32 to vector<2x40xf32>
    %56 = arith.addf %55, %54 : vector<2x40xf32>
    %57 = arith.divf %55, %56 : vector<2x40xf32>
    %58 = vector.extract_strided_slice %51 {offsets = [0, 40], sizes = [2, 40], strides = [1, 1]} : vector<2x160xf32> to vector<2x40xf32>
    %59 = arith.negf %58 : vector<2x40xf32>
    %60 = math.exp %59 : vector<2x40xf32>
    %cst_32 = arith.constant 1.000000e+00 : f32
    %61 = vector.broadcast %cst_32 : f32 to vector<2x40xf32>
    %62 = arith.addf %61, %60 : vector<2x40xf32>
    %63 = arith.divf %61, %62 : vector<2x40xf32>
    %64 = vector.extract_strided_slice %51 {offsets = [0, 80], sizes = [2, 40], strides = [1, 1]} : vector<2x160xf32> to vector<2x40xf32>
    %65 = math.tanh %64 : vector<2x40xf32>
    %66 = vector.extract_strided_slice %51 {offsets = [0, 120], sizes = [2, 40], strides = [1, 1]} : vector<2x160xf32> to vector<2x40xf32>
    %67 = arith.negf %66 : vector<2x40xf32>
    %68 = math.exp %67 : vector<2x40xf32>
    %cst_33 = arith.constant 1.000000e+00 : f32
    %69 = vector.broadcast %cst_33 : f32 to vector<2x40xf32>
    %70 = arith.addf %69, %68 : vector<2x40xf32>
    %71 = arith.divf %69, %70 : vector<2x40xf32>
    %72 = arith.mulf %63, %16 : vector<2x40xf32>
    %73 = arith.mulf %57, %65 : vector<2x40xf32>
    %74 = arith.addf %72, %73 : vector<2x40xf32>
    %75 = math.tanh %74 : vector<2x40xf32>
    %76 = arith.mulf %71, %75 : vector<2x40xf32>
    %cst_34 = arith.constant dense<0.000000e+00> : vector<2x320xf32>
    %77 = tpu.matmul %76, %10, %cst_34 {dimension_numbers = #tpu.dot_dimension_numbers<[1], [0], [0], [1], [0, 0, 1, 1], [], []>} : vector<2x40xf32>, vector<40x320xf32>, vector<2x320xf32> -> vector<2x320xf32>
    %cst_35 = arith.constant dense<0.000000e+00> : vector<2x320xf32>
    %78 = tpu.matmul %17, %11, %cst_35 {dimension_numbers = #tpu.dot_dimension_numbers<[1], [0], [0], [1], [0, 0, 1, 1], [], []>} : vector<2x80xf32>, vector<80x320xf32>, vector<2x320xf32> -> vector<2x320xf32>
    %79 = arith.addf %77, %78 : vector<2x320xf32>
    %80 = vector.broadcast %12 : vector<1x320xf32> to vector<2x320xf32>
    %81 = arith.addf %79, %80 : vector<2x320xf32>
    %82 = vector.extract_strided_slice %81 {offsets = [0, 0], sizes = [2, 80], strides = [1, 1]} : vector<2x320xf32> to vector<2x80xf32>
    %83 = arith.negf %82 : vector<2x80xf32>
    %84 = math.exp %83 : vector<2x80xf32>
    %cst_36 = arith.constant 1.000000e+00 : f32
    %85 = vector.broadcast %cst_36 : f32 to vector<2x80xf32>
    %86 = arith.addf %85, %84 : vector<2x80xf32>
    %87 = arith.divf %85, %86 : vector<2x80xf32>
    %88 = vector.extract_strided_slice %81 {offsets = [0, 80], sizes = [2, 80], strides = [1, 1]} : vector<2x320xf32> to vector<2x80xf32>
    %89 = arith.negf %88 : vector<2x80xf32>
    %90 = math.exp %89 : vector<2x80xf32>
    %cst_37 = arith.constant 1.000000e+00 : f32
    %91 = vector.broadcast %cst_37 : f32 to vector<2x80xf32>
    %92 = arith.addf %91, %90 : vector<2x80xf32>
    %93 = arith.divf %91, %92 : vector<2x80xf32>
    %94 = vector.extract_strided_slice %81 {offsets = [0, 160], sizes = [2, 80], strides = [1, 1]} : vector<2x320xf32> to vector<2x80xf32>
    %95 = math.tanh %94 : vector<2x80xf32>
    %96 = vector.extract_strided_slice %81 {offsets = [0, 240], sizes = [2, 80], strides = [1, 1]} : vector<2x320xf32> to vector<2x80xf32>
    %97 = arith.negf %96 : vector<2x80xf32>
    %98 = math.exp %97 : vector<2x80xf32>
    %cst_38 = arith.constant 1.000000e+00 : f32
    %99 = vector.broadcast %cst_38 : f32 to vector<2x80xf32>
    %100 = arith.addf %99, %98 : vector<2x80xf32>
    %101 = arith.divf %99, %100 : vector<2x80xf32>
    %102 = arith.mulf %93, %18 : vector<2x80xf32>
    %103 = arith.mulf %87, %95 : vector<2x80xf32>
    %104 = arith.addf %102, %103 : vector<2x80xf32>
    %105 = math.tanh %104 : vector<2x80xf32>
    %106 = arith.mulf %101, %105 : vector<2x80xf32>
    %107 = vector.extract_strided_slice %5 {offsets = [2, 0], sizes = [2, 160], strides = [1, 1]} : vector<16x160xf32> to vector<2x160xf32>
    %cst_39 = arith.constant dense<0.000000e+00> : vector<2x160xf32>
    %108 = tpu.matmul %46, %6, %cst_39 {dimension_numbers = #tpu.dot_dimension_numbers<[1], [0], [0], [1], [0, 0, 1, 1], [], []>} : vector<2x40xf32>, vector<40x160xf32>, vector<2x160xf32> -> vector<2x160xf32>
    %109 = arith.addf %107, %108 : vector<2x160xf32>
    %110 = vector.extract_strided_slice %109 {offsets = [0, 0], sizes = [2, 40], strides = [1, 1]} : vector<2x160xf32> to vector<2x40xf32>
    %111 = arith.negf %110 : vector<2x40xf32>
    %112 = math.exp %111 : vector<2x40xf32>
    %cst_40 = arith.constant 1.000000e+00 : f32
    %113 = vector.broadcast %cst_40 : f32 to vector<2x40xf32>
    %114 = arith.addf %113, %112 : vector<2x40xf32>
    %115 = arith.divf %113, %114 : vector<2x40xf32>
    %116 = vector.extract_strided_slice %109 {offsets = [0, 40], sizes = [2, 40], strides = [1, 1]} : vector<2x160xf32> to vector<2x40xf32>
    %117 = arith.negf %116 : vector<2x40xf32>
    %118 = math.exp %117 : vector<2x40xf32>
    %cst_41 = arith.constant 1.000000e+00 : f32
    %119 = vector.broadcast %cst_41 : f32 to vector<2x40xf32>
    %120 = arith.addf %119, %118 : vector<2x40xf32>
    %121 = arith.divf %119, %120 : vector<2x40xf32>
    %122 = vector.extract_strided_slice %109 {offsets = [0, 80], sizes = [2, 40], strides = [1, 1]} : vector<2x160xf32> to vector<2x40xf32>
    %123 = math.tanh %122 : vector<2x40xf32>
    %124 = vector.extract_strided_slice %109 {offsets = [0, 120], sizes = [2, 40], strides = [1, 1]} : vector<2x160xf32> to vector<2x40xf32>
    %125 = arith.negf %124 : vector<2x40xf32>
    %126 = math.exp %125 : vector<2x40xf32>
    %cst_42 = arith.constant 1.000000e+00 : f32
    %127 = vector.broadcast %cst_42 : f32 to vector<2x40xf32>
    %128 = arith.addf %127, %126 : vector<2x40xf32>
    %129 = arith.divf %127, %128 : vector<2x40xf32>
    %130 = arith.mulf %121, %44 : vector<2x40xf32>
    %131 = arith.mulf %115, %123 : vector<2x40xf32>
    %132 = arith.addf %130, %131 : vector<2x40xf32>
    %133 = math.tanh %132 : vector<2x40xf32>
    %134 = arith.mulf %129, %133 : vector<2x40xf32>
    %cst_43 = arith.constant dense<0.000000e+00> : vector<2x160xf32>
    %135 = tpu.matmul %134, %7, %cst_43 {dimension_numbers = #tpu.dot_dimension_numbers<[1], [0], [0], [1], [0, 0, 1, 1], [], []>} : vector<2x40xf32>, vector<40x160xf32>, vector<2x160xf32> -> vector<2x160xf32>
    %cst_44 = arith.constant dense<0.000000e+00> : vector<2x160xf32>
    %136 = tpu.matmul %76, %8, %cst_44 {dimension_numbers = #tpu.dot_dimension_numbers<[1], [0], [0], [1], [0, 0, 1, 1], [], []>} : vector<2x40xf32>, vector<40x160xf32>, vector<2x160xf32> -> vector<2x160xf32>
    %137 = arith.addf %135, %136 : vector<2x160xf32>
    %138 = vector.broadcast %9 : vector<1x160xf32> to vector<2x160xf32>
    %139 = arith.addf %137, %138 : vector<2x160xf32>
    %140 = vector.extract_strided_slice %139 {offsets = [0, 0], sizes = [2, 40], strides = [1, 1]} : vector<2x160xf32> to vector<2x40xf32>
    %141 = arith.negf %140 : vector<2x40xf32>
    %142 = math.exp %141 : vector<2x40xf32>
    %cst_45 = arith.constant 1.000000e+00 : f32
    %143 = vector.broadcast %cst_45 : f32 to vector<2x40xf32>
    %144 = arith.addf %143, %142 : vector<2x40xf32>
    %145 = arith.divf %143, %144 : vector<2x40xf32>
    %146 = vector.extract_strided_slice %139 {offsets = [0, 40], sizes = [2, 40], strides = [1, 1]} : vector<2x160xf32> to vector<2x40xf32>
    %147 = arith.negf %146 : vector<2x40xf32>
    %148 = math.exp %147 : vector<2x40xf32>
    %cst_46 = arith.constant 1.000000e+00 : f32
    %149 = vector.broadcast %cst_46 : f32 to vector<2x40xf32>
    %150 = arith.addf %149, %148 : vector<2x40xf32>
    %151 = arith.divf %149, %150 : vector<2x40xf32>
    %152 = vector.extract_strided_slice %139 {offsets = [0, 80], sizes = [2, 40], strides = [1, 1]} : vector<2x160xf32> to vector<2x40xf32>
    %153 = math.tanh %152 : vector<2x40xf32>
    %154 = vector.extract_strided_slice %139 {offsets = [0, 120], sizes = [2, 40], strides = [1, 1]} : vector<2x160xf32> to vector<2x40xf32>
    %155 = arith.negf %154 : vector<2x40xf32>
    %156 = math.exp %155 : vector<2x40xf32>
    %cst_47 = arith.constant 1.000000e+00 : f32
    %157 = vector.broadcast %cst_47 : f32 to vector<2x40xf32>
    %158 = arith.addf %157, %156 : vector<2x40xf32>
    %159 = arith.divf %157, %158 : vector<2x40xf32>
    %160 = arith.mulf %151, %74 : vector<2x40xf32>
    %161 = arith.mulf %145, %153 : vector<2x40xf32>
    %162 = arith.addf %160, %161 : vector<2x40xf32>
    %163 = math.tanh %162 : vector<2x40xf32>
    %164 = arith.mulf %159, %163 : vector<2x40xf32>
    %cst_48 = arith.constant dense<0.000000e+00> : vector<2x320xf32>
    %165 = tpu.matmul %164, %10, %cst_48 {dimension_numbers = #tpu.dot_dimension_numbers<[1], [0], [0], [1], [0, 0, 1, 1], [], []>} : vector<2x40xf32>, vector<40x320xf32>, vector<2x320xf32> -> vector<2x320xf32>
    %cst_49 = arith.constant dense<0.000000e+00> : vector<2x320xf32>
    %166 = tpu.matmul %106, %11, %cst_49 {dimension_numbers = #tpu.dot_dimension_numbers<[1], [0], [0], [1], [0, 0, 1, 1], [], []>} : vector<2x80xf32>, vector<80x320xf32>, vector<2x320xf32> -> vector<2x320xf32>
    %167 = arith.addf %165, %166 : vector<2x320xf32>
    %168 = vector.broadcast %12 : vector<1x320xf32> to vector<2x320xf32>
    %169 = arith.addf %167, %168 : vector<2x320xf32>
    %170 = vector.extract_strided_slice %169 {offsets = [0, 0], sizes = [2, 80], strides = [1, 1]} : vector<2x320xf32> to vector<2x80xf32>
    %171 = arith.negf %170 : vector<2x80xf32>
    %172 = math.exp %171 : vector<2x80xf32>
    %cst_50 = arith.constant 1.000000e+00 : f32
    %173 = vector.broadcast %cst_50 : f32 to vector<2x80xf32>
    %174 = arith.addf %173, %172 : vector<2x80xf32>
    %175 = arith.divf %173, %174 : vector<2x80xf32>
    %176 = vector.extract_strided_slice %169 {offsets = [0, 80], sizes = [2, 80], strides = [1, 1]} : vector<2x320xf32> to vector<2x80xf32>
    %177 = arith.negf %176 : vector<2x80xf32>
    %178 = math.exp %177 : vector<2x80xf32>
    %cst_51 = arith.constant 1.000000e+00 : f32
    %179 = vector.broadcast %cst_51 : f32 to vector<2x80xf32>
    %180 = arith.addf %179, %178 : vector<2x80xf32>
    %181 = arith.divf %179, %180 : vector<2x80xf32>
    %182 = vector.extract_strided_slice %169 {offsets = [0, 160], sizes = [2, 80], strides = [1, 1]} : vector<2x320xf32> to vector<2x80xf32>
    %183 = math.tanh %182 : vector<2x80xf32>
    %184 = vector.extract_strided_slice %169 {offsets = [0, 240], sizes = [2, 80], strides = [1, 1]} : vector<2x320xf32> to vector<2x80xf32>
    %185 = arith.negf %184 : vector<2x80xf32>
    %186 = math.exp %185 : vector<2x80xf32>
    %cst_52 = arith.constant 1.000000e+00 : f32
    %187 = vector.broadcast %cst_52 : f32 to vector<2x80xf32>
    %188 = arith.addf %187, %186 : vector<2x80xf32>
    %189 = arith.divf %187, %188 : vector<2x80xf32>
    %190 = arith.mulf %181, %104 : vector<2x80xf32>
    %191 = arith.mulf %175, %183 : vector<2x80xf32>
    %192 = arith.addf %190, %191 : vector<2x80xf32>
    %193 = math.tanh %192 : vector<2x80xf32>
    %194 = arith.mulf %189, %193 : vector<2x80xf32>
    %195 = vector.extract_strided_slice %5 {offsets = [4, 0], sizes = [2, 160], strides = [1, 1]} : vector<16x160xf32> to vector<2x160xf32>
    %cst_53 = arith.constant dense<0.000000e+00> : vector<2x160xf32>
    %196 = tpu.matmul %134, %6, %cst_53 {dimension_numbers = #tpu.dot_dimension_numbers<[1], [0], [0], [1], [0, 0, 1, 1], [], []>} : vector<2x40xf32>, vector<40x160xf32>, vector<2x160xf32> -> vector<2x160xf32>
    %197 = arith.addf %195, %196 : vector<2x160xf32>
    %198 = vector.extract_strided_slice %197 {offsets = [0, 0], sizes = [2, 40], strides = [1, 1]} : vector<2x160xf32> to vector<2x40xf32>
    %199 = arith.negf %198 : vector<2x40xf32>
    %200 = math.exp %199 : vector<2x40xf32>
    %cst_54 = arith.constant 1.000000e+00 : f32
    %201 = vector.broadcast %cst_54 : f32 to vector<2x40xf32>
    %202 = arith.addf %201, %200 : vector<2x40xf32>
    %203 = arith.divf %201, %202 : vector<2x40xf32>
    %204 = vector.extract_strided_slice %197 {offsets = [0, 40], sizes = [2, 40], strides = [1, 1]} : vector<2x160xf32> to vector<2x40xf32>
    %205 = arith.negf %204 : vector<2x40xf32>
    %206 = math.exp %205 : vector<2x40xf32>
    %cst_55 = arith.constant 1.000000e+00 : f32
    %207 = vector.broadcast %cst_55 : f32 to vector<2x40xf32>
    %208 = arith.addf %207, %206 : vector<2x40xf32>
    %209 = arith.divf %207, %208 : vector<2x40xf32>
    %210 = vector.extract_strided_slice %197 {offsets = [0, 80], sizes = [2, 40], strides = [1, 1]} : vector<2x160xf32> to vector<2x40xf32>
    %211 = math.tanh %210 : vector<2x40xf32>
    %212 = vector.extract_strided_slice %197 {offsets = [0, 120], sizes = [2, 40], strides = [1, 1]} : vector<2x160xf32> to vector<2x40xf32>
    %213 = arith.negf %212 : vector<2x40xf32>
    %214 = math.exp %213 : vector<2x40xf32>
    %cst_56 = arith.constant 1.000000e+00 : f32
    %215 = vector.broadcast %cst_56 : f32 to vector<2x40xf32>
    %216 = arith.addf %215, %214 : vector<2x40xf32>
    %217 = arith.divf %215, %216 : vector<2x40xf32>
    %218 = arith.mulf %209, %132 : vector<2x40xf32>
    %219 = arith.mulf %203, %211 : vector<2x40xf32>
    %220 = arith.addf %218, %219 : vector<2x40xf32>
    %221 = math.tanh %220 : vector<2x40xf32>
    %222 = arith.mulf %217, %221 : vector<2x40xf32>
    %cst_57 = arith.constant dense<0.000000e+00> : vector<2x160xf32>
    %223 = tpu.matmul %222, %7, %cst_57 {dimension_numbers = #tpu.dot_dimension_numbers<[1], [0], [0], [1], [0, 0, 1, 1], [], []>} : vector<2x40xf32>, vector<40x160xf32>, vector<2x160xf32> -> vector<2x160xf32>
    %cst_58 = arith.constant dense<0.000000e+00> : vector<2x160xf32>
    %224 = tpu.matmul %164, %8, %cst_58 {dimension_numbers = #tpu.dot_dimension_numbers<[1], [0], [0], [1], [0, 0, 1, 1], [], []>} : vector<2x40xf32>, vector<40x160xf32>, vector<2x160xf32> -> vector<2x160xf32>
    %225 = arith.addf %223, %224 : vector<2x160xf32>
    %226 = vector.broadcast %9 : vector<1x160xf32> to vector<2x160xf32>
    %227 = arith.addf %225, %226 : vector<2x160xf32>
    %228 = vector.extract_strided_slice %227 {offsets = [0, 0], sizes = [2, 40], strides = [1, 1]} : vector<2x160xf32> to vector<2x40xf32>
    %229 = arith.negf %228 : vector<2x40xf32>
    %230 = math.exp %229 : vector<2x40xf32>
    %cst_59 = arith.constant 1.000000e+00 : f32
    %231 = vector.broadcast %cst_59 : f32 to vector<2x40xf32>
    %232 = arith.addf %231, %230 : vector<2x40xf32>
    %233 = arith.divf %231, %232 : vector<2x40xf32>
    %234 = vector.extract_strided_slice %227 {offsets = [0, 40], sizes = [2, 40], strides = [1, 1]} : vector<2x160xf32> to vector<2x40xf32>
    %235 = arith.negf %234 : vector<2x40xf32>
    %236 = math.exp %235 : vector<2x40xf32>
    %cst_60 = arith.constant 1.000000e+00 : f32
    %237 = vector.broadcast %cst_60 : f32 to vector<2x40xf32>
    %238 = arith.addf %237, %236 : vector<2x40xf32>
    %239 = arith.divf %237, %238 : vector<2x40xf32>
    %240 = vector.extract_strided_slice %227 {offsets = [0, 80], sizes = [2, 40], strides = [1, 1]} : vector<2x160xf32> to vector<2x40xf32>
    %241 = math.tanh %240 : vector<2x40xf32>
    %242 = vector.extract_strided_slice %227 {offsets = [0, 120], sizes = [2, 40], strides = [1, 1]} : vector<2x160xf32> to vector<2x40xf32>
    %243 = arith.negf %242 : vector<2x40xf32>
    %244 = math.exp %243 : vector<2x40xf32>
    %cst_61 = arith.constant 1.000000e+00 : f32
    %245 = vector.broadcast %cst_61 : f32 to vector<2x40xf32>
    %246 = arith.addf %245, %244 : vector<2x40xf32>
    %247 = arith.divf %245, %246 : vector<2x40xf32>
    %248 = arith.mulf %239, %162 : vector<2x40xf32>
    %249 = arith.mulf %233, %241 : vector<2x40xf32>
    %250 = arith.addf %248, %249 : vector<2x40xf32>
    %251 = math.tanh %250 : vector<2x40xf32>
    %252 = arith.mulf %247, %251 : vector<2x40xf32>
    %cst_62 = arith.constant dense<0.000000e+00> : vector<2x320xf32>
    %253 = tpu.matmul %252, %10, %cst_62 {dimension_numbers = #tpu.dot_dimension_numbers<[1], [0], [0], [1], [0, 0, 1, 1], [], []>} : vector<2x40xf32>, vector<40x320xf32>, vector<2x320xf32> -> vector<2x320xf32>
    %cst_63 = arith.constant dense<0.000000e+00> : vector<2x320xf32>
    %254 = tpu.matmul %194, %11, %cst_63 {dimension_numbers = #tpu.dot_dimension_numbers<[1], [0], [0], [1], [0, 0, 1, 1], [], []>} : vector<2x80xf32>, vector<80x320xf32>, vector<2x320xf32> -> vector<2x320xf32>
    %255 = arith.addf %253, %254 : vector<2x320xf32>
    %256 = vector.broadcast %12 : vector<1x320xf32> to vector<2x320xf32>
    %257 = arith.addf %255, %256 : vector<2x320xf32>
    %258 = vector.extract_strided_slice %257 {offsets = [0, 0], sizes = [2, 80], strides = [1, 1]} : vector<2x320xf32> to vector<2x80xf32>
    %259 = arith.negf %258 : vector<2x80xf32>
    %260 = math.exp %259 : vector<2x80xf32>
    %cst_64 = arith.constant 1.000000e+00 : f32
    %261 = vector.broadcast %cst_64 : f32 to vector<2x80xf32>
    %262 = arith.addf %261, %260 : vector<2x80xf32>
    %263 = arith.divf %261, %262 : vector<2x80xf32>
    %264 = vector.extract_strided_slice %257 {offsets = [0, 80], sizes = [2, 80], strides = [1, 1]} : vector<2x320xf32> to vector<2x80xf32>
    %265 = arith.negf %264 : vector<2x80xf32>
    %266 = math.exp %265 : vector<2x80xf32>
    %cst_65 = arith.constant 1.000000e+00 : f32
    %267 = vector.broadcast %cst_65 : f32 to vector<2x80xf32>
    %268 = arith.addf %267, %266 : vector<2x80xf32>
    %269 = arith.divf %267, %268 : vector<2x80xf32>
    %270 = vector.extract_strided_slice %257 {offsets = [0, 160], sizes = [2, 80], strides = [1, 1]} : vector<2x320xf32> to vector<2x80xf32>
    %271 = math.tanh %270 : vector<2x80xf32>
    %272 = vector.extract_strided_slice %257 {offsets = [0, 240], sizes = [2, 80], strides = [1, 1]} : vector<2x320xf32> to vector<2x80xf32>
    %273 = arith.negf %272 : vector<2x80xf32>
    %274 = math.exp %273 : vector<2x80xf32>
    %cst_66 = arith.constant 1.000000e+00 : f32
    %275 = vector.broadcast %cst_66 : f32 to vector<2x80xf32>
    %276 = arith.addf %275, %274 : vector<2x80xf32>
    %277 = arith.divf %275, %276 : vector<2x80xf32>
    %278 = arith.mulf %269, %192 : vector<2x80xf32>
    %279 = arith.mulf %263, %271 : vector<2x80xf32>
    %280 = arith.addf %278, %279 : vector<2x80xf32>
    %281 = math.tanh %280 : vector<2x80xf32>
    %282 = arith.mulf %277, %281 : vector<2x80xf32>
    %283 = vector.extract_strided_slice %5 {offsets = [6, 0], sizes = [2, 160], strides = [1, 1]} : vector<16x160xf32> to vector<2x160xf32>
    %cst_67 = arith.constant dense<0.000000e+00> : vector<2x160xf32>
    %284 = tpu.matmul %222, %6, %cst_67 {dimension_numbers = #tpu.dot_dimension_numbers<[1], [0], [0], [1], [0, 0, 1, 1], [], []>} : vector<2x40xf32>, vector<40x160xf32>, vector<2x160xf32> -> vector<2x160xf32>
    %285 = arith.addf %283, %284 : vector<2x160xf32>
    %286 = vector.extract_strided_slice %285 {offsets = [0, 0], sizes = [2, 40], strides = [1, 1]} : vector<2x160xf32> to vector<2x40xf32>
    %287 = arith.negf %286 : vector<2x40xf32>
    %288 = math.exp %287 : vector<2x40xf32>
    %cst_68 = arith.constant 1.000000e+00 : f32
    %289 = vector.broadcast %cst_68 : f32 to vector<2x40xf32>
    %290 = arith.addf %289, %288 : vector<2x40xf32>
    %291 = arith.divf %289, %290 : vector<2x40xf32>
    %292 = vector.extract_strided_slice %285 {offsets = [0, 40], sizes = [2, 40], strides = [1, 1]} : vector<2x160xf32> to vector<2x40xf32>
    %293 = arith.negf %292 : vector<2x40xf32>
    %294 = math.exp %293 : vector<2x40xf32>
    %cst_69 = arith.constant 1.000000e+00 : f32
    %295 = vector.broadcast %cst_69 : f32 to vector<2x40xf32>
    %296 = arith.addf %295, %294 : vector<2x40xf32>
    %297 = arith.divf %295, %296 : vector<2x40xf32>
    %298 = vector.extract_strided_slice %285 {offsets = [0, 80], sizes = [2, 40], strides = [1, 1]} : vector<2x160xf32> to vector<2x40xf32>
    %299 = math.tanh %298 : vector<2x40xf32>
    %300 = vector.extract_strided_slice %285 {offsets = [0, 120], sizes = [2, 40], strides = [1, 1]} : vector<2x160xf32> to vector<2x40xf32>
    %301 = arith.negf %300 : vector<2x40xf32>
    %302 = math.exp %301 : vector<2x40xf32>
    %cst_70 = arith.constant 1.000000e+00 : f32
    %303 = vector.broadcast %cst_70 : f32 to vector<2x40xf32>
    %304 = arith.addf %303, %302 : vector<2x40xf32>
    %305 = arith.divf %303, %304 : vector<2x40xf32>
    %306 = arith.mulf %297, %220 : vector<2x40xf32>
    %307 = arith.mulf %291, %299 : vector<2x40xf32>
    %308 = arith.addf %306, %307 : vector<2x40xf32>
    %309 = math.tanh %308 : vector<2x40xf32>
    %310 = arith.mulf %305, %309 : vector<2x40xf32>
    %cst_71 = arith.constant dense<0.000000e+00> : vector<2x160xf32>
    %311 = tpu.matmul %310, %7, %cst_71 {dimension_numbers = #tpu.dot_dimension_numbers<[1], [0], [0], [1], [0, 0, 1, 1], [], []>} : vector<2x40xf32>, vector<40x160xf32>, vector<2x160xf32> -> vector<2x160xf32>
    %cst_72 = arith.constant dense<0.000000e+00> : vector<2x160xf32>
    %312 = tpu.matmul %252, %8, %cst_72 {dimension_numbers = #tpu.dot_dimension_numbers<[1], [0], [0], [1], [0, 0, 1, 1], [], []>} : vector<2x40xf32>, vector<40x160xf32>, vector<2x160xf32> -> vector<2x160xf32>
    %313 = arith.addf %311, %312 : vector<2x160xf32>
    %314 = vector.broadcast %9 : vector<1x160xf32> to vector<2x160xf32>
    %315 = arith.addf %313, %314 : vector<2x160xf32>
    %316 = vector.extract_strided_slice %315 {offsets = [0, 0], sizes = [2, 40], strides = [1, 1]} : vector<2x160xf32> to vector<2x40xf32>
    %317 = arith.negf %316 : vector<2x40xf32>
    %318 = math.exp %317 : vector<2x40xf32>
    %cst_73 = arith.constant 1.000000e+00 : f32
    %319 = vector.broadcast %cst_73 : f32 to vector<2x40xf32>
    %320 = arith.addf %319, %318 : vector<2x40xf32>
    %321 = arith.divf %319, %320 : vector<2x40xf32>
    %322 = vector.extract_strided_slice %315 {offsets = [0, 40], sizes = [2, 40], strides = [1, 1]} : vector<2x160xf32> to vector<2x40xf32>
    %323 = arith.negf %322 : vector<2x40xf32>
    %324 = math.exp %323 : vector<2x40xf32>
    %cst_74 = arith.constant 1.000000e+00 : f32
    %325 = vector.broadcast %cst_74 : f32 to vector<2x40xf32>
    %326 = arith.addf %325, %324 : vector<2x40xf32>
    %327 = arith.divf %325, %326 : vector<2x40xf32>
    %328 = vector.extract_strided_slice %315 {offsets = [0, 80], sizes = [2, 40], strides = [1, 1]} : vector<2x160xf32> to vector<2x40xf32>
    %329 = math.tanh %328 : vector<2x40xf32>
    %330 = vector.extract_strided_slice %315 {offsets = [0, 120], sizes = [2, 40], strides = [1, 1]} : vector<2x160xf32> to vector<2x40xf32>
    %331 = arith.negf %330 : vector<2x40xf32>
    %332 = math.exp %331 : vector<2x40xf32>
    %cst_75 = arith.constant 1.000000e+00 : f32
    %333 = vector.broadcast %cst_75 : f32 to vector<2x40xf32>
    %334 = arith.addf %333, %332 : vector<2x40xf32>
    %335 = arith.divf %333, %334 : vector<2x40xf32>
    %336 = arith.mulf %327, %250 : vector<2x40xf32>
    %337 = arith.mulf %321, %329 : vector<2x40xf32>
    %338 = arith.addf %336, %337 : vector<2x40xf32>
    %339 = math.tanh %338 : vector<2x40xf32>
    %340 = arith.mulf %335, %339 : vector<2x40xf32>
    %cst_76 = arith.constant dense<0.000000e+00> : vector<2x320xf32>
    %341 = tpu.matmul %340, %10, %cst_76 {dimension_numbers = #tpu.dot_dimension_numbers<[1], [0], [0], [1], [0, 0, 1, 1], [], []>} : vector<2x40xf32>, vector<40x320xf32>, vector<2x320xf32> -> vector<2x320xf32>
    %cst_77 = arith.constant dense<0.000000e+00> : vector<2x320xf32>
    %342 = tpu.matmul %282, %11, %cst_77 {dimension_numbers = #tpu.dot_dimension_numbers<[1], [0], [0], [1], [0, 0, 1, 1], [], []>} : vector<2x80xf32>, vector<80x320xf32>, vector<2x320xf32> -> vector<2x320xf32>
    %343 = arith.addf %341, %342 : vector<2x320xf32>
    %344 = vector.broadcast %12 : vector<1x320xf32> to vector<2x320xf32>
    %345 = arith.addf %343, %344 : vector<2x320xf32>
    %346 = vector.extract_strided_slice %345 {offsets = [0, 0], sizes = [2, 80], strides = [1, 1]} : vector<2x320xf32> to vector<2x80xf32>
    %347 = arith.negf %346 : vector<2x80xf32>
    %348 = math.exp %347 : vector<2x80xf32>
    %cst_78 = arith.constant 1.000000e+00 : f32
    %349 = vector.broadcast %cst_78 : f32 to vector<2x80xf32>
    %350 = arith.addf %349, %348 : vector<2x80xf32>
    %351 = arith.divf %349, %350 : vector<2x80xf32>
    %352 = vector.extract_strided_slice %345 {offsets = [0, 80], sizes = [2, 80], strides = [1, 1]} : vector<2x320xf32> to vector<2x80xf32>
    %353 = arith.negf %352 : vector<2x80xf32>
    %354 = math.exp %353 : vector<2x80xf32>
    %cst_79 = arith.constant 1.000000e+00 : f32
    %355 = vector.broadcast %cst_79 : f32 to vector<2x80xf32>
    %356 = arith.addf %355, %354 : vector<2x80xf32>
    %357 = arith.divf %355, %356 : vector<2x80xf32>
    %358 = vector.extract_strided_slice %345 {offsets = [0, 160], sizes = [2, 80], strides = [1, 1]} : vector<2x320xf32> to vector<2x80xf32>
    %359 = math.tanh %358 : vector<2x80xf32>
    %360 = vector.extract_strided_slice %345 {offsets = [0, 240], sizes = [2, 80], strides = [1, 1]} : vector<2x320xf32> to vector<2x80xf32>
    %361 = arith.negf %360 : vector<2x80xf32>
    %362 = math.exp %361 : vector<2x80xf32>
    %cst_80 = arith.constant 1.000000e+00 : f32
    %363 = vector.broadcast %cst_80 : f32 to vector<2x80xf32>
    %364 = arith.addf %363, %362 : vector<2x80xf32>
    %365 = arith.divf %363, %364 : vector<2x80xf32>
    %366 = arith.mulf %357, %280 : vector<2x80xf32>
    %367 = arith.mulf %351, %359 : vector<2x80xf32>
    %368 = arith.addf %366, %367 : vector<2x80xf32>
    %369 = math.tanh %368 : vector<2x80xf32>
    %370 = arith.mulf %365, %369 : vector<2x80xf32>
    %371 = vector.extract_strided_slice %5 {offsets = [8, 0], sizes = [2, 160], strides = [1, 1]} : vector<16x160xf32> to vector<2x160xf32>
    %cst_81 = arith.constant dense<0.000000e+00> : vector<2x160xf32>
    %372 = tpu.matmul %310, %6, %cst_81 {dimension_numbers = #tpu.dot_dimension_numbers<[1], [0], [0], [1], [0, 0, 1, 1], [], []>} : vector<2x40xf32>, vector<40x160xf32>, vector<2x160xf32> -> vector<2x160xf32>
    %373 = arith.addf %371, %372 : vector<2x160xf32>
    %374 = vector.extract_strided_slice %373 {offsets = [0, 0], sizes = [2, 40], strides = [1, 1]} : vector<2x160xf32> to vector<2x40xf32>
    %375 = arith.negf %374 : vector<2x40xf32>
    %376 = math.exp %375 : vector<2x40xf32>
    %cst_82 = arith.constant 1.000000e+00 : f32
    %377 = vector.broadcast %cst_82 : f32 to vector<2x40xf32>
    %378 = arith.addf %377, %376 : vector<2x40xf32>
    %379 = arith.divf %377, %378 : vector<2x40xf32>
    %380 = vector.extract_strided_slice %373 {offsets = [0, 40], sizes = [2, 40], strides = [1, 1]} : vector<2x160xf32> to vector<2x40xf32>
    %381 = arith.negf %380 : vector<2x40xf32>
    %382 = math.exp %381 : vector<2x40xf32>
    %cst_83 = arith.constant 1.000000e+00 : f32
    %383 = vector.broadcast %cst_83 : f32 to vector<2x40xf32>
    %384 = arith.addf %383, %382 : vector<2x40xf32>
    %385 = arith.divf %383, %384 : vector<2x40xf32>
    %386 = vector.extract_strided_slice %373 {offsets = [0, 80], sizes = [2, 40], strides = [1, 1]} : vector<2x160xf32> to vector<2x40xf32>
    %387 = math.tanh %386 : vector<2x40xf32>
    %388 = vector.extract_strided_slice %373 {offsets = [0, 120], sizes = [2, 40], strides = [1, 1]} : vector<2x160xf32> to vector<2x40xf32>
    %389 = arith.negf %388 : vector<2x40xf32>
    %390 = math.exp %389 : vector<2x40xf32>
    %cst_84 = arith.constant 1.000000e+00 : f32
    %391 = vector.broadcast %cst_84 : f32 to vector<2x40xf32>
    %392 = arith.addf %391, %390 : vector<2x40xf32>
    %393 = arith.divf %391, %392 : vector<2x40xf32>
    %394 = arith.mulf %385, %308 : vector<2x40xf32>
    %395 = arith.mulf %379, %387 : vector<2x40xf32>
    %396 = arith.addf %394, %395 : vector<2x40xf32>
    %397 = math.tanh %396 : vector<2x40xf32>
    %398 = arith.mulf %393, %397 : vector<2x40xf32>
    %cst_85 = arith.constant dense<0.000000e+00> : vector<2x160xf32>
    %399 = tpu.matmul %398, %7, %cst_85 {dimension_numbers = #tpu.dot_dimension_numbers<[1], [0], [0], [1], [0, 0, 1, 1], [], []>} : vector<2x40xf32>, vector<40x160xf32>, vector<2x160xf32> -> vector<2x160xf32>
    %cst_86 = arith.constant dense<0.000000e+00> : vector<2x160xf32>
    %400 = tpu.matmul %340, %8, %cst_86 {dimension_numbers = #tpu.dot_dimension_numbers<[1], [0], [0], [1], [0, 0, 1, 1], [], []>} : vector<2x40xf32>, vector<40x160xf32>, vector<2x160xf32> -> vector<2x160xf32>
    %401 = arith.addf %399, %400 : vector<2x160xf32>
    %402 = vector.broadcast %9 : vector<1x160xf32> to vector<2x160xf32>
    %403 = arith.addf %401, %402 : vector<2x160xf32>
    %404 = vector.extract_strided_slice %403 {offsets = [0, 0], sizes = [2, 40], strides = [1, 1]} : vector<2x160xf32> to vector<2x40xf32>
    %405 = arith.negf %404 : vector<2x40xf32>
    %406 = math.exp %405 : vector<2x40xf32>
    %cst_87 = arith.constant 1.000000e+00 : f32
    %407 = vector.broadcast %cst_87 : f32 to vector<2x40xf32>
    %408 = arith.addf %407, %406 : vector<2x40xf32>
    %409 = arith.divf %407, %408 : vector<2x40xf32>
    %410 = vector.extract_strided_slice %403 {offsets = [0, 40], sizes = [2, 40], strides = [1, 1]} : vector<2x160xf32> to vector<2x40xf32>
    %411 = arith.negf %410 : vector<2x40xf32>
    %412 = math.exp %411 : vector<2x40xf32>
    %cst_88 = arith.constant 1.000000e+00 : f32
    %413 = vector.broadcast %cst_88 : f32 to vector<2x40xf32>
    %414 = arith.addf %413, %412 : vector<2x40xf32>
    %415 = arith.divf %413, %414 : vector<2x40xf32>
    %416 = vector.extract_strided_slice %403 {offsets = [0, 80], sizes = [2, 40], strides = [1, 1]} : vector<2x160xf32> to vector<2x40xf32>
    %417 = math.tanh %416 : vector<2x40xf32>
    %418 = vector.extract_strided_slice %403 {offsets = [0, 120], sizes = [2, 40], strides = [1, 1]} : vector<2x160xf32> to vector<2x40xf32>
    %419 = arith.negf %418 : vector<2x40xf32>
    %420 = math.exp %419 : vector<2x40xf32>
    %cst_89 = arith.constant 1.000000e+00 : f32
    %421 = vector.broadcast %cst_89 : f32 to vector<2x40xf32>
    %422 = arith.addf %421, %420 : vector<2x40xf32>
    %423 = arith.divf %421, %422 : vector<2x40xf32>
    %424 = arith.mulf %415, %338 : vector<2x40xf32>
    %425 = arith.mulf %409, %417 : vector<2x40xf32>
    %426 = arith.addf %424, %425 : vector<2x40xf32>
    %427 = math.tanh %426 : vector<2x40xf32>
    %428 = arith.mulf %423, %427 : vector<2x40xf32>
    %cst_90 = arith.constant dense<0.000000e+00> : vector<2x320xf32>
    %429 = tpu.matmul %428, %10, %cst_90 {dimension_numbers = #tpu.dot_dimension_numbers<[1], [0], [0], [1], [0, 0, 1, 1], [], []>} : vector<2x40xf32>, vector<40x320xf32>, vector<2x320xf32> -> vector<2x320xf32>
    %cst_91 = arith.constant dense<0.000000e+00> : vector<2x320xf32>
    %430 = tpu.matmul %370, %11, %cst_91 {dimension_numbers = #tpu.dot_dimension_numbers<[1], [0], [0], [1], [0, 0, 1, 1], [], []>} : vector<2x80xf32>, vector<80x320xf32>, vector<2x320xf32> -> vector<2x320xf32>
    %431 = arith.addf %429, %430 : vector<2x320xf32>
    %432 = vector.broadcast %12 : vector<1x320xf32> to vector<2x320xf32>
    %433 = arith.addf %431, %432 : vector<2x320xf32>
    %434 = vector.extract_strided_slice %433 {offsets = [0, 0], sizes = [2, 80], strides = [1, 1]} : vector<2x320xf32> to vector<2x80xf32>
    %435 = arith.negf %434 : vector<2x80xf32>
    %436 = math.exp %435 : vector<2x80xf32>
    %cst_92 = arith.constant 1.000000e+00 : f32
    %437 = vector.broadcast %cst_92 : f32 to vector<2x80xf32>
    %438 = arith.addf %437, %436 : vector<2x80xf32>
    %439 = arith.divf %437, %438 : vector<2x80xf32>
    %440 = vector.extract_strided_slice %433 {offsets = [0, 80], sizes = [2, 80], strides = [1, 1]} : vector<2x320xf32> to vector<2x80xf32>
    %441 = arith.negf %440 : vector<2x80xf32>
    %442 = math.exp %441 : vector<2x80xf32>
    %cst_93 = arith.constant 1.000000e+00 : f32
    %443 = vector.broadcast %cst_93 : f32 to vector<2x80xf32>
    %444 = arith.addf %443, %442 : vector<2x80xf32>
    %445 = arith.divf %443, %444 : vector<2x80xf32>
    %446 = vector.extract_strided_slice %433 {offsets = [0, 160], sizes = [2, 80], strides = [1, 1]} : vector<2x320xf32> to vector<2x80xf32>
    %447 = math.tanh %446 : vector<2x80xf32>
    %448 = vector.extract_strided_slice %433 {offsets = [0, 240], sizes = [2, 80], strides = [1, 1]} : vector<2x320xf32> to vector<2x80xf32>
    %449 = arith.negf %448 : vector<2x80xf32>
    %450 = math.exp %449 : vector<2x80xf32>
    %cst_94 = arith.constant 1.000000e+00 : f32
    %451 = vector.broadcast %cst_94 : f32 to vector<2x80xf32>
    %452 = arith.addf %451, %450 : vector<2x80xf32>
    %453 = arith.divf %451, %452 : vector<2x80xf32>
    %454 = arith.mulf %445, %368 : vector<2x80xf32>
    %455 = arith.mulf %439, %447 : vector<2x80xf32>
    %456 = arith.addf %454, %455 : vector<2x80xf32>
    %457 = math.tanh %456 : vector<2x80xf32>
    %458 = arith.mulf %453, %457 : vector<2x80xf32>
    %459 = vector.extract_strided_slice %5 {offsets = [10, 0], sizes = [2, 160], strides = [1, 1]} : vector<16x160xf32> to vector<2x160xf32>
    %cst_95 = arith.constant dense<0.000000e+00> : vector<2x160xf32>
    %460 = tpu.matmul %398, %6, %cst_95 {dimension_numbers = #tpu.dot_dimension_numbers<[1], [0], [0], [1], [0, 0, 1, 1], [], []>} : vector<2x40xf32>, vector<40x160xf32>, vector<2x160xf32> -> vector<2x160xf32>
    %461 = arith.addf %459, %460 : vector<2x160xf32>
    %462 = vector.extract_strided_slice %461 {offsets = [0, 0], sizes = [2, 40], strides = [1, 1]} : vector<2x160xf32> to vector<2x40xf32>
    %463 = arith.negf %462 : vector<2x40xf32>
    %464 = math.exp %463 : vector<2x40xf32>
    %cst_96 = arith.constant 1.000000e+00 : f32
    %465 = vector.broadcast %cst_96 : f32 to vector<2x40xf32>
    %466 = arith.addf %465, %464 : vector<2x40xf32>
    %467 = arith.divf %465, %466 : vector<2x40xf32>
    %468 = vector.extract_strided_slice %461 {offsets = [0, 40], sizes = [2, 40], strides = [1, 1]} : vector<2x160xf32> to vector<2x40xf32>
    %469 = arith.negf %468 : vector<2x40xf32>
    %470 = math.exp %469 : vector<2x40xf32>
    %cst_97 = arith.constant 1.000000e+00 : f32
    %471 = vector.broadcast %cst_97 : f32 to vector<2x40xf32>
    %472 = arith.addf %471, %470 : vector<2x40xf32>
    %473 = arith.divf %471, %472 : vector<2x40xf32>
    %474 = vector.extract_strided_slice %461 {offsets = [0, 80], sizes = [2, 40], strides = [1, 1]} : vector<2x160xf32> to vector<2x40xf32>
    %475 = math.tanh %474 : vector<2x40xf32>
    %476 = vector.extract_strided_slice %461 {offsets = [0, 120], sizes = [2, 40], strides = [1, 1]} : vector<2x160xf32> to vector<2x40xf32>
    %477 = arith.negf %476 : vector<2x40xf32>
    %478 = math.exp %477 : vector<2x40xf32>
    %cst_98 = arith.constant 1.000000e+00 : f32
    %479 = vector.broadcast %cst_98 : f32 to vector<2x40xf32>
    %480 = arith.addf %479, %478 : vector<2x40xf32>
    %481 = arith.divf %479, %480 : vector<2x40xf32>
    %482 = arith.mulf %473, %396 : vector<2x40xf32>
    %483 = arith.mulf %467, %475 : vector<2x40xf32>
    %484 = arith.addf %482, %483 : vector<2x40xf32>
    %485 = math.tanh %484 : vector<2x40xf32>
    %486 = arith.mulf %481, %485 : vector<2x40xf32>
    %cst_99 = arith.constant dense<0.000000e+00> : vector<2x160xf32>
    %487 = tpu.matmul %486, %7, %cst_99 {dimension_numbers = #tpu.dot_dimension_numbers<[1], [0], [0], [1], [0, 0, 1, 1], [], []>} : vector<2x40xf32>, vector<40x160xf32>, vector<2x160xf32> -> vector<2x160xf32>
    %cst_100 = arith.constant dense<0.000000e+00> : vector<2x160xf32>
    %488 = tpu.matmul %428, %8, %cst_100 {dimension_numbers = #tpu.dot_dimension_numbers<[1], [0], [0], [1], [0, 0, 1, 1], [], []>} : vector<2x40xf32>, vector<40x160xf32>, vector<2x160xf32> -> vector<2x160xf32>
    %489 = arith.addf %487, %488 : vector<2x160xf32>
    %490 = vector.broadcast %9 : vector<1x160xf32> to vector<2x160xf32>
    %491 = arith.addf %489, %490 : vector<2x160xf32>
    %492 = vector.extract_strided_slice %491 {offsets = [0, 0], sizes = [2, 40], strides = [1, 1]} : vector<2x160xf32> to vector<2x40xf32>
    %493 = arith.negf %492 : vector<2x40xf32>
    %494 = math.exp %493 : vector<2x40xf32>
    %cst_101 = arith.constant 1.000000e+00 : f32
    %495 = vector.broadcast %cst_101 : f32 to vector<2x40xf32>
    %496 = arith.addf %495, %494 : vector<2x40xf32>
    %497 = arith.divf %495, %496 : vector<2x40xf32>
    %498 = vector.extract_strided_slice %491 {offsets = [0, 40], sizes = [2, 40], strides = [1, 1]} : vector<2x160xf32> to vector<2x40xf32>
    %499 = arith.negf %498 : vector<2x40xf32>
    %500 = math.exp %499 : vector<2x40xf32>
    %cst_102 = arith.constant 1.000000e+00 : f32
    %501 = vector.broadcast %cst_102 : f32 to vector<2x40xf32>
    %502 = arith.addf %501, %500 : vector<2x40xf32>
    %503 = arith.divf %501, %502 : vector<2x40xf32>
    %504 = vector.extract_strided_slice %491 {offsets = [0, 80], sizes = [2, 40], strides = [1, 1]} : vector<2x160xf32> to vector<2x40xf32>
    %505 = math.tanh %504 : vector<2x40xf32>
    %506 = vector.extract_strided_slice %491 {offsets = [0, 120], sizes = [2, 40], strides = [1, 1]} : vector<2x160xf32> to vector<2x40xf32>
    %507 = arith.negf %506 : vector<2x40xf32>
    %508 = math.exp %507 : vector<2x40xf32>
    %cst_103 = arith.constant 1.000000e+00 : f32
    %509 = vector.broadcast %cst_103 : f32 to vector<2x40xf32>
    %510 = arith.addf %509, %508 : vector<2x40xf32>
    %511 = arith.divf %509, %510 : vector<2x40xf32>
    %512 = arith.mulf %503, %426 : vector<2x40xf32>
    %513 = arith.mulf %497, %505 : vector<2x40xf32>
    %514 = arith.addf %512, %513 : vector<2x40xf32>
    %515 = math.tanh %514 : vector<2x40xf32>
    %516 = arith.mulf %511, %515 : vector<2x40xf32>
    %cst_104 = arith.constant dense<0.000000e+00> : vector<2x320xf32>
    %517 = tpu.matmul %516, %10, %cst_104 {dimension_numbers = #tpu.dot_dimension_numbers<[1], [0], [0], [1], [0, 0, 1, 1], [], []>} : vector<2x40xf32>, vector<40x320xf32>, vector<2x320xf32> -> vector<2x320xf32>
    %cst_105 = arith.constant dense<0.000000e+00> : vector<2x320xf32>
    %518 = tpu.matmul %458, %11, %cst_105 {dimension_numbers = #tpu.dot_dimension_numbers<[1], [0], [0], [1], [0, 0, 1, 1], [], []>} : vector<2x80xf32>, vector<80x320xf32>, vector<2x320xf32> -> vector<2x320xf32>
    %519 = arith.addf %517, %518 : vector<2x320xf32>
    %520 = vector.broadcast %12 : vector<1x320xf32> to vector<2x320xf32>
    %521 = arith.addf %519, %520 : vector<2x320xf32>
    %522 = vector.extract_strided_slice %521 {offsets = [0, 0], sizes = [2, 80], strides = [1, 1]} : vector<2x320xf32> to vector<2x80xf32>
    %523 = arith.negf %522 : vector<2x80xf32>
    %524 = math.exp %523 : vector<2x80xf32>
    %cst_106 = arith.constant 1.000000e+00 : f32
    %525 = vector.broadcast %cst_106 : f32 to vector<2x80xf32>
    %526 = arith.addf %525, %524 : vector<2x80xf32>
    %527 = arith.divf %525, %526 : vector<2x80xf32>
    %528 = vector.extract_strided_slice %521 {offsets = [0, 80], sizes = [2, 80], strides = [1, 1]} : vector<2x320xf32> to vector<2x80xf32>
    %529 = arith.negf %528 : vector<2x80xf32>
    %530 = math.exp %529 : vector<2x80xf32>
    %cst_107 = arith.constant 1.000000e+00 : f32
    %531 = vector.broadcast %cst_107 : f32 to vector<2x80xf32>
    %532 = arith.addf %531, %530 : vector<2x80xf32>
    %533 = arith.divf %531, %532 : vector<2x80xf32>
    %534 = vector.extract_strided_slice %521 {offsets = [0, 160], sizes = [2, 80], strides = [1, 1]} : vector<2x320xf32> to vector<2x80xf32>
    %535 = math.tanh %534 : vector<2x80xf32>
    %536 = vector.extract_strided_slice %521 {offsets = [0, 240], sizes = [2, 80], strides = [1, 1]} : vector<2x320xf32> to vector<2x80xf32>
    %537 = arith.negf %536 : vector<2x80xf32>
    %538 = math.exp %537 : vector<2x80xf32>
    %cst_108 = arith.constant 1.000000e+00 : f32
    %539 = vector.broadcast %cst_108 : f32 to vector<2x80xf32>
    %540 = arith.addf %539, %538 : vector<2x80xf32>
    %541 = arith.divf %539, %540 : vector<2x80xf32>
    %542 = arith.mulf %533, %456 : vector<2x80xf32>
    %543 = arith.mulf %527, %535 : vector<2x80xf32>
    %544 = arith.addf %542, %543 : vector<2x80xf32>
    %545 = math.tanh %544 : vector<2x80xf32>
    %546 = arith.mulf %541, %545 : vector<2x80xf32>
    %547 = vector.extract_strided_slice %5 {offsets = [12, 0], sizes = [2, 160], strides = [1, 1]} : vector<16x160xf32> to vector<2x160xf32>
    %cst_109 = arith.constant dense<0.000000e+00> : vector<2x160xf32>
    %548 = tpu.matmul %486, %6, %cst_109 {dimension_numbers = #tpu.dot_dimension_numbers<[1], [0], [0], [1], [0, 0, 1, 1], [], []>} : vector<2x40xf32>, vector<40x160xf32>, vector<2x160xf32> -> vector<2x160xf32>
    %549 = arith.addf %547, %548 : vector<2x160xf32>
    %550 = vector.extract_strided_slice %549 {offsets = [0, 0], sizes = [2, 40], strides = [1, 1]} : vector<2x160xf32> to vector<2x40xf32>
    %551 = arith.negf %550 : vector<2x40xf32>
    %552 = math.exp %551 : vector<2x40xf32>
    %cst_110 = arith.constant 1.000000e+00 : f32
    %553 = vector.broadcast %cst_110 : f32 to vector<2x40xf32>
    %554 = arith.addf %553, %552 : vector<2x40xf32>
    %555 = arith.divf %553, %554 : vector<2x40xf32>
    %556 = vector.extract_strided_slice %549 {offsets = [0, 40], sizes = [2, 40], strides = [1, 1]} : vector<2x160xf32> to vector<2x40xf32>
    %557 = arith.negf %556 : vector<2x40xf32>
    %558 = math.exp %557 : vector<2x40xf32>
    %cst_111 = arith.constant 1.000000e+00 : f32
    %559 = vector.broadcast %cst_111 : f32 to vector<2x40xf32>
    %560 = arith.addf %559, %558 : vector<2x40xf32>
    %561 = arith.divf %559, %560 : vector<2x40xf32>
    %562 = vector.extract_strided_slice %549 {offsets = [0, 80], sizes = [2, 40], strides = [1, 1]} : vector<2x160xf32> to vector<2x40xf32>
    %563 = math.tanh %562 : vector<2x40xf32>
    %564 = vector.extract_strided_slice %549 {offsets = [0, 120], sizes = [2, 40], strides = [1, 1]} : vector<2x160xf32> to vector<2x40xf32>
    %565 = arith.negf %564 : vector<2x40xf32>
    %566 = math.exp %565 : vector<2x40xf32>
    %cst_112 = arith.constant 1.000000e+00 : f32
    %567 = vector.broadcast %cst_112 : f32 to vector<2x40xf32>
    %568 = arith.addf %567, %566 : vector<2x40xf32>
    %569 = arith.divf %567, %568 : vector<2x40xf32>
    %570 = arith.mulf %561, %484 : vector<2x40xf32>
    %571 = arith.mulf %555, %563 : vector<2x40xf32>
    %572 = arith.addf %570, %571 : vector<2x40xf32>
    %573 = math.tanh %572 : vector<2x40xf32>
    %574 = arith.mulf %569, %573 : vector<2x40xf32>
    %cst_113 = arith.constant dense<0.000000e+00> : vector<2x160xf32>
    %575 = tpu.matmul %574, %7, %cst_113 {dimension_numbers = #tpu.dot_dimension_numbers<[1], [0], [0], [1], [0, 0, 1, 1], [], []>} : vector<2x40xf32>, vector<40x160xf32>, vector<2x160xf32> -> vector<2x160xf32>
    %cst_114 = arith.constant dense<0.000000e+00> : vector<2x160xf32>
    %576 = tpu.matmul %516, %8, %cst_114 {dimension_numbers = #tpu.dot_dimension_numbers<[1], [0], [0], [1], [0, 0, 1, 1], [], []>} : vector<2x40xf32>, vector<40x160xf32>, vector<2x160xf32> -> vector<2x160xf32>
    %577 = arith.addf %575, %576 : vector<2x160xf32>
    %578 = vector.broadcast %9 : vector<1x160xf32> to vector<2x160xf32>
    %579 = arith.addf %577, %578 : vector<2x160xf32>
    %580 = vector.extract_strided_slice %579 {offsets = [0, 0], sizes = [2, 40], strides = [1, 1]} : vector<2x160xf32> to vector<2x40xf32>
    %581 = arith.negf %580 : vector<2x40xf32>
    %582 = math.exp %581 : vector<2x40xf32>
    %cst_115 = arith.constant 1.000000e+00 : f32
    %583 = vector.broadcast %cst_115 : f32 to vector<2x40xf32>
    %584 = arith.addf %583, %582 : vector<2x40xf32>
    %585 = arith.divf %583, %584 : vector<2x40xf32>
    %586 = vector.extract_strided_slice %579 {offsets = [0, 40], sizes = [2, 40], strides = [1, 1]} : vector<2x160xf32> to vector<2x40xf32>
    %587 = arith.negf %586 : vector<2x40xf32>
    %588 = math.exp %587 : vector<2x40xf32>
    %cst_116 = arith.constant 1.000000e+00 : f32
    %589 = vector.broadcast %cst_116 : f32 to vector<2x40xf32>
    %590 = arith.addf %589, %588 : vector<2x40xf32>
    %591 = arith.divf %589, %590 : vector<2x40xf32>
    %592 = vector.extract_strided_slice %579 {offsets = [0, 80], sizes = [2, 40], strides = [1, 1]} : vector<2x160xf32> to vector<2x40xf32>
    %593 = math.tanh %592 : vector<2x40xf32>
    %594 = vector.extract_strided_slice %579 {offsets = [0, 120], sizes = [2, 40], strides = [1, 1]} : vector<2x160xf32> to vector<2x40xf32>
    %595 = arith.negf %594 : vector<2x40xf32>
    %596 = math.exp %595 : vector<2x40xf32>
    %cst_117 = arith.constant 1.000000e+00 : f32
    %597 = vector.broadcast %cst_117 : f32 to vector<2x40xf32>
    %598 = arith.addf %597, %596 : vector<2x40xf32>
    %599 = arith.divf %597, %598 : vector<2x40xf32>
    %600 = arith.mulf %591, %514 : vector<2x40xf32>
    %601 = arith.mulf %585, %593 : vector<2x40xf32>
    %602 = arith.addf %600, %601 : vector<2x40xf32>
    %603 = math.tanh %602 : vector<2x40xf32>
    %604 = arith.mulf %599, %603 : vector<2x40xf32>
    %cst_118 = arith.constant dense<0.000000e+00> : vector<2x320xf32>
    %605 = tpu.matmul %604, %10, %cst_118 {dimension_numbers = #tpu.dot_dimension_numbers<[1], [0], [0], [1], [0, 0, 1, 1], [], []>} : vector<2x40xf32>, vector<40x320xf32>, vector<2x320xf32> -> vector<2x320xf32>
    %cst_119 = arith.constant dense<0.000000e+00> : vector<2x320xf32>
    %606 = tpu.matmul %546, %11, %cst_119 {dimension_numbers = #tpu.dot_dimension_numbers<[1], [0], [0], [1], [0, 0, 1, 1], [], []>} : vector<2x80xf32>, vector<80x320xf32>, vector<2x320xf32> -> vector<2x320xf32>
    %607 = arith.addf %605, %606 : vector<2x320xf32>
    %608 = vector.broadcast %12 : vector<1x320xf32> to vector<2x320xf32>
    %609 = arith.addf %607, %608 : vector<2x320xf32>
    %610 = vector.extract_strided_slice %609 {offsets = [0, 0], sizes = [2, 80], strides = [1, 1]} : vector<2x320xf32> to vector<2x80xf32>
    %611 = arith.negf %610 : vector<2x80xf32>
    %612 = math.exp %611 : vector<2x80xf32>
    %cst_120 = arith.constant 1.000000e+00 : f32
    %613 = vector.broadcast %cst_120 : f32 to vector<2x80xf32>
    %614 = arith.addf %613, %612 : vector<2x80xf32>
    %615 = arith.divf %613, %614 : vector<2x80xf32>
    %616 = vector.extract_strided_slice %609 {offsets = [0, 80], sizes = [2, 80], strides = [1, 1]} : vector<2x320xf32> to vector<2x80xf32>
    %617 = arith.negf %616 : vector<2x80xf32>
    %618 = math.exp %617 : vector<2x80xf32>
    %cst_121 = arith.constant 1.000000e+00 : f32
    %619 = vector.broadcast %cst_121 : f32 to vector<2x80xf32>
    %620 = arith.addf %619, %618 : vector<2x80xf32>
    %621 = arith.divf %619, %620 : vector<2x80xf32>
    %622 = vector.extract_strided_slice %609 {offsets = [0, 160], sizes = [2, 80], strides = [1, 1]} : vector<2x320xf32> to vector<2x80xf32>
    %623 = math.tanh %622 : vector<2x80xf32>
    %624 = vector.extract_strided_slice %609 {offsets = [0, 240], sizes = [2, 80], strides = [1, 1]} : vector<2x320xf32> to vector<2x80xf32>
    %625 = arith.negf %624 : vector<2x80xf32>
    %626 = math.exp %625 : vector<2x80xf32>
    %cst_122 = arith.constant 1.000000e+00 : f32
    %627 = vector.broadcast %cst_122 : f32 to vector<2x80xf32>
    %628 = arith.addf %627, %626 : vector<2x80xf32>
    %629 = arith.divf %627, %628 : vector<2x80xf32>
    %630 = arith.mulf %621, %544 : vector<2x80xf32>
    %631 = arith.mulf %615, %623 : vector<2x80xf32>
    %632 = arith.addf %630, %631 : vector<2x80xf32>
    %633 = math.tanh %632 : vector<2x80xf32>
    %634 = arith.mulf %629, %633 : vector<2x80xf32>
    %635 = vector.extract_strided_slice %5 {offsets = [14, 0], sizes = [2, 160], strides = [1, 1]} : vector<16x160xf32> to vector<2x160xf32>
    %cst_123 = arith.constant dense<0.000000e+00> : vector<2x160xf32>
    %636 = tpu.matmul %574, %6, %cst_123 {dimension_numbers = #tpu.dot_dimension_numbers<[1], [0], [0], [1], [0, 0, 1, 1], [], []>} : vector<2x40xf32>, vector<40x160xf32>, vector<2x160xf32> -> vector<2x160xf32>
    %637 = arith.addf %635, %636 : vector<2x160xf32>
    %638 = vector.extract_strided_slice %637 {offsets = [0, 0], sizes = [2, 40], strides = [1, 1]} : vector<2x160xf32> to vector<2x40xf32>
    %639 = arith.negf %638 : vector<2x40xf32>
    %640 = math.exp %639 : vector<2x40xf32>
    %cst_124 = arith.constant 1.000000e+00 : f32
    %641 = vector.broadcast %cst_124 : f32 to vector<2x40xf32>
    %642 = arith.addf %641, %640 : vector<2x40xf32>
    %643 = arith.divf %641, %642 : vector<2x40xf32>
    %644 = vector.extract_strided_slice %637 {offsets = [0, 40], sizes = [2, 40], strides = [1, 1]} : vector<2x160xf32> to vector<2x40xf32>
    %645 = arith.negf %644 : vector<2x40xf32>
    %646 = math.exp %645 : vector<2x40xf32>
    %cst_125 = arith.constant 1.000000e+00 : f32
    %647 = vector.broadcast %cst_125 : f32 to vector<2x40xf32>
    %648 = arith.addf %647, %646 : vector<2x40xf32>
    %649 = arith.divf %647, %648 : vector<2x40xf32>
    %650 = vector.extract_strided_slice %637 {offsets = [0, 80], sizes = [2, 40], strides = [1, 1]} : vector<2x160xf32> to vector<2x40xf32>
    %651 = math.tanh %650 : vector<2x40xf32>
    %652 = vector.extract_strided_slice %637 {offsets = [0, 120], sizes = [2, 40], strides = [1, 1]} : vector<2x160xf32> to vector<2x40xf32>
    %653 = arith.negf %652 : vector<2x40xf32>
    %654 = math.exp %653 : vector<2x40xf32>
    %cst_126 = arith.constant 1.000000e+00 : f32
    %655 = vector.broadcast %cst_126 : f32 to vector<2x40xf32>
    %656 = arith.addf %655, %654 : vector<2x40xf32>
    %657 = arith.divf %655, %656 : vector<2x40xf32>
    %658 = arith.mulf %649, %572 : vector<2x40xf32>
    %659 = arith.mulf %643, %651 : vector<2x40xf32>
    %660 = arith.addf %658, %659 : vector<2x40xf32>
    %661 = math.tanh %660 : vector<2x40xf32>
    %662 = arith.mulf %657, %661 : vector<2x40xf32>
    %cst_127 = arith.constant dense<0.000000e+00> : vector<2x160xf32>
    %663 = tpu.matmul %662, %7, %cst_127 {dimension_numbers = #tpu.dot_dimension_numbers<[1], [0], [0], [1], [0, 0, 1, 1], [], []>} : vector<2x40xf32>, vector<40x160xf32>, vector<2x160xf32> -> vector<2x160xf32>
    %cst_128 = arith.constant dense<0.000000e+00> : vector<2x160xf32>
    %664 = tpu.matmul %604, %8, %cst_128 {dimension_numbers = #tpu.dot_dimension_numbers<[1], [0], [0], [1], [0, 0, 1, 1], [], []>} : vector<2x40xf32>, vector<40x160xf32>, vector<2x160xf32> -> vector<2x160xf32>
    %665 = arith.addf %663, %664 : vector<2x160xf32>
    %666 = vector.broadcast %9 : vector<1x160xf32> to vector<2x160xf32>
    %667 = arith.addf %665, %666 : vector<2x160xf32>
    %668 = vector.extract_strided_slice %667 {offsets = [0, 0], sizes = [2, 40], strides = [1, 1]} : vector<2x160xf32> to vector<2x40xf32>
    %669 = arith.negf %668 : vector<2x40xf32>
    %670 = math.exp %669 : vector<2x40xf32>
    %cst_129 = arith.constant 1.000000e+00 : f32
    %671 = vector.broadcast %cst_129 : f32 to vector<2x40xf32>
    %672 = arith.addf %671, %670 : vector<2x40xf32>
    %673 = arith.divf %671, %672 : vector<2x40xf32>
    %674 = vector.extract_strided_slice %667 {offsets = [0, 40], sizes = [2, 40], strides = [1, 1]} : vector<2x160xf32> to vector<2x40xf32>
    %675 = arith.negf %674 : vector<2x40xf32>
    %676 = math.exp %675 : vector<2x40xf32>
    %cst_130 = arith.constant 1.000000e+00 : f32
    %677 = vector.broadcast %cst_130 : f32 to vector<2x40xf32>
    %678 = arith.addf %677, %676 : vector<2x40xf32>
    %679 = arith.divf %677, %678 : vector<2x40xf32>
    %680 = vector.extract_strided_slice %667 {offsets = [0, 80], sizes = [2, 40], strides = [1, 1]} : vector<2x160xf32> to vector<2x40xf32>
    %681 = math.tanh %680 : vector<2x40xf32>
    %682 = vector.extract_strided_slice %667 {offsets = [0, 120], sizes = [2, 40], strides = [1, 1]} : vector<2x160xf32> to vector<2x40xf32>
    %683 = arith.negf %682 : vector<2x40xf32>
    %684 = math.exp %683 : vector<2x40xf32>
    %cst_131 = arith.constant 1.000000e+00 : f32
    %685 = vector.broadcast %cst_131 : f32 to vector<2x40xf32>
    %686 = arith.addf %685, %684 : vector<2x40xf32>
    %687 = arith.divf %685, %686 : vector<2x40xf32>
    %688 = arith.mulf %679, %602 : vector<2x40xf32>
    %689 = arith.mulf %673, %681 : vector<2x40xf32>
    %690 = arith.addf %688, %689 : vector<2x40xf32>
    %691 = math.tanh %690 : vector<2x40xf32>
    %692 = arith.mulf %687, %691 : vector<2x40xf32>
    %cst_132 = arith.constant dense<0.000000e+00> : vector<2x320xf32>
    %693 = tpu.matmul %692, %10, %cst_132 {dimension_numbers = #tpu.dot_dimension_numbers<[1], [0], [0], [1], [0, 0, 1, 1], [], []>} : vector<2x40xf32>, vector<40x320xf32>, vector<2x320xf32> -> vector<2x320xf32>
    %cst_133 = arith.constant dense<0.000000e+00> : vector<2x320xf32>
    %694 = tpu.matmul %634, %11, %cst_133 {dimension_numbers = #tpu.dot_dimension_numbers<[1], [0], [0], [1], [0, 0, 1, 1], [], []>} : vector<2x80xf32>, vector<80x320xf32>, vector<2x320xf32> -> vector<2x320xf32>
    %695 = arith.addf %693, %694 : vector<2x320xf32>
    %696 = vector.broadcast %12 : vector<1x320xf32> to vector<2x320xf32>
    %697 = arith.addf %695, %696 : vector<2x320xf32>
    %698 = vector.extract_strided_slice %697 {offsets = [0, 0], sizes = [2, 80], strides = [1, 1]} : vector<2x320xf32> to vector<2x80xf32>
    %699 = arith.negf %698 : vector<2x80xf32>
    %700 = math.exp %699 : vector<2x80xf32>
    %cst_134 = arith.constant 1.000000e+00 : f32
    %701 = vector.broadcast %cst_134 : f32 to vector<2x80xf32>
    %702 = arith.addf %701, %700 : vector<2x80xf32>
    %703 = arith.divf %701, %702 : vector<2x80xf32>
    %704 = vector.extract_strided_slice %697 {offsets = [0, 80], sizes = [2, 80], strides = [1, 1]} : vector<2x320xf32> to vector<2x80xf32>
    %705 = arith.negf %704 : vector<2x80xf32>
    %706 = math.exp %705 : vector<2x80xf32>
    %cst_135 = arith.constant 1.000000e+00 : f32
    %707 = vector.broadcast %cst_135 : f32 to vector<2x80xf32>
    %708 = arith.addf %707, %706 : vector<2x80xf32>
    %709 = arith.divf %707, %708 : vector<2x80xf32>
    %710 = vector.extract_strided_slice %697 {offsets = [0, 160], sizes = [2, 80], strides = [1, 1]} : vector<2x320xf32> to vector<2x80xf32>
    %711 = math.tanh %710 : vector<2x80xf32>
    %712 = vector.extract_strided_slice %697 {offsets = [0, 240], sizes = [2, 80], strides = [1, 1]} : vector<2x320xf32> to vector<2x80xf32>
    %713 = arith.negf %712 : vector<2x80xf32>
    %714 = math.exp %713 : vector<2x80xf32>
    %cst_136 = arith.constant 1.000000e+00 : f32
    %715 = vector.broadcast %cst_136 : f32 to vector<2x80xf32>
    %716 = arith.addf %715, %714 : vector<2x80xf32>
    %717 = arith.divf %715, %716 : vector<2x80xf32>
    %718 = arith.mulf %709, %632 : vector<2x80xf32>
    %719 = arith.mulf %703, %711 : vector<2x80xf32>
    %720 = arith.addf %718, %719 : vector<2x80xf32>
    %721 = math.tanh %720 : vector<2x80xf32>
    %722 = arith.mulf %717, %721 : vector<2x80xf32>
    %c0_137 = arith.constant 0 : index
    %c0_138 = arith.constant 0 : index
    %723 = vector.load %arg10[%c0_137, %c0_138] : memref<2x80xf32, #tpu.memory_space<vmem>>, vector<2x80xf32>
    tpu.vector_store %arg10[%c0_137, %c0_138], %722 {strides = array<i32>} : memref<2x80xf32, #tpu.memory_space<vmem>>, vector<2x80xf32>,
    return
  }
}

</mosaic_0001>

<llo_original>
// kernel: tpu_custom_call.1
$region0: #{tpu_custom_call.1}
  #allocation0 [shape = 'u32[]', space=smem, size = 0x4, offset = 0x4, fixed_abs, tag = 'smem constant byte address 0x4 - core index']
  #allocation1 [shape = 'u32[72,128]{1,0:T(1,128)}', space=vmem, size = 0x9000, scoped, tag = 'internal scratch']
  %s0 = inlined_call_operand.hbm [shape: f32[16,16], index: 0, kind: input, shape index: {}]
  %s1 = inlined_call_operand.hbm [shape: f32[16,160], index: 1, kind: input, shape index: {}]
  %s2 = inlined_call_operand.hbm [shape: f32[40,160], index: 2, kind: input, shape index: {}]
  %s3 = inlined_call_operand.vmem [shape: f32[1,160], index: 3, kind: input, shape index: {}]
  %s4 = inlined_call_operand.hbm [shape: f32[40,160], index: 4, kind: input, shape index: {}]
  %s5 = inlined_call_operand.hbm [shape: f32[40,160], index: 5, kind: input, shape index: {}]
  %s6 = inlined_call_operand.hbm [shape: f32[1,160], index: 6, kind: input, shape index: {}]
  %s7 = inlined_call_operand.hbm [shape: f32[40,320], index: 7, kind: input, shape index: {}]
  %s8 = inlined_call_operand.hbm [shape: f32[80,320], index: 8, kind: input, shape index: {}]
  %s9 = inlined_call_operand.vmem [shape: f32[1,320], index: 9, kind: input, shape index: {}]
  %s10 = inlined_call_operand.hbm [shape: f32[2,80], index: 10, kind: output, shape index: {}]
  %s11 = sld [smem:[#allocation0]]
  $region82: #{tpu_custom_call.1} parent=0
    _
  %s13 = ssub.s32 1, %s11
  %s14 = scalar_select 0, %s13, %s11
  $region1: #{tpu_custom_call.1} parent=0
    #allocation2 [shape = 'u8[8192]{0}', space=vmem, size = 0x2000, scoped, tag = 'input window, operand 0, single buffered']
    #allocation3 [shape = 's32[1]{0}', space=sflag, size = 0x4, scoped, tag = 'scoped memory for tpu_custom_call.1']
    #allocation4 [shape = 's32[1]{0}', space=sflag, size = 0x4, scoped, tag = 'scoped memory for tpu_custom_call.1']
    #allocation5 [shape = 'u8[16384]{0}', space=vmem, size = 0x4000, scoped, tag = 'input window, operand 1, single buffered']
    #allocation6 [shape = 's32[1]{0}', space=sflag, size = 0x4, scoped, tag = 'scoped memory for tpu_custom_call.1']
    #allocation7 [shape = 'u8[40960]{0}', space=vmem, size = 0xa000, scoped, tag = 'input window, operand 2, single buffered']
    #allocation8 [shape = 'u8[40960]{0}', space=vmem, size = 0xa000, scoped, tag = 'input window, operand 4, single buffered']
    #allocation9 [shape = 's32[1]{0}', space=sflag, size = 0x4, scoped, tag = 'scoped memory for tpu_custom_call.1']
    #allocation10 [shape = 'u8[40960]{0}', space=vmem, size = 0xa000, scoped, tag = 'input window, operand 5, single buffered']
    #allocation11 [shape = 'u8[1024]{0}', space=vmem, size = 0x400, scoped, tag = 'input window, operand 6, single buffered']
    #allocation12 [shape = 's32[1]{0}', space=sflag, size = 0x4, scoped, tag = 'scoped memory for tpu_custom_call.1']
    #allocation13 [shape = 'u8[61440]{0}', space=vmem, size = 0xf000, scoped, tag = 'input window, operand 7, single buffered']
    #allocation14 [shape = 'u8[122880]{0}', space=vmem, size = 0x1e000, scoped, tag = 'input window, operand 8, single buffered']
    #allocation15 [shape = 's32[1]{0}', space=sflag, size = 0x4, scoped, tag = 'scoped memory for tpu_custom_call.1']
    #allocation16 [shape = 'u8[1024]{0}', space=vmem, size = 0x400, scoped, tag = 'output window, operand 0, single buffered']
    %15 = vsyncpa [#allocation3], 0
    %16 = vsyncpa [#allocation6], 0
    %17 = vsyncpa [#allocation9], 0
    %18 = vsyncpa [#allocation12], 0
    %19 = vsyncpa [#allocation15], 0
    %20 = vsyncpa [#allocation4], 0
    // Predicated region
    $region2: #{tpu_custom_call.1} parent=1 // pred_check
      _
    $region3: #{tpu_custom_call.1} parent=1 // pred_check_branch
      %22 = sbr.rel (0) target = $region5
    $region4: #{tpu_custom_call.1} parent=1 // pred_region
      %24 = vsyncadd [#allocation3], 0
      %s25 = sshll.u32 %s0, 4
      %s26 = int_to_ptr.hbm [resolvable:$true] %s25
      %s27 = sshll.u32 [#allocation2], 4
      %s28 = int_to_ptr.vmem [resolvable:$true] %s27
      %33 = dma.hbm_to_vmem [thread:$0]  %s26, 256, %s28, [#allocation3], 128, 128, 8
    $region5: #{tpu_custom_call.1} parent=1 // pred_fallthru
      _
    // Predicated region
    $region6: #{tpu_custom_call.1} parent=1 // pred_check
      _
    $region7: #{tpu_custom_call.1} parent=1 // pred_check_branch
      %35 = sbr.rel (0) target = $region9
    $region8: #{tpu_custom_call.1} parent=1 // pred_region
      %37 = vsyncadd [#allocation6], 0
      %s38 = sshll.u32 %s1, 4
      %s39 = int_to_ptr.hbm [resolvable:$true] %s38
      %s40 = sshll.u32 [#allocation5], 4
      %s41 = int_to_ptr.vmem [resolvable:$true] %s40
      %46 = dma.hbm_to_vmem [thread:$0]  %s39, 512, %s41, [#allocation6], 256, 256, 16
    $region9: #{tpu_custom_call.1} parent=1 // pred_fallthru
      _
    // Predicated region
    $region10: #{tpu_custom_call.1} parent=1 // pred_check
      _
    $region11: #{tpu_custom_call.1} parent=1 // pred_check_branch
      %48 = sbr.rel (0) target = $region13
    $region12: #{tpu_custom_call.1} parent=1 // pred_region
      %50 = vsyncadd [#allocation6], 0
      %s51 = sshll.u32 %s2, 4
      %s52 = int_to_ptr.hbm [resolvable:$true] %s51
      %s53 = sshll.u32 [#allocation7], 4
      %s54 = int_to_ptr.vmem [resolvable:$true] %s53
      %59 = dma.hbm_to_vmem [thread:$0]  %s52, 1280, %s54, [#allocation6], 256, 256, 16
    $region13: #{tpu_custom_call.1} parent=1 // pred_fallthru
      _
    // Predicated region
    $region14: #{tpu_custom_call.1} parent=1 // pred_check
      _
    $region15: #{tpu_custom_call.1} parent=1 // pred_check_branch
      %61 = sbr.rel (0) target = $region17
    $region16: #{tpu_custom_call.1} parent=1 // pred_region
      _
    $region17: #{tpu_custom_call.1} parent=1 // pred_fallthru
      _
    // Predicated region
    $region18: #{tpu_custom_call.1} parent=1 // pred_check
      _
    $region19: #{tpu_custom_call.1} parent=1 // pred_check_branch
      %63 = sbr.rel (0) target = $region21
    $region20: #{tpu_custom_call.1} parent=1 // pred_region
      %65 = vsyncadd [#allocation9], 0
      %s66 = sshll.u32 %s4, 4
      %s67 = int_to_ptr.hbm [resolvable:$true] %s66
      %s68 = sshll.u32 [#allocation8], 4
      %s69 = int_to_ptr.vmem [resolvable:$true] %s68
      %74 = dma.hbm_to_vmem [thread:$0]  %s67, 1280, %s69, [#allocation9], 256, 256, 16
    $region21: #{tpu_custom_call.1} parent=1 // pred_fallthru
      _
    // Predicated region
    $region22: #{tpu_custom_call.1} parent=1 // pred_check
      _
    $region23: #{tpu_custom_call.1} parent=1 // pred_check_branch
      %76 = sbr.rel (0) target = $region25
    $region24: #{tpu_custom_call.1} parent=1 // pred_region
      %78 = vsyncadd [#allocation9], 0
      %s79 = sshll.u32 %s5, 4
      %s80 = int_to_ptr.hbm [resolvable:$true] %s79
      %s81 = sshll.u32 [#allocation10], 4
      %s82 = int_to_ptr.vmem [resolvable:$true] %s81
      %87 = dma.hbm_to_vmem [thread:$0]  %s80, 1280, %s82, [#allocation9], 256, 256, 16
    $region25: #{tpu_custom_call.1} parent=1 // pred_fallthru
      _
    // Predicated region
    $region26: #{tpu_custom_call.1} parent=1 // pred_check
      _
    $region27: #{tpu_custom_call.1} parent=1 // pred_check_branch
      %89 = sbr.rel (0) target = $region29
    $region28: #{tpu_custom_call.1} parent=1 // pred_region
      %91 = vsyncadd [#allocation12], 0
      %s93 = sshll.u32 %s6, 4
      %s94 = int_to_ptr.hbm [resolvable:$true] %s93
      %s95 = sshll.u32 [#allocation11], 4
      %s96 = int_to_ptr.vmem [resolvable:$true] %s95
      %98 = dma.hbm_to_vmem [thread:$0]  %s94, 32, %s96, [#allocation12]
    $region29: #{tpu_custom_call.1} parent=1 // pred_fallthru
      _
    // Predicated region
    $region30: #{tpu_custom_call.1} parent=1 // pred_check
      _
    $region31: #{tpu_custom_call.1} parent=1 // pred_check_branch
      %100 = sbr.rel (0) target = $region33
    $region32: #{tpu_custom_call.1} parent=1 // pred_region
      %102 = vsyncadd [#allocation12], 0
      %s103 = sshll.u32 %s7, 4
      %s104 = int_to_ptr.hbm [resolvable:$true] %s103
      %s105 = sshll.u32 [#allocation13], 4
      %s106 = int_to_ptr.vmem [resolvable:$true] %s105
      %111 = dma.hbm_to_vmem [thread:$0]  %s104, 1920, %s106, [#allocation12], 384, 384, 24
    $region33: #{tpu_custom_call.1} parent=1 // pred_fallthru
      _
    // Predicated region
    $region34: #{tpu_custom_call.1} parent=1 // pred_check
      _
    $region35: #{tpu_custom_call.1} parent=1 // pred_check_branch
      %113 = sbr.rel (0) target = $region37
    $region36: #{tpu_custom_call.1} parent=1 // pred_region
      %115 = vsyncadd [#allocation15], 0
      %s116 = sshll.u32 %s8, 4
      %s117 = int_to_ptr.hbm [resolvable:$true] %s116
      %s118 = sshll.u32 [#allocation14], 4
      %s119 = int_to_ptr.vmem [resolvable:$true] %s118
      %124 = dma.hbm_to_vmem [thread:$0]  %s117, 3840, %s119, [#allocation15], 384, 384, 24
    $region37: #{tpu_custom_call.1} parent=1 // pred_fallthru
      _
    // Predicated region
    $region38: #{tpu_custom_call.1} parent=1 // pred_check
      _
    $region39: #{tpu_custom_call.1} parent=1 // pred_check_branch
      %126 = sbr.rel (0) target = $region41
    $region40: #{tpu_custom_call.1} parent=1 // pred_region
      _
    $region41: #{tpu_custom_call.1} parent=1 // pred_fallthru
      _
    // Predicated region
    $region42: #{tpu_custom_call.1} parent=1 // pred_check
      _
    $region43: #{tpu_custom_call.1} parent=1 // pred_check_branch
      %128 = sbr.rel (0) target = $region45
    $region44: #{tpu_custom_call.1} parent=1 // pred_region
      %130 = dma.done [#allocation3], 256
    $region45: #{tpu_custom_call.1} parent=1 // pred_fallthru
      _
    // Predicated region
    $region46: #{tpu_custom_call.1} parent=1 // pred_check
      _
    $region47: #{tpu_custom_call.1} parent=1 // pred_check_branch
      %132 = sbr.rel (0) target = $region49
    $region48: #{tpu_custom_call.1} parent=1 // pred_region
      %134 = dma.done [#allocation6], 512
    $region49: #{tpu_custom_call.1} parent=1 // pred_fallthru
      _
    // Predicated region
    $region50: #{tpu_custom_call.1} parent=1 // pred_check
      _
    $region51: #{tpu_custom_call.1} parent=1 // pred_check_branch
      %136 = sbr.rel (0) target = $region53
    $region52: #{tpu_custom_call.1} parent=1 // pred_region
      %138 = dma.done [#allocation6], 1280
    $region53: #{tpu_custom_call.1} parent=1 // pred_fallthru
      _
    // Predicated region
    $region54: #{tpu_custom_call.1} parent=1 // pred_check
      _
    $region55: #{tpu_custom_call.1} parent=1 // pred_check_branch
      %140 = sbr.rel (0) target = $region57
    $region56: #{tpu_custom_call.1} parent=1 // pred_region
      %142 = dma.done [#allocation9], 1280
    $region57: #{tpu_custom_call.1} parent=1 // pred_fallthru
      _
    // Predicated region
    $region58: #{tpu_custom_call.1} parent=1 // pred_check
      _
    $region59: #{tpu_custom_call.1} parent=1 // pred_check_branch
      %144 = sbr.rel (0) target = $region61
    $region60: #{tpu_custom_call.1} parent=1 // pred_region
      %146 = dma.done [#allocation9], 1280
    $region61: #{tpu_custom_call.1} parent=1 // pred_fallthru
      _
    // Predicated region
    $region62: #{tpu_custom_call.1} parent=1 // pred_check
      _
    $region63: #{tpu_custom_call.1} parent=1 // pred_check_branch
      %148 = sbr.rel (0) target = $region65
    $region64: #{tpu_custom_call.1} parent=1 // pred_region
      %150 = dma.done [#allocation12], 32
    $region65: #{tpu_custom_call.1} parent=1 // pred_fallthru
      _
    // Predicated region
    $region66: #{tpu_custom_call.1} parent=1 // pred_check
      _
    $region67: #{tpu_custom_call.1} parent=1 // pred_check_branch
      %152 = sbr.rel (0) target = $region69
    $region68: #{tpu_custom_call.1} parent=1 // pred_region
      %154 = dma.done [#allocation12], 1920
    $region69: #{tpu_custom_call.1} parent=1 // pred_fallthru
      _
    // Predicated region
    $region70: #{tpu_custom_call.1} parent=1 // pred_check
      _
    $region71: #{tpu_custom_call.1} parent=1 // pred_check_branch
      %156 = sbr.rel (0) target = $region73
    $region72: #{tpu_custom_call.1} parent=1 // pred_region
      %158 = dma.done [#allocation15], 3840
    $region73: #{tpu_custom_call.1} parent=1 // pred_fallthru
      _
    %v159 = vld [vmem:[#allocation2] sm:$0xff]
    %v160 = vld [vmem:[#allocation2 + $0x8] sm:$0xff]
    %v161 = vld [vmem:[#allocation5] sm:$0xff]
    %v162 = vld [vmem:[#allocation5 + $0x8] sm:$0xff]
    %v163 = vld [vmem:[#allocation5 + $0x10] sm:$0xff]
    %v164 = vld [vmem:[#allocation5 + $0x18] sm:$0xff]
    %v165 = vld [vmem:[%s3] sm:$0x3]
    %v167 = vperm.slane %v165, 0
    %v168 = vperm.slane %v165, 1
    %vm171 = vcmask 130048
    %v173 = vsel %vm171, %v159, 0
    %v176 = vsel %vm171, %v160, 0
    %178 = vmatpush.msra.mxu0 0.0
    %179 = vmatpush.msra.mxu0 0.0
    %180 = vmatpush.msra.mxu0 0.0
    %181 = vmatpush.msra.mxu0 0.0
    %182 = vmatpush.msra.mxu0 0.0
    %183 = vmatpush.msra.mxu0 0.0
    %184 = vmatpush.msra.mxu0 0.0
    %185 = vmatpush.msra.mxu0 0.0
    %186 = vmatpush.msra.mxu0 0.0
    %187 = vmatpush.msra.mxu0 0.0
    %188 = vmatpush.msra.mxu0 0.0
    %189 = vmatpush.msra.mxu0 0.0
    %190 = vmatpush.msra.mxu0 0.0
    %191 = vmatpush.msra.mxu0 0.0
    %192 = vmatpush.msra.mxu0 %v163
    %193 = vmatpush.msra.mxu0 %v161
    %194 = vmatmul.f32.gmra.mxu0 %v173
    %v195 = vpop.f32.mrf.mxu0
    %v196 = vadd.f32 %v167, %v195
    %197 = vmatmul.f32.gmra.mxu0 %v176
    %v198 = vpop.f32.mrf.mxu0
    %v199 = vadd.f32 %v167, %v198
    %200 = vdwg.mxu0
    %201 = vmatpush.msra.mxu0 0.0
    %202 = vmatpush.msra.mxu0 0.0
    %203 = vmatpush.msra.mxu0 0.0
    %204 = vmatpush.msra.mxu0 0.0
    %205 = vmatpush.msra.mxu0 0.0
    %206 = vmatpush.msra.mxu0 0.0
    %207 = vmatpush.msra.mxu0 0.0
    %208 = vmatpush.msra.mxu0 0.0
    %209 = vmatpush.msra.mxu0 0.0
    %210 = vmatpush.msra.mxu0 0.0
    %211 = vmatpush.msra.mxu0 0.0
    %212 = vmatpush.msra.mxu0 0.0
    %213 = vmatpush.msra.mxu0 0.0
    %214 = vmatpush.msra.mxu0 0.0
    %215 = vmatpush.msra.mxu0 %v164
    %216 = vmatpush.msra.mxu0 %v162
    %217 = vmatmul.f32.gmra.mxu0 %v173
    %v218 = vpop.f32.mrf.mxu0
    %v219 = vadd.f32 %v168, %v218
    %220 = vmatmul.f32.gmra.mxu0 %v176
    %v221 = vpop.f32.mrf.mxu0
    %v222 = vadd.f32 %v168, %v221
    %223 = vdwg.mxu0
    %v224 = vld [vmem:[#allocation7] sm:$0xff]
    %v225 = vld [vmem:[#allocation7 + $0x8] sm:$0xff]
    %v226 = vld [vmem:[#allocation7 + $0x10] sm:$0xff]
    %v227 = vld [vmem:[#allocation7 + $0x18] sm:$0xff]
    %v228 = vld [vmem:[#allocation7 + $0x20] sm:$0xff]
    %v229 = vld [vmem:[#allocation7 + $0x28] sm:$0xff]
    %v230 = vld [vmem:[#allocation7 + $0x30] sm:$0xff]
    %v231 = vld [vmem:[#allocation7 + $0x38] sm:$0xff]
    %v232 = vld [vmem:[#allocation7 + $0x40] sm:$0xff]
    %v233 = vld [vmem:[#allocation7 + $0x48] sm:$0xff]
    %v234 = vld [vmem:[#allocation8] sm:$0xff]
    %v235 = vld [vmem:[#allocation8 + $0x8] sm:$0xff]
    %v236 = vld [vmem:[#allocation8 + $0x10] sm:$0xff]
    %v237 = vld [vmem:[#allocation8 + $0x18] sm:$0xff]
    %v238 = vld [vmem:[#allocation8 + $0x20] sm:$0xff]
    %v239 = vld [vmem:[#allocation8 + $0x28] sm:$0xff]
    %v240 = vld [vmem:[#allocation8 + $0x30] sm:$0xff]
    %v241 = vld [vmem:[#allocation8 + $0x38] sm:$0xff]
    %v242 = vld [vmem:[#allocation8 + $0x40] sm:$0xff]
    %v243 = vld [vmem:[#allocation8 + $0x48] sm:$0xff]
    %v244 = vld [vmem:[#allocation10] sm:$0xff]
    %v245 = vld [vmem:[#allocation10 + $0x8] sm:$0xff]
    %v246 = vld [vmem:[#allocation10 + $0x10] sm:$0xff]
    %v247 = vld [vmem:[#allocation10 + $0x18] sm:$0xff]
    %v248 = vld [vmem:[#allocation10 + $0x20] sm:$0xff]
    %v249 = vld [vmem:[#allocation10 + $0x28] sm:$0xff]
    %v250 = vld [vmem:[#allocation10 + $0x30] sm:$0xff]
    %v251 = vld [vmem:[#allocation10 + $0x38] sm:$0xff]
    %v252 = vld [vmem:[#allocation10 + $0x40] sm:$0xff]
    %v253 = vld [vmem:[#allocation10 + $0x48] sm:$0xff]
    %v254 = vld [vmem:[#allocation11] sm:$0x3]
    %v255 = vld [vmem:[#allocation13] sm:$0xff]
    %v256 = vld [vmem:[#allocation13 + $0x8] sm:$0xff]
    %v257 = vld [vmem:[#allocation13 + $0x10] sm:$0xff]
    %v258 = vld [vmem:[#allocation13 + $0x18] sm:$0xff]
    %v259 = vld [vmem:[#allocation13 + $0x20] sm:$0xff]
    %v260 = vld [vmem:[#allocation13 + $0x28] sm:$0xff]
    %v261 = vld [vmem:[#allocation13 + $0x30] sm:$0xff]
    %v262 = vld [vmem:[#allocation13 + $0x38] sm:$0xff]
    %v263 = vld [vmem:[#allocation13 + $0x40] sm:$0xff]
    %v264 = vld [vmem:[#allocation13 + $0x48] sm:$0xff]
    %v265 = vld [vmem:[#allocation13 + $0x50] sm:$0xff]
    %v266 = vld [vmem:[#allocation13 + $0x58] sm:$0xff]
    %v267 = vld [vmem:[#allocation13 + $0x60] sm:$0xff]
    %v268 = vld [vmem:[#allocation13 + $0x68] sm:$0xff]
    %v269 = vld [vmem:[#allocation13 + $0x70] sm:$0xff]
    %v270 = vld [vmem:[#allocation14] sm:$0xff]
    %v271 = vld [vmem:[#allocation14 + $0x8] sm:$0xff]
    %v272 = vld [vmem:[#allocation14 + $0x10] sm:$0xff]
    %v273 = vld [vmem:[#allocation14 + $0x18] sm:$0xff]
    %v274 = vld [vmem:[#allocation14 + $0x20] sm:$0xff]
    %v275 = vld [vmem:[#allocation14 + $0x28] sm:$0xff]
    %v276 = vld [vmem:[#allocation14 + $0x30] sm:$0xff]
    %v277 = vld [vmem:[#allocation14 + $0x38] sm:$0xff]
    %v278 = vld [vmem:[#allocation14 + $0x40] sm:$0xff]
    %v279 = vld [vmem:[#allocation14 + $0x48] sm:$0xff]
    %v280 = vld [vmem:[#allocation14 + $0x50] sm:$0xff]
    %v281 = vld [vmem:[#allocation14 + $0x58] sm:$0xff]
    %v282 = vld [vmem:[#allocation14 + $0x60] sm:$0xff]
    %v283 = vld [vmem:[#allocation14 + $0x68] sm:$0xff]
    %v284 = vld [vmem:[#allocation14 + $0x70] sm:$0xff]
    %v285 = vld [vmem:[#allocation14 + $0x78] sm:$0xff]
    %v286 = vld [vmem:[#allocation14 + $0x80] sm:$0xff]
    %v287 = vld [vmem:[#allocation14 + $0x88] sm:$0xff]
    %v288 = vld [vmem:[#allocation14 + $0x90] sm:$0xff]
    %v289 = vld [vmem:[#allocation14 + $0x98] sm:$0xff]
    %v290 = vld [vmem:[#allocation14 + $0xa0] sm:$0xff]
    %v291 = vld [vmem:[#allocation14 + $0xa8] sm:$0xff]
    %v292 = vld [vmem:[#allocation14 + $0xb0] sm:$0xff]
    %v293 = vld [vmem:[#allocation14 + $0xb8] sm:$0xff]
    %v294 = vld [vmem:[#allocation14 + $0xc0] sm:$0xff]
    %v295 = vld [vmem:[#allocation14 + $0xc8] sm:$0xff]
    %v296 = vld [vmem:[#allocation14 + $0xd0] sm:$0xff]
    %v297 = vld [vmem:[#allocation14 + $0xd8] sm:$0xff]
    %v298 = vld [vmem:[#allocation14 + $0xe0] sm:$0xff]
    %v299 = vld [vmem:[#allocation14 + $0xe8] sm:$0xff]
    %v300 = vld [vmem:[%s9] sm:$0x7]
    %vm301 = vcmask 326656
    %v303 = vsel %vm301, 0.0, 0
    %305 = vmatpush.msra.mxu0 0.0
    %306 = vmatpush.msra.mxu0 0.0
    %307 = vmatpush.msra.mxu0 0.0
    %308 = vmatpush.msra.mxu0 0.0
    %309 = vmatpush.msra.mxu0 0.0
    %310 = vmatpush.msra.mxu0 0.0
    %311 = vmatpush.msra.mxu0 0.0
    %312 = vmatpush.msra.mxu0 0.0
    %313 = vmatpush.msra.mxu0 0.0
    %314 = vmatpush.msra.mxu0 0.0
    %315 = vmatpush.msra.mxu0 0.0
    %316 = vmatpush.msra.mxu0 %v232
    %317 = vmatpush.msra.mxu0 %v230
    %318 = vmatpush.msra.mxu0 %v228
    %319 = vmatpush.msra.mxu0 %v226
    %320 = vmatpush.msra.mxu0 %v224
    %321 = vmatmul.f32.gmra.mxu0 %v303
    %v322 = vpop.f32.mrf.mxu0
    %v323 = vadd.f32 0.0, %v322
    %324 = vdwg.mxu0
    %325 = vmatpush.msra.mxu0 0.0
    %326 = vmatpush.msra.mxu0 0.0
    %327 = vmatpush.msra.mxu0 0.0
    %328 = vmatpush.msra.mxu0 0.0
    %329 = vmatpush.msra.mxu0 0.0
    %330 = vmatpush.msra.mxu0 0.0
    %331 = vmatpush.msra.mxu0 0.0
    %332 = vmatpush.msra.mxu0 0.0
    %333 = vmatpush.msra.mxu0 0.0
    %334 = vmatpush.msra.mxu0 0.0
    %335 = vmatpush.msra.mxu0 0.0
    %336 = vmatpush.msra.mxu0 %v233
    %337 = vmatpush.msra.mxu0 %v231
    %338 = vmatpush.msra.mxu0 %v229
    %339 = vmatpush.msra.mxu0 %v227
    %340 = vmatpush.msra.mxu0 %v225
    %341 = vmatmul.f32.gmra.mxu0 %v303
    %v342 = vpop.f32.mrf.mxu0
    %v343 = vadd.f32 0.0, %v342
    %344 = vdwg.mxu0
    %v345 = vadd.f32 %v196, %v323
    %v346 = vadd.f32 %v219, %v343
    %v347 = vxor.u32 %v345, 2147483648
    %v348 = vmul.f32 %v347, 1.442695
    %v349 = vpow.pop %v348
    %v350 = vadd.f32 %v349, 1.0
    %v351 = vrcp.pop %v350
    %v352 = vmul.f32 %v350, %v351
    %v353 = vsub.f32 1.0, %v352
    %v354 = vmul.f32 %v351, %v353
    %v355 = vadd.f32 %v351, %v354
    %vm356 = vweird.f32 %v350
    %vm357 = vweird.f32 %v351
    %vm358 = vmor %vm356, %vm357
    %v359 = vsel %vm358, %v351, %v355
    %v360 = vand.u32 2147483647, %v350
    %vm361 = vcmp.eq.f32.partialorder %v360, 8.507059e+37
    %v362 = vand.u32 %v350, 2147483648
    %v363 = vor.u32 1.1754944e-38, %v362
    %v364 = vsel %vm361, %v363, %v359
    %v365 = vmul.f32 1.0, %v364
    %v366 = vtanh.pop %v345
    %v367 = vxor.u32 %v346, 2147483648
    %v368 = vmul.f32 %v367, 1.442695
    %v369 = vpow.pop %v368
    %v370 = vadd.f32 %v369, 1.0
    %v371 = vrcp.pop %v370
    %v372 = vmul.f32 %v370, %v371
    %v373 = vsub.f32 1.0, %v372
    %v374 = vmul.f32 %v371, %v373
    %v375 = vadd.f32 %v371, %v374
    %vm376 = vweird.f32 %v370
    %vm377 = vweird.f32 %v371
    %vm378 = vmor %vm376, %vm377
    %v379 = vsel %vm378, %v371, %v375
    %v380 = vand.u32 2147483647, %v370
    %vm381 = vcmp.eq.f32.partialorder %v380, 8.507059e+37
    %v382 = vand.u32 %v370, 2147483648
    %v383 = vor.u32 1.1754944e-38, %v382
    %v384 = vsel %vm381, %v383, %v379
    %v385 = vmul.f32 1.0, %v384
    %v386 = vmul.f32 %v365, 0.0
    %388 = vrot.lane.b32.xlu0 %v366, 48
    %v389 = vpop.permute.xlu0 %388
    %v391 = vmul.f32 %v365, %v389
    %393 = vrot.lane.b32.xlu0 %v391, 40
    %v394 = vpop.permute.xlu0 %393
    %v396 = vadd.f32 %v386, %v394
    %v397 = vtanh.pop %v396
    %399 = vrot.lane.b32.xlu0 %v397, 80
    %v400 = vpop.permute.xlu0 %399
    %v402 = vmul.f32 %v365, %v400
    %v403 = vmul.f32 %v385, %v400
    %404 = vmatpush.msra.mxu0 0.0
    %405 = vmatpush.msra.mxu0 0.0
    %406 = vmatpush.msra.mxu0 0.0
    %407 = vmatpush.msra.mxu0 0.0
    %408 = vmatpush.msra.mxu0 0.0
    %409 = vmatpush.msra.mxu0 0.0
    %410 = vmatpush.msra.mxu0 0.0
    %411 = vmatpush.msra.mxu0 0.0
    %412 = vmatpush.msra.mxu0 0.0
    %413 = vmatpush.msra.mxu0 0.0
    %414 = vmatpush.msra.mxu0 0.0
    %415 = vmatpush.msra.mxu0 %v252
    %416 = vmatpush.msra.mxu0 %v250
    %417 = vmatpush.msra.mxu0 %v248
    %418 = vmatpush.msra.mxu0 %v246
    %419 = vmatpush.msra.mxu0 %v244
    %420 = vmatmul.f32.gmra.mxu0 %v303
    %v421 = vpop.f32.mrf.mxu0
    %v422 = vadd.f32 0.0, %v421
    %423 = vdwg.mxu0
    %424 = vmatpush.msra.mxu0 0.0
    %425 = vmatpush.msra.mxu0 0.0
    %426 = vmatpush.msra.mxu0 0.0
    %427 = vmatpush.msra.mxu0 0.0
    %428 = vmatpush.msra.mxu0 0.0
    %429 = vmatpush.msra.mxu0 0.0
    %430 = vmatpush.msra.mxu0 0.0
    %431 = vmatpush.msra.mxu0 0.0
    %432 = vmatpush.msra.mxu0 0.0
    %433 = vmatpush.msra.mxu0 0.0
    %434 = vmatpush.msra.mxu0 0.0
    %435 = vmatpush.msra.mxu0 %v253
    %436 = vmatpush.msra.mxu0 %v251
    %437 = vmatpush.msra.mxu0 %v249
    %438 = vmatpush.msra.mxu0 %v247
    %439 = vmatpush.msra.mxu0 %v245
    %440 = vmatmul.f32.gmra.mxu0 %v303
    %v441 = vpop.f32.mrf.mxu0
    %v442 = vadd.f32 0.0, %v441
    %443 = vdwg.mxu0
    %446 = vrot.lane.b32.xlu0 %v402, 8
    %v447 = vpop.permute.xlu0 %446
    %448 = vrot.lane.b32.xlu0 %v403, 8
    %v449 = vpop.permute.xlu0 %448
    %vm450 = vcmask 64512
    %v451 = vsel %vm450, %v447, %v449
    %v452 = vsel %vm301, %v451, 0
    %454 = vmatpush.msra.mxu0 0.0
    %455 = vmatpush.msra.mxu0 0.0
    %456 = vmatpush.msra.mxu0 0.0
    %457 = vmatpush.msra.mxu0 0.0
    %458 = vmatpush.msra.mxu0 0.0
    %459 = vmatpush.msra.mxu0 0.0
    %460 = vmatpush.msra.mxu0 0.0
    %461 = vmatpush.msra.mxu0 0.0
    %462 = vmatpush.msra.mxu0 0.0
    %463 = vmatpush.msra.mxu0 0.0
    %464 = vmatpush.msra.mxu0 0.0
    %465 = vmatpush.msra.mxu0 %v242
    %466 = vmatpush.msra.mxu0 %v240
    %467 = vmatpush.msra.mxu0 %v238
    %468 = vmatpush.msra.mxu0 %v236
    %469 = vmatpush.msra.mxu0 %v234
    %470 = vmatmul.f32.gmra.mxu0 %v452
    %v471 = vpop.f32.mrf.mxu0
    %v472 = vadd.f32 %v422, %v471
    %473 = vdwg.mxu0
    %474 = vmatpush.msra.mxu0 0.0
    %475 = vmatpush.msra.mxu0 0.0
    %476 = vmatpush.msra.mxu0 0.0
    %477 = vmatpush.msra.mxu0 0.0
    %478 = vmatpush.msra.mxu0 0.0
    %479 = vmatpush.msra.mxu0 0.0
    %480 = vmatpush.msra.mxu0 0.0
    %481 = vmatpush.msra.mxu0 0.0
    %482 = vmatpush.msra.mxu0 0.0
    %483 = vmatpush.msra.mxu0 0.0
    %484 = vmatpush.msra.mxu0 0.0
    %485 = vmatpush.msra.mxu0 %v243
    %486 = vmatpush.msra.mxu0 %v241
    %487 = vmatpush.msra.mxu0 %v239
    %488 = vmatpush.msra.mxu0 %v237
    %489 = vmatpush.msra.mxu0 %v235
    %490 = vmatmul.f32.gmra.mxu0 %v452
    %v491 = vpop.f32.mrf.mxu0
    %v492 = vadd.f32 %v442, %v491
    %493 = vdwg.mxu0
    %v495 = vperm.slane %v254, 0
    %v496 = vperm.slane %v254, 1
    %v499 = vadd.f32 %v472, %v495
    %v500 = vadd.f32 %v492, %v496
    %v501 = vxor.u32 %v499, 2147483648
    %v502 = vmul.f32 %v501, 1.442695
    %v503 = vpow.pop %v502
    %v504 = vadd.f32 %v503, 1.0
    %v505 = vrcp.pop %v504
    %v506 = vmul.f32 %v504, %v505
    %v507 = vsub.f32 1.0, %v506
    %v508 = vmul.f32 %v505, %v507
    %v509 = vadd.f32 %v505, %v508
    %vm510 = vweird.f32 %v504
    %vm511 = vweird.f32 %v505
    %vm512 = vmor %vm510, %vm511
    %v513 = vsel %vm512, %v505, %v509
    %v514 = vand.u32 2147483647, %v504
    %vm515 = vcmp.eq.f32.partialorder %v514, 8.507059e+37
    %v516 = vand.u32 %v504, 2147483648
    %v517 = vor.u32 1.1754944e-38, %v516
    %v518 = vsel %vm515, %v517, %v513
    %v519 = vmul.f32 1.0, %v518
    %v520 = vtanh.pop %v499
    %v521 = vxor.u32 %v500, 2147483648
    %v522 = vmul.f32 %v521, 1.442695
    %v523 = vpow.pop %v522
    %v524 = vadd.f32 %v523, 1.0
    %v525 = vrcp.pop %v524
    %v526 = vmul.f32 %v524, %v525
    %v527 = vsub.f32 1.0, %v526
    %v528 = vmul.f32 %v525, %v527
    %v529 = vadd.f32 %v525, %v528
    %vm530 = vweird.f32 %v524
    %vm531 = vweird.f32 %v525
    %vm532 = vmor %vm530, %vm531
    %v533 = vsel %vm532, %v525, %v529
    %v534 = vand.u32 2147483647, %v524
    %vm535 = vcmp.eq.f32.partialorder %v534, 8.507059e+37
    %v536 = vand.u32 %v524, 2147483648
    %v537 = vor.u32 1.1754944e-38, %v536
    %v538 = vsel %vm535, %v537, %v533
    %v539 = vmul.f32 1.0, %v538
    %v540 = vmul.f32 %v519, 0.0
    %542 = vrot.lane.b32.xlu0 %v520, 48
    %v543 = vpop.permute.xlu0 %542
    %v545 = vmul.f32 %v519, %v543
    %547 = vrot.lane.b32.xlu0 %v545, 40
    %v548 = vpop.permute.xlu0 %547
    %v550 = vadd.f32 %v540, %v548
    %v551 = vtanh.pop %v550
    %553 = vrot.lane.b32.xlu0 %v551, 80
    %v554 = vpop.permute.xlu0 %553
    %v556 = vmul.f32 %v519, %v554
    %v557 = vmul.f32 %v539, %v554
    %vm558 = vcmask 654336
    %v559 = vsel %vm558, 0.0, 0
    %561 = vmatpush.msra.mxu0 0.0
    %562 = vmatpush.msra.mxu0 0.0
    %563 = vmatpush.msra.mxu0 0.0
    %564 = vmatpush.msra.mxu0 0.0
    %565 = vmatpush.msra.mxu0 0.0
    %566 = vmatpush.msra.mxu0 0.0
    %567 = vmatpush.msra.mxu0 %v297
    %568 = vmatpush.msra.mxu0 %v294
    %569 = vmatpush.msra.mxu0 %v291
    %570 = vmatpush.msra.mxu0 %v288
    %571 = vmatpush.msra.mxu0 %v285
    %572 = vmatpush.msra.mxu0 %v282
    %573 = vmatpush.msra.mxu0 %v279
    %574 = vmatpush.msra.mxu0 %v276
    %575 = vmatpush.msra.mxu0 %v273
    %576 = vmatpush.msra.mxu0 %v270
    %577 = vmatmul.f32.gmra.mxu0 %v559
    %v578 = vpop.f32.mrf.mxu0
    %v579 = vadd.f32 0.0, %v578
    %580 = vdwg.mxu0
    %581 = vmatpush.msra.mxu0 0.0
    %582 = vmatpush.msra.mxu0 0.0
    %583 = vmatpush.msra.mxu0 0.0
    %584 = vmatpush.msra.mxu0 0.0
    %585 = vmatpush.msra.mxu0 0.0
    %586 = vmatpush.msra.mxu0 0.0
    %587 = vmatpush.msra.mxu0 %v298
    %588 = vmatpush.msra.mxu0 %v295
    %589 = vmatpush.msra.mxu0 %v292
    %590 = vmatpush.msra.mxu0 %v289
    %591 = vmatpush.msra.mxu0 %v286
    %592 = vmatpush.msra.mxu0 %v283
    %593 = vmatpush.msra.mxu0 %v280
    %594 = vmatpush.msra.mxu0 %v277
    %595 = vmatpush.msra.mxu0 %v274
    %596 = vmatpush.msra.mxu0 %v271
    %597 = vmatmul.f32.gmra.mxu0 %v559
    %v598 = vpop.f32.mrf.mxu0
    %v599 = vadd.f32 0.0, %v598
    %600 = vdwg.mxu0
    %601 = vmatpush.msra.mxu0 0.0
    %602 = vmatpush.msra.mxu0 0.0
    %603 = vmatpush.msra.mxu0 0.0
    %604 = vmatpush.msra.mxu0 0.0
    %605 = vmatpush.msra.mxu0 0.0
    %606 = vmatpush.msra.mxu0 0.0
    %607 = vmatpush.msra.mxu0 %v299
    %608 = vmatpush.msra.mxu0 %v296
    %609 = vmatpush.msra.mxu0 %v293
    %610 = vmatpush.msra.mxu0 %v290
    %611 = vmatpush.msra.mxu0 %v287
    %612 = vmatpush.msra.mxu0 %v284
    %613 = vmatpush.msra.mxu0 %v281
    %614 = vmatpush.msra.mxu0 %v278
    %615 = vmatpush.msra.mxu0 %v275
    %616 = vmatpush.msra.mxu0 %v272
    %617 = vmatmul.f32.gmra.mxu0 %v559
    %v618 = vpop.f32.mrf.mxu0
    %v619 = vadd.f32 0.0, %v618
    %620 = vdwg.mxu0
    %623 = vrot.lane.b32.xlu0 %v556, 8
    %v624 = vpop.permute.xlu0 %623
    %625 = vrot.lane.b32.xlu0 %v557, 8
    %v626 = vpop.permute.xlu0 %625
    %v627 = vsel %vm450, %v624, %v626
    %v628 = vsel %vm301, %v627, 0
    %630 = vmatpush.msra.mxu0 0.0
    %631 = vmatpush.msra.mxu0 0.0
    %632 = vmatpush.msra.mxu0 0.0
    %633 = vmatpush.msra.mxu0 0.0
    %634 = vmatpush.msra.mxu0 0.0
    %635 = vmatpush.msra.mxu0 0.0
    %636 = vmatpush.msra.mxu0 0.0
    %637 = vmatpush.msra.mxu0 0.0
    %638 = vmatpush.msra.mxu0 0.0
    %639 = vmatpush.msra.mxu0 0.0
    %640 = vmatpush.msra.mxu0 0.0
    %641 = vmatpush.msra.mxu0 %v267
    %642 = vmatpush.msra.mxu0 %v264
    %643 = vmatpush.msra.mxu0 %v261
    %644 = vmatpush.msra.mxu0 %v258
    %645 = vmatpush.msra.mxu0 %v255
    %646 = vmatmul.f32.gmra.mxu0 %v628
    %v647 = vpop.f32.mrf.mxu0
    %v648 = vadd.f32 %v579, %v647
    %649 = vdwg.mxu0
    %650 = vmatpush.msra.mxu0 0.0
    %651 = vmatpush.msra.mxu0 0.0
    %652 = vmatpush.msra.mxu0 0.0
    %653 = vmatpush.msra.mxu0 0.0
    %654 = vmatpush.msra.mxu0 0.0
    %655 = vmatpush.msra.mxu0 0.0
    %656 = vmatpush.msra.mxu0 0.0
    %657 = vmatpush.msra.mxu0 0.0
    %658 = vmatpush.msra.mxu0 0.0
    %659 = vmatpush.msra.mxu0 0.0
    %660 = vmatpush.msra.mxu0 0.0
    %661 = vmatpush.msra.mxu0 %v268
    %662 = vmatpush.msra.mxu0 %v265
    %663 = vmatpush.msra.mxu0 %v262
    %664 = vmatpush.msra.mxu0 %v259
    %665 = vmatpush.msra.mxu0 %v256
    %666 = vmatmul.f32.gmra.mxu0 %v628
    %v667 = vpop.f32.mrf.mxu0
    %v668 = vadd.f32 %v599, %v667
    %669 = vdwg.mxu0
    %670 = vmatpush.msra.mxu0 0.0
    %671 = vmatpush.msra.mxu0 0.0
    %672 = vmatpush.msra.mxu0 0.0
    %673 = vmatpush.msra.mxu0 0.0
    %674 = vmatpush.msra.mxu0 0.0
    %675 = vmatpush.msra.mxu0 0.0
    %676 = vmatpush.msra.mxu0 0.0
    %677 = vmatpush.msra.mxu0 0.0
    %678 = vmatpush.msra.mxu0 0.0
    %679 = vmatpush.msra.mxu0 0.0
    %680 = vmatpush.msra.mxu0 0.0
    %681 = vmatpush.msra.mxu0 %v269
    %682 = vmatpush.msra.mxu0 %v266
    %683 = vmatpush.msra.mxu0 %v263
    %684 = vmatpush.msra.mxu0 %v260
    %685 = vmatpush.msra.mxu0 %v257
    %686 = vmatmul.f32.gmra.mxu0 %v628
    %v687 = vpop.f32.mrf.mxu0
    %v688 = vadd.f32 %v619, %v687
    %689 = vdwg.mxu0
    %v691 = vperm.slane %v300, 0
    %v692 = vperm.slane %v300, 1
    %v693 = vperm.slane %v300, 2
    %v697 = vadd.f32 %v648, %v691
    %v698 = vadd.f32 %v668, %v692
    %v699 = vadd.f32 %v688, %v693
    %v700 = vxor.u32 %v697, 2147483648
    %v701 = vmul.f32 %v700, 1.442695
    %v702 = vpow.pop %v701
    %v703 = vadd.f32 %v702, 1.0
    %v704 = vrcp.pop %v703
    %v705 = vmul.f32 %v703, %v704
    %v706 = vsub.f32 1.0, %v705
    %v707 = vmul.f32 %v704, %v706
    %v708 = vadd.f32 %v704, %v707
    %vm709 = vweird.f32 %v703
    %vm710 = vweird.f32 %v704
    %vm711 = vmor %vm709, %vm710
    %v712 = vsel %vm711, %v704, %v708
    %v713 = vand.u32 2147483647, %v703
    %vm714 = vcmp.eq.f32.partialorder %v713, 8.507059e+37
    %v715 = vand.u32 %v703, 2147483648
    %v716 = vor.u32 1.1754944e-38, %v715
    %v717 = vsel %vm714, %v716, %v712
    %v718 = vmul.f32 1.0, %v717
    %v719 = vxor.u32 %v698, 2147483648
    %v720 = vmul.f32 %v719, 1.442695
    %v721 = vpow.pop %v720
    %v722 = vadd.f32 %v721, 1.0
    %v723 = vrcp.pop %v722
    %v724 = vmul.f32 %v722, %v723
    %v725 = vsub.f32 1.0, %v724
    %v726 = vmul.f32 %v723, %v725
    %v727 = vadd.f32 %v723, %v726
    %vm728 = vweird.f32 %v722
    %vm729 = vweird.f32 %v723
    %vm730 = vmor %vm728, %vm729
    %v731 = vsel %vm730, %v723, %v727
    %v732 = vand.u32 2147483647, %v722
    %vm733 = vcmp.eq.f32.partialorder %v732, 8.507059e+37
    %v734 = vand.u32 %v722, 2147483648
    %v735 = vor.u32 1.1754944e-38, %v734
    %v736 = vsel %vm733, %v735, %v731
    %v737 = vmul.f32 1.0, %v736
    %v738 = vtanh.pop %v698
    %v739 = vxor.u32 %v699, 2147483648
    %v740 = vmul.f32 %v739, 1.442695
    %v741 = vpow.pop %v740
    %v742 = vadd.f32 %v741, 1.0
    %v743 = vrcp.pop %v742
    %v744 = vmul.f32 %v742, %v743
    %v745 = vsub.f32 1.0, %v744
    %v746 = vmul.f32 %v743, %v745
    %v747 = vadd.f32 %v743, %v746
    %vm748 = vweird.f32 %v742
    %vm749 = vweird.f32 %v743
    %vm750 = vmor %vm748, %vm749
    %v751 = vsel %vm750, %v743, %v747
    %v752 = vand.u32 2147483647, %v742
    %vm753 = vcmp.eq.f32.partialorder %v752, 8.507059e+37
    %v754 = vand.u32 %v742, 2147483648
    %v755 = vor.u32 1.1754944e-38, %v754
    %v756 = vsel %vm753, %v755, %v751
    %v757 = vmul.f32 1.0, %v756
    %v758 = vmul.f32 %v718, 0.0
    %v759 = vmul.f32 %v737, 0.0
    %761 = vrot.lane.b32.xlu0 %v738, 96
    %v762 = vpop.permute.xlu0 %761
    %v764 = vmul.f32 %v718, %v762
    %766 = vrot.lane.b32.xlu0 %v764, 80
    %v767 = vpop.permute.xlu0 %766
    %v769 = vadd.f32 %v758, %v767
    %v770 = vadd.f32 %v759, %v767
    %v771 = vtanh.pop %v769
    %v772 = vtanh.pop %v770
    %775 = vrot.lane.b32.xlu0 %v771, 32
    %v776 = vpop.permute.xlu0 %775
    %777 = vrot.lane.b32.xlu0 %v772, 32
    %v778 = vpop.permute.xlu0 %777
    %vm779 = vcmask 261120
    %v780 = vsel %vm779, %v776, %v778
    %v783 = vmul.f32 %v737, %v776
    %v784 = vmul.f32 %v757, %v780
    %785 = vmatpush.msra.mxu0 0.0
    %786 = vmatpush.msra.mxu0 0.0
    %787 = vmatpush.msra.mxu0 0.0
    %788 = vmatpush.msra.mxu0 0.0
    %789 = vmatpush.msra.mxu0 0.0
    %790 = vmatpush.msra.mxu0 0.0
    %791 = vmatpush.msra.mxu0 0.0
    %792 = vmatpush.msra.mxu0 0.0
    %793 = vmatpush.msra.mxu0 0.0
    %794 = vmatpush.msra.mxu0 0.0
    %795 = vmatpush.msra.mxu0 0.0
    %796 = vmatpush.msra.mxu0 %v232
    %797 = vmatpush.msra.mxu0 %v230
    %798 = vmatpush.msra.mxu0 %v228
    %799 = vmatpush.msra.mxu0 %v226
    %800 = vmatpush.msra.mxu0 %v224
    %801 = vmatmul.f32.gmra.mxu0 %v452
    %v802 = vpop.f32.mrf.mxu0
    %v803 = vadd.f32 0.0, %v802
    %804 = vdwg.mxu0
    %805 = vmatpush.msra.mxu0 0.0
    %806 = vmatpush.msra.mxu0 0.0
    %807 = vmatpush.msra.mxu0 0.0
    %808 = vmatpush.msra.mxu0 0.0
    %809 = vmatpush.msra.mxu0 0.0
    %810 = vmatpush.msra.mxu0 0.0
    %811 = vmatpush.msra.mxu0 0.0
    %812 = vmatpush.msra.mxu0 0.0
    %813 = vmatpush.msra.mxu0 0.0
    %814 = vmatpush.msra.mxu0 0.0
    %815 = vmatpush.msra.mxu0 0.0
    %816 = vmatpush.msra.mxu0 %v233
    %817 = vmatpush.msra.mxu0 %v231
    %818 = vmatpush.msra.mxu0 %v229
    %819 = vmatpush.msra.mxu0 %v227
    %820 = vmatpush.msra.mxu0 %v225
    %821 = vmatmul.f32.gmra.mxu0 %v452
    %v822 = vpop.f32.mrf.mxu0
    %v823 = vadd.f32 0.0, %v822
    %824 = vdwg.mxu0
    %v827 = vrot.slane %v803, 6
    %v828 = vrot.slane %v823, 6
    %v831 = vadd.f32 %v196, %v827
    %v832 = vadd.f32 %v219, %v828
    %v833 = vxor.u32 %v831, 2147483648
    %v834 = vmul.f32 %v833, 1.442695
    %v835 = vpow.pop %v834
    %v836 = vadd.f32 %v835, 1.0
    %v837 = vrcp.pop %v836
    %v838 = vmul.f32 %v836, %v837
    %v839 = vsub.f32 1.0, %v838
    %v840 = vmul.f32 %v837, %v839
    %v841 = vadd.f32 %v837, %v840
    %vm842 = vweird.f32 %v836
    %vm843 = vweird.f32 %v837
    %vm844 = vmor %vm842, %vm843
    %v845 = vsel %vm844, %v837, %v841
    %v846 = vand.u32 2147483647, %v836
    %vm847 = vcmp.eq.f32.partialorder %v846, 8.507059e+37
    %v848 = vand.u32 %v836, 2147483648
    %v849 = vor.u32 1.1754944e-38, %v848
    %v850 = vsel %vm847, %v849, %v845
    %v851 = vmul.f32 1.0, %v850
    %v852 = vtanh.pop %v831
    %v853 = vxor.u32 %v832, 2147483648
    %v854 = vmul.f32 %v853, 1.442695
    %v855 = vpow.pop %v854
    %v856 = vadd.f32 %v855, 1.0
    %v857 = vrcp.pop %v856
    %v858 = vmul.f32 %v856, %v857
    %v859 = vsub.f32 1.0, %v858
    %v860 = vmul.f32 %v857, %v859
    %v861 = vadd.f32 %v857, %v860
    %vm862 = vweird.f32 %v856
    %vm863 = vweird.f32 %v857
    %vm864 = vmor %vm862, %vm863
    %v865 = vsel %vm864, %v857, %v861
    %v866 = vand.u32 2147483647, %v856
    %vm867 = vcmp.eq.f32.partialorder %v866, 8.507059e+37
    %v868 = vand.u32 %v856, 2147483648
    %v869 = vor.u32 1.1754944e-38, %v868
    %v870 = vsel %vm867, %v869, %v865
    %v871 = vmul.f32 1.0, %v870
    %v873 = vrot.slane %v396, 6
    %v875 = vmul.f32 %v851, %v873
    %877 = vrot.lane.b32.xlu0 %v852, 48
    %v878 = vpop.permute.xlu0 %877
    %v880 = vmul.f32 %v851, %v878
    %882 = vrot.lane.b32.xlu0 %v880, 40
    %v883 = vpop.permute.xlu0 %882
    %v885 = vadd.f32 %v875, %v883
    %v886 = vtanh.pop %v885
    %888 = vrot.lane.b32.xlu0 %v886, 80
    %v889 = vpop.permute.xlu0 %888
    %v891 = vmul.f32 %v851, %v889
    %v892 = vmul.f32 %v871, %v889
    %893 = vmatpush.msra.mxu0 0.0
    %894 = vmatpush.msra.mxu0 0.0
    %895 = vmatpush.msra.mxu0 0.0
    %896 = vmatpush.msra.mxu0 0.0
    %897 = vmatpush.msra.mxu0 0.0
    %898 = vmatpush.msra.mxu0 0.0
    %899 = vmatpush.msra.mxu0 0.0
    %900 = vmatpush.msra.mxu0 0.0
    %901 = vmatpush.msra.mxu0 0.0
    %902 = vmatpush.msra.mxu0 0.0
    %903 = vmatpush.msra.mxu0 0.0
    %904 = vmatpush.msra.mxu0 %v252
    %905 = vmatpush.msra.mxu0 %v250
    %906 = vmatpush.msra.mxu0 %v248
    %907 = vmatpush.msra.mxu0 %v246
    %908 = vmatpush.msra.mxu0 %v244
    %909 = vmatmul.f32.gmra.mxu0 %v628
    %v910 = vpop.f32.mrf.mxu0
    %v911 = vadd.f32 0.0, %v910
    %912 = vdwg.mxu0
    %913 = vmatpush.msra.mxu0 0.0
    %914 = vmatpush.msra.mxu0 0.0
    %915 = vmatpush.msra.mxu0 0.0
    %916 = vmatpush.msra.mxu0 0.0
    %917 = vmatpush.msra.mxu0 0.0
    %918 = vmatpush.msra.mxu0 0.0
    %919 = vmatpush.msra.mxu0 0.0
    %920 = vmatpush.msra.mxu0 0.0
    %921 = vmatpush.msra.mxu0 0.0
    %922 = vmatpush.msra.mxu0 0.0
    %923 = vmatpush.msra.mxu0 0.0
    %924 = vmatpush.msra.mxu0 %v253
    %925 = vmatpush.msra.mxu0 %v251
    %926 = vmatpush.msra.mxu0 %v249
    %927 = vmatpush.msra.mxu0 %v247
    %928 = vmatpush.msra.mxu0 %v245
    %929 = vmatmul.f32.gmra.mxu0 %v628
    %v930 = vpop.f32.mrf.mxu0
    %v931 = vadd.f32 0.0, %v930
    %932 = vdwg.mxu0
    %v935 = vrot.slane %v891, 2
    %v936 = vrot.slane %v892, 2
    %937 = vrot.lane.b32.xlu0 %v935, 8
    %v938 = vpop.permute.xlu0 %937
    %939 = vrot.lane.b32.xlu0 %v936, 8
    %v940 = vpop.permute.xlu0 %939
    %v941 = vsel %vm450, %v938, %v940
    %v942 = vsel %vm301, %v941, 0
    %944 = vmatpush.msra.mxu0 0.0
    %945 = vmatpush.msra.mxu0 0.0
    %946 = vmatpush.msra.mxu0 0.0
    %947 = vmatpush.msra.mxu0 0.0
    %948 = vmatpush.msra.mxu0 0.0
    %949 = vmatpush.msra.mxu0 0.0
    %950 = vmatpush.msra.mxu0 0.0
    %951 = vmatpush.msra.mxu0 0.0
    %952 = vmatpush.msra.mxu0 0.0
    %953 = vmatpush.msra.mxu0 0.0
    %954 = vmatpush.msra.mxu0 0.0
    %955 = vmatpush.msra.mxu0 %v242
    %956 = vmatpush.msra.mxu0 %v240
    %957 = vmatpush.msra.mxu0 %v238
    %958 = vmatpush.msra.mxu0 %v236
    %959 = vmatpush.msra.mxu0 %v234
    %960 = vmatmul.f32.gmra.mxu0 %v942
    %v961 = vpop.f32.mrf.mxu0
    %v962 = vadd.f32 %v911, %v961
    %963 = vdwg.mxu0
    %964 = vmatpush.msra.mxu0 0.0
    %965 = vmatpush.msra.mxu0 0.0
    %966 = vmatpush.msra.mxu0 0.0
    %967 = vmatpush.msra.mxu0 0.0
    %968 = vmatpush.msra.mxu0 0.0
    %969 = vmatpush.msra.mxu0 0.0
    %970 = vmatpush.msra.mxu0 0.0
    %971 = vmatpush.msra.mxu0 0.0
    %972 = vmatpush.msra.mxu0 0.0
    %973 = vmatpush.msra.mxu0 0.0
    %974 = vmatpush.msra.mxu0 0.0
    %975 = vmatpush.msra.mxu0 %v243
    %976 = vmatpush.msra.mxu0 %v241
    %977 = vmatpush.msra.mxu0 %v239
    %978 = vmatpush.msra.mxu0 %v237
    %979 = vmatpush.msra.mxu0 %v235
    %980 = vmatmul.f32.gmra.mxu0 %v942
    %v981 = vpop.f32.mrf.mxu0
    %v982 = vadd.f32 %v931, %v981
    %983 = vdwg.mxu0
    %v984 = vadd.f32 %v962, %v495
    %v985 = vadd.f32 %v982, %v496
    %v986 = vxor.u32 %v984, 2147483648
    %v987 = vmul.f32 %v986, 1.442695
    %v988 = vpow.pop %v987
    %v989 = vadd.f32 %v988, 1.0
    %v990 = vrcp.pop %v989
    %v991 = vmul.f32 %v989, %v990
    %v992 = vsub.f32 1.0, %v991
    %v993 = vmul.f32 %v990, %v992
    %v994 = vadd.f32 %v990, %v993
    %vm995 = vweird.f32 %v989
    %vm996 = vweird.f32 %v990
    %vm997 = vmor %vm995, %vm996
    %v998 = vsel %vm997, %v990, %v994
    %v999 = vand.u32 2147483647, %v989
    %vm1000 = vcmp.eq.f32.partialorder %v999, 8.507059e+37
    %v1001 = vand.u32 %v989, 2147483648
    %v1002 = vor.u32 1.1754944e-38, %v1001
    %v1003 = vsel %vm1000, %v1002, %v998
    %v1004 = vmul.f32 1.0, %v1003
    %v1005 = vtanh.pop %v984
    %v1006 = vxor.u32 %v985, 2147483648
    %v1007 = vmul.f32 %v1006, 1.442695
    %v1008 = vpow.pop %v1007
    %v1009 = vadd.f32 %v1008, 1.0
    %v1010 = vrcp.pop %v1009
    %v1011 = vmul.f32 %v1009, %v1010
    %v1012 = vsub.f32 1.0, %v1011
    %v1013 = vmul.f32 %v1010, %v1012
    %v1014 = vadd.f32 %v1010, %v1013
    %vm1015 = vweird.f32 %v1009
    %vm1016 = vweird.f32 %v1010
    %vm1017 = vmor %vm1015, %vm1016
    %v1018 = vsel %vm1017, %v1010, %v1014
    %v1019 = vand.u32 2147483647, %v1009
    %vm1020 = vcmp.eq.f32.partialorder %v1019, 8.507059e+37
    %v1021 = vand.u32 %v1009, 2147483648
    %v1022 = vor.u32 1.1754944e-38, %v1021
    %v1023 = vsel %vm1020, %v1022, %v1018
    %v1024 = vmul.f32 1.0, %v1023
    %v1025 = vmul.f32 %v1004, %v550
    %1027 = vrot.lane.b32.xlu0 %v1005, 48
    %v1028 = vpop.permute.xlu0 %1027
    %v1030 = vmul.f32 %v1004, %v1028
    %1032 = vrot.lane.b32.xlu0 %v1030, 40
    %v1033 = vpop.permute.xlu0 %1032
    %v1035 = vadd.f32 %v1025, %v1033
    %v1036 = vtanh.pop %v1035
    %1038 = vrot.lane.b32.xlu0 %v1036, 80
    %v1039 = vpop.permute.xlu0 %1038
    %v1041 = vmul.f32 %v1004, %v1039
    %v1042 = vmul.f32 %v1024, %v1039
    %1045 = vrot.lane.b32.xlu0 %v783, 16
    %v1046 = vpop.permute.xlu0 %1045
    %1047 = vrot.lane.b32.xlu0 %v784, 16
    %v1048 = vpop.permute.xlu0 %1047
    %v1049 = vsel %vm171, %v1046, %v1048
    %v1050 = vsel %vm558, %v1049, 0
    %1052 = vmatpush.msra.mxu0 0.0
    %1053 = vmatpush.msra.mxu0 0.0
    %1054 = vmatpush.msra.mxu0 0.0
    %1055 = vmatpush.msra.mxu0 0.0
    %1056 = vmatpush.msra.mxu0 0.0
    %1057 = vmatpush.msra.mxu0 0.0
    %1058 = vmatpush.msra.mxu0 %v297
    %1059 = vmatpush.msra.mxu0 %v294
    %1060 = vmatpush.msra.mxu0 %v291
    %1061 = vmatpush.msra.mxu0 %v288
    %1062 = vmatpush.msra.mxu0 %v285
    %1063 = vmatpush.msra.mxu0 %v282
    %1064 = vmatpush.msra.mxu0 %v279
    %1065 = vmatpush.msra.mxu0 %v276
    %1066 = vmatpush.msra.mxu0 %v273
    %1067 = vmatpush.msra.mxu0 %v270
    %1068 = vmatmul.f32.gmra.mxu0 %v1050
    %v1069 = vpop.f32.mrf.mxu0
    %v1070 = vadd.f32 0.0, %v1069
    %1071 = vdwg.mxu0
    %1072 = vmatpush.msra.mxu0 0.0
    %1073 = vmatpush.msra.mxu0 0.0
    %1074 = vmatpush.msra.mxu0 0.0
    %1075 = vmatpush.msra.mxu0 0.0
    %1076 = vmatpush.msra.mxu0 0.0
    %1077 = vmatpush.msra.mxu0 0.0
    %1078 = vmatpush.msra.mxu0 %v298
    %1079 = vmatpush.msra.mxu0 %v295
    %1080 = vmatpush.msra.mxu0 %v292
    %1081 = vmatpush.msra.mxu0 %v289
    %1082 = vmatpush.msra.mxu0 %v286
    %1083 = vmatpush.msra.mxu0 %v283
    %1084 = vmatpush.msra.mxu0 %v280
    %1085 = vmatpush.msra.mxu0 %v277
    %1086 = vmatpush.msra.mxu0 %v274
    %1087 = vmatpush.msra.mxu0 %v271
    %1088 = vmatmul.f32.gmra.mxu0 %v1050
    %v1089 = vpop.f32.mrf.mxu0
    %v1090 = vadd.f32 0.0, %v1089
    %1091 = vdwg.mxu0
    %1092 = vmatpush.msra.mxu0 0.0
    %1093 = vmatpush.msra.mxu0 0.0
    %1094 = vmatpush.msra.mxu0 0.0
    %1095 = vmatpush.msra.mxu0 0.0
    %1096 = vmatpush.msra.mxu0 0.0
    %1097 = vmatpush.msra.mxu0 0.0
    %1098 = vmatpush.msra.mxu0 %v299
    %1099 = vmatpush.msra.mxu0 %v296
    %1100 = vmatpush.msra.mxu0 %v293
    %1101 = vmatpush.msra.mxu0 %v290
    %1102 = vmatpush.msra.mxu0 %v287
    %1103 = vmatpush.msra.mxu0 %v284
    %1104 = vmatpush.msra.mxu0 %v281
    %1105 = vmatpush.msra.mxu0 %v278
    %1106 = vmatpush.msra.mxu0 %v275
    %1107 = vmatpush.msra.mxu0 %v272
    %1108 = vmatmul.f32.gmra.mxu0 %v1050
    %v1109 = vpop.f32.mrf.mxu0
    %v1110 = vadd.f32 0.0, %v1109
    %1111 = vdwg.mxu0
    %1114 = vrot.lane.b32.xlu0 %v1041, 8
    %v1115 = vpop.permute.xlu0 %1114
    %1116 = vrot.lane.b32.xlu0 %v1042, 8
    %v1117 = vpop.permute.xlu0 %1116
    %v1118 = vsel %vm450, %v1115, %v1117
    %v1119 = vsel %vm301, %v1118, 0
    %1121 = vmatpush.msra.mxu0 0.0
    %1122 = vmatpush.msra.mxu0 0.0
    %1123 = vmatpush.msra.mxu0 0.0
    %1124 = vmatpush.msra.mxu0 0.0
    %1125 = vmatpush.msra.mxu0 0.0
    %1126 = vmatpush.msra.mxu0 0.0
    %1127 = vmatpush.msra.mxu0 0.0
    %1128 = vmatpush.msra.mxu0 0.0
    %1129 = vmatpush.msra.mxu0 0.0
    %1130 = vmatpush.msra.mxu0 0.0
    %1131 = vmatpush.msra.mxu0 0.0
    %1132 = vmatpush.msra.mxu0 %v267
    %1133 = vmatpush.msra.mxu0 %v264
    %1134 = vmatpush.msra.mxu0 %v261
    %1135 = vmatpush.msra.mxu0 %v258
    %1136 = vmatpush.msra.mxu0 %v255
    %1137 = vmatmul.f32.gmra.mxu0 %v1119
    %v1138 = vpop.f32.mrf.mxu0
    %v1139 = vadd.f32 %v1070, %v1138
    %1140 = vdwg.mxu0
    %1141 = vmatpush.msra.mxu0 0.0
    %1142 = vmatpush.msra.mxu0 0.0
    %1143 = vmatpush.msra.mxu0 0.0
    %1144 = vmatpush.msra.mxu0 0.0
    %1145 = vmatpush.msra.mxu0 0.0
    %1146 = vmatpush.msra.mxu0 0.0
    %1147 = vmatpush.msra.mxu0 0.0
    %1148 = vmatpush.msra.mxu0 0.0
    %1149 = vmatpush.msra.mxu0 0.0
    %1150 = vmatpush.msra.mxu0 0.0
    %1151 = vmatpush.msra.mxu0 0.0
    %1152 = vmatpush.msra.mxu0 %v268
    %1153 = vmatpush.msra.mxu0 %v265
    %1154 = vmatpush.msra.mxu0 %v262
    %1155 = vmatpush.msra.mxu0 %v259
    %1156 = vmatpush.msra.mxu0 %v256
    %1157 = vmatmul.f32.gmra.mxu0 %v1119
    %v1158 = vpop.f32.mrf.mxu0
    %v1159 = vadd.f32 %v1090, %v1158
    %1160 = vdwg.mxu0
    %1161 = vmatpush.msra.mxu0 0.0
    %1162 = vmatpush.msra.mxu0 0.0
    %1163 = vmatpush.msra.mxu0 0.0
    %1164 = vmatpush.msra.mxu0 0.0
    %1165 = vmatpush.msra.mxu0 0.0
    %1166 = vmatpush.msra.mxu0 0.0
    %1167 = vmatpush.msra.mxu0 0.0
    %1168 = vmatpush.msra.mxu0 0.0
    %1169 = vmatpush.msra.mxu0 0.0
    %1170 = vmatpush.msra.mxu0 0.0
    %1171 = vmatpush.msra.mxu0 0.0
    %1172 = vmatpush.msra.mxu0 %v269
    %1173 = vmatpush.msra.mxu0 %v266
    %1174 = vmatpush.msra.mxu0 %v263
    %1175 = vmatpush.msra.mxu0 %v260
    %1176 = vmatpush.msra.mxu0 %v257
    %1177 = vmatmul.f32.gmra.mxu0 %v1119
    %v1178 = vpop.f32.mrf.mxu0
    %v1179 = vadd.f32 %v1110, %v1178
    %1180 = vdwg.mxu0
    %v1181 = vadd.f32 %v1139, %v691
    %v1182 = vadd.f32 %v1159, %v692
    %v1183 = vadd.f32 %v1179, %v693
    %v1184 = vxor.u32 %v1181, 2147483648
    %v1185 = vmul.f32 %v1184, 1.442695
    %v1186 = vpow.pop %v1185
    %v1187 = vadd.f32 %v1186, 1.0
    %v1188 = vrcp.pop %v1187
    %v1189 = vmul.f32 %v1187, %v1188
    %v1190 = vsub.f32 1.0, %v1189
    %v1191 = vmul.f32 %v1188, %v1190
    %v1192 = vadd.f32 %v1188, %v1191
    %vm1193 = vweird.f32 %v1187
    %vm1194 = vweird.f32 %v1188
    %vm1195 = vmor %vm1193, %vm1194
    %v1196 = vsel %vm1195, %v1188, %v1192
    %v1197 = vand.u32 2147483647, %v1187
    %vm1198 = vcmp.eq.f32.partialorder %v1197, 8.507059e+37
    %v1199 = vand.u32 %v1187, 2147483648
    %v1200 = vor.u32 1.1754944e-38, %v1199
    %v1201 = vsel %vm1198, %v1200, %v1196
    %v1202 = vmul.f32 1.0, %v1201
    %v1203 = vxor.u32 %v1182, 2147483648
    %v1204 = vmul.f32 %v1203, 1.442695
    %v1205 = vpow.pop %v1204
    %v1206 = vadd.f32 %v1205, 1.0
    %v1207 = vrcp.pop %v1206
    %v1208 = vmul.f32 %v1206, %v1207
    %v1209 = vsub.f32 1.0, %v1208
    %v1210 = vmul.f32 %v1207, %v1209
    %v1211 = vadd.f32 %v1207, %v1210
    %vm1212 = vweird.f32 %v1206
    %vm1213 = vweird.f32 %v1207
    %vm1214 = vmor %vm1212, %vm1213
    %v1215 = vsel %vm1214, %v1207, %v1211
    %v1216 = vand.u32 2147483647, %v1206
    %vm1217 = vcmp.eq.f32.partialorder %v1216, 8.507059e+37
    %v1218 = vand.u32 %v1206, 2147483648
    %v1219 = vor.u32 1.1754944e-38, %v1218
    %v1220 = vsel %vm1217, %v1219, %v1215
    %v1221 = vmul.f32 1.0, %v1220
    %v1222 = vtanh.pop %v1182
    %v1223 = vxor.u32 %v1183, 2147483648
    %v1224 = vmul.f32 %v1223, 1.442695
    %v1225 = vpow.pop %v1224
    %v1226 = vadd.f32 %v1225, 1.0
    %v1227 = vrcp.pop %v1226
    %v1228 = vmul.f32 %v1226, %v1227
    %v1229 = vsub.f32 1.0, %v1228
    %v1230 = vmul.f32 %v1227, %v1229
    %v1231 = vadd.f32 %v1227, %v1230
    %vm1232 = vweird.f32 %v1226
    %vm1233 = vweird.f32 %v1227
    %vm1234 = vmor %vm1232, %vm1233
    %v1235 = vsel %vm1234, %v1227, %v1231
    %v1236 = vand.u32 2147483647, %v1226
    %vm1237 = vcmp.eq.f32.partialorder %v1236, 8.507059e+37
    %v1238 = vand.u32 %v1226, 2147483648
    %v1239 = vor.u32 1.1754944e-38, %v1238
    %v1240 = vsel %vm1237, %v1239, %v1235
    %v1241 = vmul.f32 1.0, %v1240
    %v1242 = vmul.f32 %v1202, %v769
    %v1243 = vmul.f32 %v1221, %v770
    %1245 = vrot.lane.b32.xlu0 %v1222, 96
    %v1246 = vpop.permute.xlu0 %1245
    %v1248 = vmul.f32 %v1202, %v1246
    %1250 = vrot.lane.b32.xlu0 %v1248, 80
    %v1251 = vpop.permute.xlu0 %1250
    %v1253 = vadd.f32 %v1242, %v1251
    %v1254 = vadd.f32 %v1243, %v1251
    %v1255 = vtanh.pop %v1253
    %v1256 = vtanh.pop %v1254
    %1259 = vrot.lane.b32.xlu0 %v1255, 32
    %v1260 = vpop.permute.xlu0 %1259
    %1261 = vrot.lane.b32.xlu0 %v1256, 32
    %v1262 = vpop.permute.xlu0 %1261
    %v1263 = vsel %vm779, %v1260, %v1262
    %v1266 = vmul.f32 %v1221, %v1260
    %v1267 = vmul.f32 %v1241, %v1263
    %1268 = vmatpush.msra.mxu0 0.0
    %1269 = vmatpush.msra.mxu0 0.0
    %1270 = vmatpush.msra.mxu0 0.0
    %1271 = vmatpush.msra.mxu0 0.0
    %1272 = vmatpush.msra.mxu0 0.0
    %1273 = vmatpush.msra.mxu0 0.0
    %1274 = vmatpush.msra.mxu0 0.0
    %1275 = vmatpush.msra.mxu0 0.0
    %1276 = vmatpush.msra.mxu0 0.0
    %1277 = vmatpush.msra.mxu0 0.0
    %1278 = vmatpush.msra.mxu0 0.0
    %1279 = vmatpush.msra.mxu0 %v232
    %1280 = vmatpush.msra.mxu0 %v230
    %1281 = vmatpush.msra.mxu0 %v228
    %1282 = vmatpush.msra.mxu0 %v226
    %1283 = vmatpush.msra.mxu0 %v224
    %1284 = vmatmul.f32.gmra.mxu0 %v942
    %v1285 = vpop.f32.mrf.mxu0
    %v1286 = vadd.f32 0.0, %v1285
    %1287 = vdwg.mxu0
    %1288 = vmatpush.msra.mxu0 0.0
    %1289 = vmatpush.msra.mxu0 0.0
    %1290 = vmatpush.msra.mxu0 0.0
    %1291 = vmatpush.msra.mxu0 0.0
    %1292 = vmatpush.msra.mxu0 0.0
    %1293 = vmatpush.msra.mxu0 0.0
    %1294 = vmatpush.msra.mxu0 0.0
    %1295 = vmatpush.msra.mxu0 0.0
    %1296 = vmatpush.msra.mxu0 0.0
    %1297 = vmatpush.msra.mxu0 0.0
    %1298 = vmatpush.msra.mxu0 0.0
    %1299 = vmatpush.msra.mxu0 %v233
    %1300 = vmatpush.msra.mxu0 %v231
    %1301 = vmatpush.msra.mxu0 %v229
    %1302 = vmatpush.msra.mxu0 %v227
    %1303 = vmatpush.msra.mxu0 %v225
    %1304 = vmatmul.f32.gmra.mxu0 %v942
    %v1305 = vpop.f32.mrf.mxu0
    %v1306 = vadd.f32 0.0, %v1305
    %1307 = vdwg.mxu0
    %v1310 = vrot.slane %v1286, 4
    %v1311 = vrot.slane %v1306, 4
    %v1314 = vadd.f32 %v196, %v1310
    %v1315 = vadd.f32 %v219, %v1311
    %v1316 = vxor.u32 %v1314, 2147483648
    %v1317 = vmul.f32 %v1316, 1.442695
    %v1318 = vpow.pop %v1317
    %v1319 = vadd.f32 %v1318, 1.0
    %v1320 = vrcp.pop %v1319
    %v1321 = vmul.f32 %v1319, %v1320
    %v1322 = vsub.f32 1.0, %v1321
    %v1323 = vmul.f32 %v1320, %v1322
    %v1324 = vadd.f32 %v1320, %v1323
    %vm1325 = vweird.f32 %v1319
    %vm1326 = vweird.f32 %v1320
    %vm1327 = vmor %vm1325, %vm1326
    %v1328 = vsel %vm1327, %v1320, %v1324
    %v1329 = vand.u32 2147483647, %v1319
    %vm1330 = vcmp.eq.f32.partialorder %v1329, 8.507059e+37
    %v1331 = vand.u32 %v1319, 2147483648
    %v1332 = vor.u32 1.1754944e-38, %v1331
    %v1333 = vsel %vm1330, %v1332, %v1328
    %v1334 = vmul.f32 1.0, %v1333
    %v1335 = vtanh.pop %v1314
    %v1336 = vxor.u32 %v1315, 2147483648
    %v1337 = vmul.f32 %v1336, 1.442695
    %v1338 = vpow.pop %v1337
    %v1339 = vadd.f32 %v1338, 1.0
    %v1340 = vrcp.pop %v1339
    %v1341 = vmul.f32 %v1339, %v1340
    %v1342 = vsub.f32 1.0, %v1341
    %v1343 = vmul.f32 %v1340, %v1342
    %v1344 = vadd.f32 %v1340, %v1343
    %vm1345 = vweird.f32 %v1339
    %vm1346 = vweird.f32 %v1340
    %vm1347 = vmor %vm1345, %vm1346
    %v1348 = vsel %vm1347, %v1340, %v1344
    %v1349 = vand.u32 2147483647, %v1339
    %vm1350 = vcmp.eq.f32.partialorder %v1349, 8.507059e+37
    %v1351 = vand.u32 %v1339, 2147483648
    %v1352 = vor.u32 1.1754944e-38, %v1351
    %v1353 = vsel %vm1350, %v1352, %v1348
    %v1354 = vmul.f32 1.0, %v1353
    %v1356 = vrot.slane %v885, 6
    %v1358 = vmul.f32 %v1334, %v1356
    %1360 = vrot.lane.b32.xlu0 %v1335, 48
    %v1361 = vpop.permute.xlu0 %1360
    %v1363 = vmul.f32 %v1334, %v1361
    %1365 = vrot.lane.b32.xlu0 %v1363, 40
    %v1366 = vpop.permute.xlu0 %1365
    %v1368 = vadd.f32 %v1358, %v1366
    %v1369 = vtanh.pop %v1368
    %1371 = vrot.lane.b32.xlu0 %v1369, 80
    %v1372 = vpop.permute.xlu0 %1371
    %v1374 = vmul.f32 %v1334, %v1372
    %v1375 = vmul.f32 %v1354, %v1372
    %1376 = vmatpush.msra.mxu0 0.0
    %1377 = vmatpush.msra.mxu0 0.0
    %1378 = vmatpush.msra.mxu0 0.0
    %1379 = vmatpush.msra.mxu0 0.0
    %1380 = vmatpush.msra.mxu0 0.0
    %1381 = vmatpush.msra.mxu0 0.0
    %1382 = vmatpush.msra.mxu0 0.0
    %1383 = vmatpush.msra.mxu0 0.0
    %1384 = vmatpush.msra.mxu0 0.0
    %1385 = vmatpush.msra.mxu0 0.0
    %1386 = vmatpush.msra.mxu0 0.0
    %1387 = vmatpush.msra.mxu0 %v252
    %1388 = vmatpush.msra.mxu0 %v250
    %1389 = vmatpush.msra.mxu0 %v248
    %1390 = vmatpush.msra.mxu0 %v246
    %1391 = vmatpush.msra.mxu0 %v244
    %1392 = vmatmul.f32.gmra.mxu0 %v1119
    %v1393 = vpop.f32.mrf.mxu0
    %v1394 = vadd.f32 0.0, %v1393
    %1395 = vdwg.mxu0
    %1396 = vmatpush.msra.mxu0 0.0
    %1397 = vmatpush.msra.mxu0 0.0
    %1398 = vmatpush.msra.mxu0 0.0
    %1399 = vmatpush.msra.mxu0 0.0
    %1400 = vmatpush.msra.mxu0 0.0
    %1401 = vmatpush.msra.mxu0 0.0
    %1402 = vmatpush.msra.mxu0 0.0
    %1403 = vmatpush.msra.mxu0 0.0
    %1404 = vmatpush.msra.mxu0 0.0
    %1405 = vmatpush.msra.mxu0 0.0
    %1406 = vmatpush.msra.mxu0 0.0
    %1407 = vmatpush.msra.mxu0 %v253
    %1408 = vmatpush.msra.mxu0 %v251
    %1409 = vmatpush.msra.mxu0 %v249
    %1410 = vmatpush.msra.mxu0 %v247
    %1411 = vmatpush.msra.mxu0 %v245
    %1412 = vmatmul.f32.gmra.mxu0 %v1119
    %v1413 = vpop.f32.mrf.mxu0
    %v1414 = vadd.f32 0.0, %v1413
    %1415 = vdwg.mxu0
    %v1418 = vrot.slane %v1374, 4
    %v1419 = vrot.slane %v1375, 4
    %1420 = vrot.lane.b32.xlu0 %v1418, 8
    %v1421 = vpop.permute.xlu0 %1420
    %1422 = vrot.lane.b32.xlu0 %v1419, 8
    %v1423 = vpop.permute.xlu0 %1422
    %v1424 = vsel %vm450, %v1421, %v1423
    %v1425 = vsel %vm301, %v1424, 0
    %1427 = vmatpush.msra.mxu0 0.0
    %1428 = vmatpush.msra.mxu0 0.0
    %1429 = vmatpush.msra.mxu0 0.0
    %1430 = vmatpush.msra.mxu0 0.0
    %1431 = vmatpush.msra.mxu0 0.0
    %1432 = vmatpush.msra.mxu0 0.0
    %1433 = vmatpush.msra.mxu0 0.0
    %1434 = vmatpush.msra.mxu0 0.0
    %1435 = vmatpush.msra.mxu0 0.0
    %1436 = vmatpush.msra.mxu0 0.0
    %1437 = vmatpush.msra.mxu0 0.0
    %1438 = vmatpush.msra.mxu0 %v242
    %1439 = vmatpush.msra.mxu0 %v240
    %1440 = vmatpush.msra.mxu0 %v238
    %1441 = vmatpush.msra.mxu0 %v236
    %1442 = vmatpush.msra.mxu0 %v234
    %1443 = vmatmul.f32.gmra.mxu0 %v1425
    %v1444 = vpop.f32.mrf.mxu0
    %v1445 = vadd.f32 %v1394, %v1444
    %1446 = vdwg.mxu0
    %1447 = vmatpush.msra.mxu0 0.0
    %1448 = vmatpush.msra.mxu0 0.0
    %1449 = vmatpush.msra.mxu0 0.0
    %1450 = vmatpush.msra.mxu0 0.0
    %1451 = vmatpush.msra.mxu0 0.0
    %1452 = vmatpush.msra.mxu0 0.0
    %1453 = vmatpush.msra.mxu0 0.0
    %1454 = vmatpush.msra.mxu0 0.0
    %1455 = vmatpush.msra.mxu0 0.0
    %1456 = vmatpush.msra.mxu0 0.0
    %1457 = vmatpush.msra.mxu0 0.0
    %1458 = vmatpush.msra.mxu0 %v243
    %1459 = vmatpush.msra.mxu0 %v241
    %1460 = vmatpush.msra.mxu0 %v239
    %1461 = vmatpush.msra.mxu0 %v237
    %1462 = vmatpush.msra.mxu0 %v235
    %1463 = vmatmul.f32.gmra.mxu0 %v1425
    %v1464 = vpop.f32.mrf.mxu0
    %v1465 = vadd.f32 %v1414, %v1464
    %1466 = vdwg.mxu0
    %v1467 = vadd.f32 %v1445, %v495
    %v1468 = vadd.f32 %v1465, %v496
    %v1469 = vxor.u32 %v1467, 2147483648
    %v1470 = vmul.f32 %v1469, 1.442695
    %v1471 = vpow.pop %v1470
    %v1472 = vadd.f32 %v1471, 1.0
    %v1473 = vrcp.pop %v1472
    %v1474 = vmul.f32 %v1472, %v1473
    %v1475 = vsub.f32 1.0, %v1474
    %v1476 = vmul.f32 %v1473, %v1475
    %v1477 = vadd.f32 %v1473, %v1476
    %vm1478 = vweird.f32 %v1472
    %vm1479 = vweird.f32 %v1473
    %vm1480 = vmor %vm1478, %vm1479
    %v1481 = vsel %vm1480, %v1473, %v1477
    %v1482 = vand.u32 2147483647, %v1472
    %vm1483 = vcmp.eq.f32.partialorder %v1482, 8.507059e+37
    %v1484 = vand.u32 %v1472, 2147483648
    %v1485 = vor.u32 1.1754944e-38, %v1484
    %v1486 = vsel %vm1483, %v1485, %v1481
    %v1487 = vmul.f32 1.0, %v1486
    %v1488 = vtanh.pop %v1467
    %v1489 = vxor.u32 %v1468, 2147483648
    %v1490 = vmul.f32 %v1489, 1.442695
    %v1491 = vpow.pop %v1490
    %v1492 = vadd.f32 %v1491, 1.0
    %v1493 = vrcp.pop %v1492
    %v1494 = vmul.f32 %v1492, %v1493
    %v1495 = vsub.f32 1.0, %v1494
    %v1496 = vmul.f32 %v1493, %v1495
    %v1497 = vadd.f32 %v1493, %v1496
    %vm1498 = vweird.f32 %v1492
    %vm1499 = vweird.f32 %v1493
    %vm1500 = vmor %vm1498, %vm1499
    %v1501 = vsel %vm1500, %v1493, %v1497
    %v1502 = vand.u32 2147483647, %v1492
    %vm1503 = vcmp.eq.f32.partialorder %v1502, 8.507059e+37
    %v1504 = vand.u32 %v1492, 2147483648
    %v1505 = vor.u32 1.1754944e-38, %v1504
    %v1506 = vsel %vm1503, %v1505, %v1501
    %v1507 = vmul.f32 1.0, %v1506
    %v1508 = vmul.f32 %v1487, %v1035
    %1510 = vrot.lane.b32.xlu0 %v1488, 48
    %v1511 = vpop.permute.xlu0 %1510
    %v1513 = vmul.f32 %v1487, %v1511
    %1515 = vrot.lane.b32.xlu0 %v1513, 40
    %v1516 = vpop.permute.xlu0 %1515
    %v1518 = vadd.f32 %v1508, %v1516
    %v1519 = vtanh.pop %v1518
    %1521 = vrot.lane.b32.xlu0 %v1519, 80
    %v1522 = vpop.permute.xlu0 %1521
    %v1524 = vmul.f32 %v1487, %v1522
    %v1525 = vmul.f32 %v1507, %v1522
    %1528 = vrot.lane.b32.xlu0 %v1266, 16
    %v1529 = vpop.permute.xlu0 %1528
    %1530 = vrot.lane.b32.xlu0 %v1267, 16
    %v1531 = vpop.permute.xlu0 %1530
    %v1532 = vsel %vm171, %v1529, %v1531
    %v1533 = vsel %vm558, %v1532, 0
    %1535 = vmatpush.msra.mxu0 0.0
    %1536 = vmatpush.msra.mxu0 0.0
    %1537 = vmatpush.msra.mxu0 0.0
    %1538 = vmatpush.msra.mxu0 0.0
    %1539 = vmatpush.msra.mxu0 0.0
    %1540 = vmatpush.msra.mxu0 0.0
    %1541 = vmatpush.msra.mxu0 %v297
    %1542 = vmatpush.msra.mxu0 %v294
    %1543 = vmatpush.msra.mxu0 %v291
    %1544 = vmatpush.msra.mxu0 %v288
    %1545 = vmatpush.msra.mxu0 %v285
    %1546 = vmatpush.msra.mxu0 %v282
    %1547 = vmatpush.msra.mxu0 %v279
    %1548 = vmatpush.msra.mxu0 %v276
    %1549 = vmatpush.msra.mxu0 %v273
    %1550 = vmatpush.msra.mxu0 %v270
    %1551 = vmatmul.f32.gmra.mxu0 %v1533
    %v1552 = vpop.f32.mrf.mxu0
    %v1553 = vadd.f32 0.0, %v1552
    %1554 = vdwg.mxu0
    %1555 = vmatpush.msra.mxu0 0.0
    %1556 = vmatpush.msra.mxu0 0.0
    %1557 = vmatpush.msra.mxu0 0.0
    %1558 = vmatpush.msra.mxu0 0.0
    %1559 = vmatpush.msra.mxu0 0.0
    %1560 = vmatpush.msra.mxu0 0.0
    %1561 = vmatpush.msra.mxu0 %v298
    %1562 = vmatpush.msra.mxu0 %v295
    %1563 = vmatpush.msra.mxu0 %v292
    %1564 = vmatpush.msra.mxu0 %v289
    %1565 = vmatpush.msra.mxu0 %v286
    %1566 = vmatpush.msra.mxu0 %v283
    %1567 = vmatpush.msra.mxu0 %v280
    %1568 = vmatpush.msra.mxu0 %v277
    %1569 = vmatpush.msra.mxu0 %v274
    %1570 = vmatpush.msra.mxu0 %v271
    %1571 = vmatmul.f32.gmra.mxu0 %v1533
    %v1572 = vpop.f32.mrf.mxu0
    %v1573 = vadd.f32 0.0, %v1572
    %1574 = vdwg.mxu0
    %1575 = vmatpush.msra.mxu0 0.0
    %1576 = vmatpush.msra.mxu0 0.0
    %1577 = vmatpush.msra.mxu0 0.0
    %1578 = vmatpush.msra.mxu0 0.0
    %1579 = vmatpush.msra.mxu0 0.0
    %1580 = vmatpush.msra.mxu0 0.0
    %1581 = vmatpush.msra.mxu0 %v299
    %1582 = vmatpush.msra.mxu0 %v296
    %1583 = vmatpush.msra.mxu0 %v293
    %1584 = vmatpush.msra.mxu0 %v290
    %1585 = vmatpush.msra.mxu0 %v287
    %1586 = vmatpush.msra.mxu0 %v284
    %1587 = vmatpush.msra.mxu0 %v281
    %1588 = vmatpush.msra.mxu0 %v278
    %1589 = vmatpush.msra.mxu0 %v275
    %1590 = vmatpush.msra.mxu0 %v272
    %1591 = vmatmul.f32.gmra.mxu0 %v1533
    %v1592 = vpop.f32.mrf.mxu0
    %v1593 = vadd.f32 0.0, %v1592
    %1594 = vdwg.mxu0
    %1597 = vrot.lane.b32.xlu0 %v1524, 8
    %v1598 = vpop.permute.xlu0 %1597
    %1599 = vrot.lane.b32.xlu0 %v1525, 8
    %v1600 = vpop.permute.xlu0 %1599
    %v1601 = vsel %vm450, %v1598, %v1600
    %v1602 = vsel %vm301, %v1601, 0
    %1604 = vmatpush.msra.mxu0 0.0
    %1605 = vmatpush.msra.mxu0 0.0
    %1606 = vmatpush.msra.mxu0 0.0
    %1607 = vmatpush.msra.mxu0 0.0
    %1608 = vmatpush.msra.mxu0 0.0
    %1609 = vmatpush.msra.mxu0 0.0
    %1610 = vmatpush.msra.mxu0 0.0
    %1611 = vmatpush.msra.mxu0 0.0
    %1612 = vmatpush.msra.mxu0 0.0
    %1613 = vmatpush.msra.mxu0 0.0
    %1614 = vmatpush.msra.mxu0 0.0
    %1615 = vmatpush.msra.mxu0 %v267
    %1616 = vmatpush.msra.mxu0 %v264
    %1617 = vmatpush.msra.mxu0 %v261
    %1618 = vmatpush.msra.mxu0 %v258
    %1619 = vmatpush.msra.mxu0 %v255
    %1620 = vmatmul.f32.gmra.mxu0 %v1602
    %v1621 = vpop.f32.mrf.mxu0
    %v1622 = vadd.f32 %v1553, %v1621
    %1623 = vdwg.mxu0
    %1624 = vmatpush.msra.mxu0 0.0
    %1625 = vmatpush.msra.mxu0 0.0
    %1626 = vmatpush.msra.mxu0 0.0
    %1627 = vmatpush.msra.mxu0 0.0
    %1628 = vmatpush.msra.mxu0 0.0
    %1629 = vmatpush.msra.mxu0 0.0
    %1630 = vmatpush.msra.mxu0 0.0
    %1631 = vmatpush.msra.mxu0 0.0
    %1632 = vmatpush.msra.mxu0 0.0
    %1633 = vmatpush.msra.mxu0 0.0
    %1634 = vmatpush.msra.mxu0 0.0
    %1635 = vmatpush.msra.mxu0 %v268
    %1636 = vmatpush.msra.mxu0 %v265
    %1637 = vmatpush.msra.mxu0 %v262
    %1638 = vmatpush.msra.mxu0 %v259
    %1639 = vmatpush.msra.mxu0 %v256
    %1640 = vmatmul.f32.gmra.mxu0 %v1602
    %v1641 = vpop.f32.mrf.mxu0
    %v1642 = vadd.f32 %v1573, %v1641
    %1643 = vdwg.mxu0
    %1644 = vmatpush.msra.mxu0 0.0
    %1645 = vmatpush.msra.mxu0 0.0
    %1646 = vmatpush.msra.mxu0 0.0
    %1647 = vmatpush.msra.mxu0 0.0
    %1648 = vmatpush.msra.mxu0 0.0
    %1649 = vmatpush.msra.mxu0 0.0
    %1650 = vmatpush.msra.mxu0 0.0
    %1651 = vmatpush.msra.mxu0 0.0
    %1652 = vmatpush.msra.mxu0 0.0
    %1653 = vmatpush.msra.mxu0 0.0
    %1654 = vmatpush.msra.mxu0 0.0
    %1655 = vmatpush.msra.mxu0 %v269
    %1656 = vmatpush.msra.mxu0 %v266
    %1657 = vmatpush.msra.mxu0 %v263
    %1658 = vmatpush.msra.mxu0 %v260
    %1659 = vmatpush.msra.mxu0 %v257
    %1660 = vmatmul.f32.gmra.mxu0 %v1602
    %v1661 = vpop.f32.mrf.mxu0
    %v1662 = vadd.f32 %v1593, %v1661
    %1663 = vdwg.mxu0
    %v1664 = vadd.f32 %v1622, %v691
    %v1665 = vadd.f32 %v1642, %v692
    %v1666 = vadd.f32 %v1662, %v693
    %v1667 = vxor.u32 %v1664, 2147483648
    %v1668 = vmul.f32 %v1667, 1.442695
    %v1669 = vpow.pop %v1668
    %v1670 = vadd.f32 %v1669, 1.0
    %v1671 = vrcp.pop %v1670
    %v1672 = vmul.f32 %v1670, %v1671
    %v1673 = vsub.f32 1.0, %v1672
    %v1674 = vmul.f32 %v1671, %v1673
    %v1675 = vadd.f32 %v1671, %v1674
    %vm1676 = vweird.f32 %v1670
    %vm1677 = vweird.f32 %v1671
    %vm1678 = vmor %vm1676, %vm1677
    %v1679 = vsel %vm1678, %v1671, %v1675
    %v1680 = vand.u32 2147483647, %v1670
    %vm1681 = vcmp.eq.f32.partialorder %v1680, 8.507059e+37
    %v1682 = vand.u32 %v1670, 2147483648
    %v1683 = vor.u32 1.1754944e-38, %v1682
    %v1684 = vsel %vm1681, %v1683, %v1679
    %v1685 = vmul.f32 1.0, %v1684
    %v1686 = vxor.u32 %v1665, 2147483648
    %v1687 = vmul.f32 %v1686, 1.442695
    %v1688 = vpow.pop %v1687
    %v1689 = vadd.f32 %v1688, 1.0
    %v1690 = vrcp.pop %v1689
    %v1691 = vmul.f32 %v1689, %v1690
    %v1692 = vsub.f32 1.0, %v1691
    %v1693 = vmul.f32 %v1690, %v1692
    %v1694 = vadd.f32 %v1690, %v1693
    %vm1695 = vweird.f32 %v1689
    %vm1696 = vweird.f32 %v1690
    %vm1697 = vmor %vm1695, %vm1696
    %v1698 = vsel %vm1697, %v1690, %v1694
    %v1699 = vand.u32 2147483647, %v1689
    %vm1700 = vcmp.eq.f32.partialorder %v1699, 8.507059e+37
    %v1701 = vand.u32 %v1689, 2147483648
    %v1702 = vor.u32 1.1754944e-38, %v1701
    %v1703 = vsel %vm1700, %v1702, %v1698
    %v1704 = vmul.f32 1.0, %v1703
    %v1705 = vtanh.pop %v1665
    %v1706 = vxor.u32 %v1666, 2147483648
    %v1707 = vmul.f32 %v1706, 1.442695
    %v1708 = vpow.pop %v1707
    %v1709 = vadd.f32 %v1708, 1.0
    %v1710 = vrcp.pop %v1709
    %v1711 = vmul.f32 %v1709, %v1710
    %v1712 = vsub.f32 1.0, %v1711
    %v1713 = vmul.f32 %v1710, %v1712
    %v1714 = vadd.f32 %v1710, %v1713
    %vm1715 = vweird.f32 %v1709
    %vm1716 = vweird.f32 %v1710
    %vm1717 = vmor %vm1715, %vm1716
    %v1718 = vsel %vm1717, %v1710, %v1714
    %v1719 = vand.u32 2147483647, %v1709
    %vm1720 = vcmp.eq.f32.partialorder %v1719, 8.507059e+37
    %v1721 = vand.u32 %v1709, 2147483648
    %v1722 = vor.u32 1.1754944e-38, %v1721
    %v1723 = vsel %vm1720, %v1722, %v1718
    %v1724 = vmul.f32 1.0, %v1723
    %v1725 = vmul.f32 %v1685, %v1253
    %v1726 = vmul.f32 %v1704, %v1254
    %1728 = vrot.lane.b32.xlu0 %v1705, 96
    %v1729 = vpop.permute.xlu0 %1728
    %v1731 = vmul.f32 %v1685, %v1729
    %1733 = vrot.lane.b32.xlu0 %v1731, 80
    %v1734 = vpop.permute.xlu0 %1733
    %v1736 = vadd.f32 %v1725, %v1734
    %v1737 = vadd.f32 %v1726, %v1734
    %v1738 = vtanh.pop %v1736
    %v1739 = vtanh.pop %v1737
    %1742 = vrot.lane.b32.xlu0 %v1738, 32
    %v1743 = vpop.permute.xlu0 %1742
    %1744 = vrot.lane.b32.xlu0 %v1739, 32
    %v1745 = vpop.permute.xlu0 %1744
    %v1746 = vsel %vm779, %v1743, %v1745
    %v1749 = vmul.f32 %v1704, %v1743
    %v1750 = vmul.f32 %v1724, %v1746
    %1751 = vmatpush.msra.mxu0 0.0
    %1752 = vmatpush.msra.mxu0 0.0
    %1753 = vmatpush.msra.mxu0 0.0
    %1754 = vmatpush.msra.mxu0 0.0
    %1755 = vmatpush.msra.mxu0 0.0
    %1756 = vmatpush.msra.mxu0 0.0
    %1757 = vmatpush.msra.mxu0 0.0
    %1758 = vmatpush.msra.mxu0 0.0
    %1759 = vmatpush.msra.mxu0 0.0
    %1760 = vmatpush.msra.mxu0 0.0
    %1761 = vmatpush.msra.mxu0 0.0
    %1762 = vmatpush.msra.mxu0 %v232
    %1763 = vmatpush.msra.mxu0 %v230
    %1764 = vmatpush.msra.mxu0 %v228
    %1765 = vmatpush.msra.mxu0 %v226
    %1766 = vmatpush.msra.mxu0 %v224
    %1767 = vmatmul.f32.gmra.mxu0 %v1425
    %v1768 = vpop.f32.mrf.mxu0
    %v1769 = vadd.f32 0.0, %v1768
    %1770 = vdwg.mxu0
    %1771 = vmatpush.msra.mxu0 0.0
    %1772 = vmatpush.msra.mxu0 0.0
    %1773 = vmatpush.msra.mxu0 0.0
    %1774 = vmatpush.msra.mxu0 0.0
    %1775 = vmatpush.msra.mxu0 0.0
    %1776 = vmatpush.msra.mxu0 0.0
    %1777 = vmatpush.msra.mxu0 0.0
    %1778 = vmatpush.msra.mxu0 0.0
    %1779 = vmatpush.msra.mxu0 0.0
    %1780 = vmatpush.msra.mxu0 0.0
    %1781 = vmatpush.msra.mxu0 0.0
    %1782 = vmatpush.msra.mxu0 %v233
    %1783 = vmatpush.msra.mxu0 %v231
    %1784 = vmatpush.msra.mxu0 %v229
    %1785 = vmatpush.msra.mxu0 %v227
    %1786 = vmatpush.msra.mxu0 %v225
    %1787 = vmatmul.f32.gmra.mxu0 %v1425
    %v1788 = vpop.f32.mrf.mxu0
    %v1789 = vadd.f32 0.0, %v1788
    %1790 = vdwg.mxu0
    %v1793 = vrot.slane %v1769, 2
    %v1794 = vrot.slane %v1789, 2
    %v1797 = vadd.f32 %v196, %v1793
    %v1798 = vadd.f32 %v219, %v1794
    %v1799 = vxor.u32 %v1797, 2147483648
    %v1800 = vmul.f32 %v1799, 1.442695
    %v1801 = vpow.pop %v1800
    %v1802 = vadd.f32 %v1801, 1.0
    %v1803 = vrcp.pop %v1802
    %v1804 = vmul.f32 %v1802, %v1803
    %v1805 = vsub.f32 1.0, %v1804
    %v1806 = vmul.f32 %v1803, %v1805
    %v1807 = vadd.f32 %v1803, %v1806
    %vm1808 = vweird.f32 %v1802
    %vm1809 = vweird.f32 %v1803
    %vm1810 = vmor %vm1808, %vm1809
    %v1811 = vsel %vm1810, %v1803, %v1807
    %v1812 = vand.u32 2147483647, %v1802
    %vm1813 = vcmp.eq.f32.partialorder %v1812, 8.507059e+37
    %v1814 = vand.u32 %v1802, 2147483648
    %v1815 = vor.u32 1.1754944e-38, %v1814
    %v1816 = vsel %vm1813, %v1815, %v1811
    %v1817 = vmul.f32 1.0, %v1816
    %v1818 = vtanh.pop %v1797
    %v1819 = vxor.u32 %v1798, 2147483648
    %v1820 = vmul.f32 %v1819, 1.442695
    %v1821 = vpow.pop %v1820
    %v1822 = vadd.f32 %v1821, 1.0
    %v1823 = vrcp.pop %v1822
    %v1824 = vmul.f32 %v1822, %v1823
    %v1825 = vsub.f32 1.0, %v1824
    %v1826 = vmul.f32 %v1823, %v1825
    %v1827 = vadd.f32 %v1823, %v1826
    %vm1828 = vweird.f32 %v1822
    %vm1829 = vweird.f32 %v1823
    %vm1830 = vmor %vm1828, %vm1829
    %v1831 = vsel %vm1830, %v1823, %v1827
    %v1832 = vand.u32 2147483647, %v1822
    %vm1833 = vcmp.eq.f32.partialorder %v1832, 8.507059e+37
    %v1834 = vand.u32 %v1822, 2147483648
    %v1835 = vor.u32 1.1754944e-38, %v1834
    %v1836 = vsel %vm1833, %v1835, %v1831
    %v1837 = vmul.f32 1.0, %v1836
    %v1839 = vrot.slane %v1368, 6
    %v1841 = vmul.f32 %v1817, %v1839
    %1843 = vrot.lane.b32.xlu0 %v1818, 48
    %v1844 = vpop.permute.xlu0 %1843
    %v1846 = vmul.f32 %v1817, %v1844
    %1848 = vrot.lane.b32.xlu0 %v1846, 40
    %v1849 = vpop.permute.xlu0 %1848
    %v1851 = vadd.f32 %v1841, %v1849
    %v1852 = vtanh.pop %v1851
    %1854 = vrot.lane.b32.xlu0 %v1852, 80
    %v1855 = vpop.permute.xlu0 %1854
    %v1857 = vmul.f32 %v1817, %v1855
    %v1858 = vmul.f32 %v1837, %v1855
    %1859 = vmatpush.msra.mxu0 0.0
    %1860 = vmatpush.msra.mxu0 0.0
    %1861 = vmatpush.msra.mxu0 0.0
    %1862 = vmatpush.msra.mxu0 0.0
    %1863 = vmatpush.msra.mxu0 0.0
    %1864 = vmatpush.msra.mxu0 0.0
    %1865 = vmatpush.msra.mxu0 0.0
    %1866 = vmatpush.msra.mxu0 0.0
    %1867 = vmatpush.msra.mxu0 0.0
    %1868 = vmatpush.msra.mxu0 0.0
    %1869 = vmatpush.msra.mxu0 0.0
    %1870 = vmatpush.msra.mxu0 %v252
    %1871 = vmatpush.msra.mxu0 %v250
    %1872 = vmatpush.msra.mxu0 %v248
    %1873 = vmatpush.msra.mxu0 %v246
    %1874 = vmatpush.msra.mxu0 %v244
    %1875 = vmatmul.f32.gmra.mxu0 %v1602
    %v1876 = vpop.f32.mrf.mxu0
    %v1877 = vadd.f32 0.0, %v1876
    %1878 = vdwg.mxu0
    %1879 = vmatpush.msra.mxu0 0.0
    %1880 = vmatpush.msra.mxu0 0.0
    %1881 = vmatpush.msra.mxu0 0.0
    %1882 = vmatpush.msra.mxu0 0.0
    %1883 = vmatpush.msra.mxu0 0.0
    %1884 = vmatpush.msra.mxu0 0.0
    %1885 = vmatpush.msra.mxu0 0.0
    %1886 = vmatpush.msra.mxu0 0.0
    %1887 = vmatpush.msra.mxu0 0.0
    %1888 = vmatpush.msra.mxu0 0.0
    %1889 = vmatpush.msra.mxu0 0.0
    %1890 = vmatpush.msra.mxu0 %v253
    %1891 = vmatpush.msra.mxu0 %v251
    %1892 = vmatpush.msra.mxu0 %v249
    %1893 = vmatpush.msra.mxu0 %v247
    %1894 = vmatpush.msra.mxu0 %v245
    %1895 = vmatmul.f32.gmra.mxu0 %v1602
    %v1896 = vpop.f32.mrf.mxu0
    %v1897 = vadd.f32 0.0, %v1896
    %1898 = vdwg.mxu0
    %v1901 = vrot.slane %v1857, 6
    %v1902 = vrot.slane %v1858, 6
    %1903 = vrot.lane.b32.xlu0 %v1901, 8
    %v1904 = vpop.permute.xlu0 %1903
    %1905 = vrot.lane.b32.xlu0 %v1902, 8
    %v1906 = vpop.permute.xlu0 %1905
    %v1907 = vsel %vm450, %v1904, %v1906
    %v1908 = vsel %vm301, %v1907, 0
    %1910 = vmatpush.msra.mxu0 0.0
    %1911 = vmatpush.msra.mxu0 0.0
    %1912 = vmatpush.msra.mxu0 0.0
    %1913 = vmatpush.msra.mxu0 0.0
    %1914 = vmatpush.msra.mxu0 0.0
    %1915 = vmatpush.msra.mxu0 0.0
    %1916 = vmatpush.msra.mxu0 0.0
    %1917 = vmatpush.msra.mxu0 0.0
    %1918 = vmatpush.msra.mxu0 0.0
    %1919 = vmatpush.msra.mxu0 0.0
    %1920 = vmatpush.msra.mxu0 0.0
    %1921 = vmatpush.msra.mxu0 %v242
    %1922 = vmatpush.msra.mxu0 %v240
    %1923 = vmatpush.msra.mxu0 %v238
    %1924 = vmatpush.msra.mxu0 %v236
    %1925 = vmatpush.msra.mxu0 %v234
    %1926 = vmatmul.f32.gmra.mxu0 %v1908
    %v1927 = vpop.f32.mrf.mxu0
    %v1928 = vadd.f32 %v1877, %v1927
    %1929 = vdwg.mxu0
    %1930 = vmatpush.msra.mxu0 0.0
    %1931 = vmatpush.msra.mxu0 0.0
    %1932 = vmatpush.msra.mxu0 0.0
    %1933 = vmatpush.msra.mxu0 0.0
    %1934 = vmatpush.msra.mxu0 0.0
    %1935 = vmatpush.msra.mxu0 0.0
    %1936 = vmatpush.msra.mxu0 0.0
    %1937 = vmatpush.msra.mxu0 0.0
    %1938 = vmatpush.msra.mxu0 0.0
    %1939 = vmatpush.msra.mxu0 0.0
    %1940 = vmatpush.msra.mxu0 0.0
    %1941 = vmatpush.msra.mxu0 %v243
    %1942 = vmatpush.msra.mxu0 %v241
    %1943 = vmatpush.msra.mxu0 %v239
    %1944 = vmatpush.msra.mxu0 %v237
    %1945 = vmatpush.msra.mxu0 %v235
    %1946 = vmatmul.f32.gmra.mxu0 %v1908
    %v1947 = vpop.f32.mrf.mxu0
    %v1948 = vadd.f32 %v1897, %v1947
    %1949 = vdwg.mxu0
    %v1950 = vadd.f32 %v1928, %v495
    %v1951 = vadd.f32 %v1948, %v496
    %v1952 = vxor.u32 %v1950, 2147483648
    %v1953 = vmul.f32 %v1952, 1.442695
    %v1954 = vpow.pop %v1953
    %v1955 = vadd.f32 %v1954, 1.0
    %v1956 = vrcp.pop %v1955
    %v1957 = vmul.f32 %v1955, %v1956
    %v1958 = vsub.f32 1.0, %v1957
    %v1959 = vmul.f32 %v1956, %v1958
    %v1960 = vadd.f32 %v1956, %v1959
    %vm1961 = vweird.f32 %v1955
    %vm1962 = vweird.f32 %v1956
    %vm1963 = vmor %vm1961, %vm1962
    %v1964 = vsel %vm1963, %v1956, %v1960
    %v1965 = vand.u32 2147483647, %v1955
    %vm1966 = vcmp.eq.f32.partialorder %v1965, 8.507059e+37
    %v1967 = vand.u32 %v1955, 2147483648
    %v1968 = vor.u32 1.1754944e-38, %v1967
    %v1969 = vsel %vm1966, %v1968, %v1964
    %v1970 = vmul.f32 1.0, %v1969
    %v1971 = vtanh.pop %v1950
    %v1972 = vxor.u32 %v1951, 2147483648
    %v1973 = vmul.f32 %v1972, 1.442695
    %v1974 = vpow.pop %v1973
    %v1975 = vadd.f32 %v1974, 1.0
    %v1976 = vrcp.pop %v1975
    %v1977 = vmul.f32 %v1975, %v1976
    %v1978 = vsub.f32 1.0, %v1977
    %v1979 = vmul.f32 %v1976, %v1978
    %v1980 = vadd.f32 %v1976, %v1979
    %vm1981 = vweird.f32 %v1975
    %vm1982 = vweird.f32 %v1976
    %vm1983 = vmor %vm1981, %vm1982
    %v1984 = vsel %vm1983, %v1976, %v1980
    %v1985 = vand.u32 2147483647, %v1975
    %vm1986 = vcmp.eq.f32.partialorder %v1985, 8.507059e+37
    %v1987 = vand.u32 %v1975, 2147483648
    %v1988 = vor.u32 1.1754944e-38, %v1987
    %v1989 = vsel %vm1986, %v1988, %v1984
    %v1990 = vmul.f32 1.0, %v1989
    %v1991 = vmul.f32 %v1970, %v1518
    %1993 = vrot.lane.b32.xlu0 %v1971, 48
    %v1994 = vpop.permute.xlu0 %1993
    %v1996 = vmul.f32 %v1970, %v1994
    %1998 = vrot.lane.b32.xlu0 %v1996, 40
    %v1999 = vpop.permute.xlu0 %1998
    %v2001 = vadd.f32 %v1991, %v1999
    %v2002 = vtanh.pop %v2001
    %2004 = vrot.lane.b32.xlu0 %v2002, 80
    %v2005 = vpop.permute.xlu0 %2004
    %v2007 = vmul.f32 %v1970, %v2005
    %v2008 = vmul.f32 %v1990, %v2005
    %2011 = vrot.lane.b32.xlu0 %v1749, 16
    %v2012 = vpop.permute.xlu0 %2011
    %2013 = vrot.lane.b32.xlu0 %v1750, 16
    %v2014 = vpop.permute.xlu0 %2013
    %v2015 = vsel %vm171, %v2012, %v2014
    %v2016 = vsel %vm558, %v2015, 0
    %2018 = vmatpush.msra.mxu0 0.0
    %2019 = vmatpush.msra.mxu0 0.0
    %2020 = vmatpush.msra.mxu0 0.0
    %2021 = vmatpush.msra.mxu0 0.0
    %2022 = vmatpush.msra.mxu0 0.0
    %2023 = vmatpush.msra.mxu0 0.0
    %2024 = vmatpush.msra.mxu0 %v297
    %2025 = vmatpush.msra.mxu0 %v294
    %2026 = vmatpush.msra.mxu0 %v291
    %2027 = vmatpush.msra.mxu0 %v288
    %2028 = vmatpush.msra.mxu0 %v285
    %2029 = vmatpush.msra.mxu0 %v282
    %2030 = vmatpush.msra.mxu0 %v279
    %2031 = vmatpush.msra.mxu0 %v276
    %2032 = vmatpush.msra.mxu0 %v273
    %2033 = vmatpush.msra.mxu0 %v270
    %2034 = vmatmul.f32.gmra.mxu0 %v2016
    %v2035 = vpop.f32.mrf.mxu0
    %v2036 = vadd.f32 0.0, %v2035
    %2037 = vdwg.mxu0
    %2038 = vmatpush.msra.mxu0 0.0
    %2039 = vmatpush.msra.mxu0 0.0
    %2040 = vmatpush.msra.mxu0 0.0
    %2041 = vmatpush.msra.mxu0 0.0
    %2042 = vmatpush.msra.mxu0 0.0
    %2043 = vmatpush.msra.mxu0 0.0
    %2044 = vmatpush.msra.mxu0 %v298
    %2045 = vmatpush.msra.mxu0 %v295
    %2046 = vmatpush.msra.mxu0 %v292
    %2047 = vmatpush.msra.mxu0 %v289
    %2048 = vmatpush.msra.mxu0 %v286
    %2049 = vmatpush.msra.mxu0 %v283
    %2050 = vmatpush.msra.mxu0 %v280
    %2051 = vmatpush.msra.mxu0 %v277
    %2052 = vmatpush.msra.mxu0 %v274
    %2053 = vmatpush.msra.mxu0 %v271
    %2054 = vmatmul.f32.gmra.mxu0 %v2016
    %v2055 = vpop.f32.mrf.mxu0
    %v2056 = vadd.f32 0.0, %v2055
    %2057 = vdwg.mxu0
    %2058 = vmatpush.msra.mxu0 0.0
    %2059 = vmatpush.msra.mxu0 0.0
    %2060 = vmatpush.msra.mxu0 0.0
    %2061 = vmatpush.msra.mxu0 0.0
    %2062 = vmatpush.msra.mxu0 0.0
    %2063 = vmatpush.msra.mxu0 0.0
    %2064 = vmatpush.msra.mxu0 %v299
    %2065 = vmatpush.msra.mxu0 %v296
    %2066 = vmatpush.msra.mxu0 %v293
    %2067 = vmatpush.msra.mxu0 %v290
    %2068 = vmatpush.msra.mxu0 %v287
    %2069 = vmatpush.msra.mxu0 %v284
    %2070 = vmatpush.msra.mxu0 %v281
    %2071 = vmatpush.msra.mxu0 %v278
    %2072 = vmatpush.msra.mxu0 %v275
    %2073 = vmatpush.msra.mxu0 %v272
    %2074 = vmatmul.f32.gmra.mxu0 %v2016
    %v2075 = vpop.f32.mrf.mxu0
    %v2076 = vadd.f32 0.0, %v2075
    %2077 = vdwg.mxu0
    %2080 = vrot.lane.b32.xlu0 %v2007, 8
    %v2081 = vpop.permute.xlu0 %2080
    %2082 = vrot.lane.b32.xlu0 %v2008, 8
    %v2083 = vpop.permute.xlu0 %2082
    %v2084 = vsel %vm450, %v2081, %v2083
    %v2085 = vsel %vm301, %v2084, 0
    %2087 = vmatpush.msra.mxu0 0.0
    %2088 = vmatpush.msra.mxu0 0.0
    %2089 = vmatpush.msra.mxu0 0.0
    %2090 = vmatpush.msra.mxu0 0.0
    %2091 = vmatpush.msra.mxu0 0.0
    %2092 = vmatpush.msra.mxu0 0.0
    %2093 = vmatpush.msra.mxu0 0.0
    %2094 = vmatpush.msra.mxu0 0.0
    %2095 = vmatpush.msra.mxu0 0.0
    %2096 = vmatpush.msra.mxu0 0.0
    %2097 = vmatpush.msra.mxu0 0.0
    %2098 = vmatpush.msra.mxu0 %v267
    %2099 = vmatpush.msra.mxu0 %v264
    %2100 = vmatpush.msra.mxu0 %v261
    %2101 = vmatpush.msra.mxu0 %v258
    %2102 = vmatpush.msra.mxu0 %v255
    %2103 = vmatmul.f32.gmra.mxu0 %v2085
    %v2104 = vpop.f32.mrf.mxu0
    %v2105 = vadd.f32 %v2036, %v2104
    %2106 = vdwg.mxu0
    %2107 = vmatpush.msra.mxu0 0.0
    %2108 = vmatpush.msra.mxu0 0.0
    %2109 = vmatpush.msra.mxu0 0.0
    %2110 = vmatpush.msra.mxu0 0.0
    %2111 = vmatpush.msra.mxu0 0.0
    %2112 = vmatpush.msra.mxu0 0.0
    %2113 = vmatpush.msra.mxu0 0.0
    %2114 = vmatpush.msra.mxu0 0.0
    %2115 = vmatpush.msra.mxu0 0.0
    %2116 = vmatpush.msra.mxu0 0.0
    %2117 = vmatpush.msra.mxu0 0.0
    %2118 = vmatpush.msra.mxu0 %v268
    %2119 = vmatpush.msra.mxu0 %v265
    %2120 = vmatpush.msra.mxu0 %v262
    %2121 = vmatpush.msra.mxu0 %v259
    %2122 = vmatpush.msra.mxu0 %v256
    %2123 = vmatmul.f32.gmra.mxu0 %v2085
    %v2124 = vpop.f32.mrf.mxu0
    %v2125 = vadd.f32 %v2056, %v2124
    %2126 = vdwg.mxu0
    %2127 = vmatpush.msra.mxu0 0.0
    %2128 = vmatpush.msra.mxu0 0.0
    %2129 = vmatpush.msra.mxu0 0.0
    %2130 = vmatpush.msra.mxu0 0.0
    %2131 = vmatpush.msra.mxu0 0.0
    %2132 = vmatpush.msra.mxu0 0.0
    %2133 = vmatpush.msra.mxu0 0.0
    %2134 = vmatpush.msra.mxu0 0.0
    %2135 = vmatpush.msra.mxu0 0.0
    %2136 = vmatpush.msra.mxu0 0.0
    %2137 = vmatpush.msra.mxu0 0.0
    %2138 = vmatpush.msra.mxu0 %v269
    %2139 = vmatpush.msra.mxu0 %v266
    %2140 = vmatpush.msra.mxu0 %v263
    %2141 = vmatpush.msra.mxu0 %v260
    %2142 = vmatpush.msra.mxu0 %v257
    %2143 = vmatmul.f32.gmra.mxu0 %v2085
    %v2144 = vpop.f32.mrf.mxu0
    %v2145 = vadd.f32 %v2076, %v2144
    %2146 = vdwg.mxu0
    %v2147 = vadd.f32 %v2105, %v691
    %v2148 = vadd.f32 %v2125, %v692
    %v2149 = vadd.f32 %v2145, %v693
    %v2150 = vxor.u32 %v2147, 2147483648
    %v2151 = vmul.f32 %v2150, 1.442695
    %v2152 = vpow.pop %v2151
    %v2153 = vadd.f32 %v2152, 1.0
    %v2154 = vrcp.pop %v2153
    %v2155 = vmul.f32 %v2153, %v2154
    %v2156 = vsub.f32 1.0, %v2155
    %v2157 = vmul.f32 %v2154, %v2156
    %v2158 = vadd.f32 %v2154, %v2157
    %vm2159 = vweird.f32 %v2153
    %vm2160 = vweird.f32 %v2154
    %vm2161 = vmor %vm2159, %vm2160
    %v2162 = vsel %vm2161, %v2154, %v2158
    %v2163 = vand.u32 2147483647, %v2153
    %vm2164 = vcmp.eq.f32.partialorder %v2163, 8.507059e+37
    %v2165 = vand.u32 %v2153, 2147483648
    %v2166 = vor.u32 1.1754944e-38, %v2165
    %v2167 = vsel %vm2164, %v2166, %v2162
    %v2168 = vmul.f32 1.0, %v2167
    %v2169 = vxor.u32 %v2148, 2147483648
    %v2170 = vmul.f32 %v2169, 1.442695
    %v2171 = vpow.pop %v2170
    %v2172 = vadd.f32 %v2171, 1.0
    %v2173 = vrcp.pop %v2172
    %v2174 = vmul.f32 %v2172, %v2173
    %v2175 = vsub.f32 1.0, %v2174
    %v2176 = vmul.f32 %v2173, %v2175
    %v2177 = vadd.f32 %v2173, %v2176
    %vm2178 = vweird.f32 %v2172
    %vm2179 = vweird.f32 %v2173
    %vm2180 = vmor %vm2178, %vm2179
    %v2181 = vsel %vm2180, %v2173, %v2177
    %v2182 = vand.u32 2147483647, %v2172
    %vm2183 = vcmp.eq.f32.partialorder %v2182, 8.507059e+37
    %v2184 = vand.u32 %v2172, 2147483648
    %v2185 = vor.u32 1.1754944e-38, %v2184
    %v2186 = vsel %vm2183, %v2185, %v2181
    %v2187 = vmul.f32 1.0, %v2186
    %v2188 = vtanh.pop %v2148
    %v2189 = vxor.u32 %v2149, 2147483648
    %v2190 = vmul.f32 %v2189, 1.442695
    %v2191 = vpow.pop %v2190
    %v2192 = vadd.f32 %v2191, 1.0
    %v2193 = vrcp.pop %v2192
    %v2194 = vmul.f32 %v2192, %v2193
    %v2195 = vsub.f32 1.0, %v2194
    %v2196 = vmul.f32 %v2193, %v2195
    %v2197 = vadd.f32 %v2193, %v2196
    %vm2198 = vweird.f32 %v2192
    %vm2199 = vweird.f32 %v2193
    %vm2200 = vmor %vm2198, %vm2199
    %v2201 = vsel %vm2200, %v2193, %v2197
    %v2202 = vand.u32 2147483647, %v2192
    %vm2203 = vcmp.eq.f32.partialorder %v2202, 8.507059e+37
    %v2204 = vand.u32 %v2192, 2147483648
    %v2205 = vor.u32 1.1754944e-38, %v2204
    %v2206 = vsel %vm2203, %v2205, %v2201
    %v2207 = vmul.f32 1.0, %v2206
    %v2208 = vmul.f32 %v2168, %v1736
    %v2209 = vmul.f32 %v2187, %v1737
    %2211 = vrot.lane.b32.xlu0 %v2188, 96
    %v2212 = vpop.permute.xlu0 %2211
    %v2214 = vmul.f32 %v2168, %v2212
    %2216 = vrot.lane.b32.xlu0 %v2214, 80
    %v2217 = vpop.permute.xlu0 %2216
    %v2219 = vadd.f32 %v2208, %v2217
    %v2220 = vadd.f32 %v2209, %v2217
    %v2221 = vtanh.pop %v2219
    %v2222 = vtanh.pop %v2220
    %2225 = vrot.lane.b32.xlu0 %v2221, 32
    %v2226 = vpop.permute.xlu0 %2225
    %2227 = vrot.lane.b32.xlu0 %v2222, 32
    %v2228 = vpop.permute.xlu0 %2227
    %v2229 = vsel %vm779, %v2226, %v2228
    %v2232 = vmul.f32 %v2187, %v2226
    %v2233 = vmul.f32 %v2207, %v2229
    %2234 = vmatpush.msra.mxu0 0.0
    %2235 = vmatpush.msra.mxu0 0.0
    %2236 = vmatpush.msra.mxu0 0.0
    %2237 = vmatpush.msra.mxu0 0.0
    %2238 = vmatpush.msra.mxu0 0.0
    %2239 = vmatpush.msra.mxu0 0.0
    %2240 = vmatpush.msra.mxu0 0.0
    %2241 = vmatpush.msra.mxu0 0.0
    %2242 = vmatpush.msra.mxu0 0.0
    %2243 = vmatpush.msra.mxu0 0.0
    %2244 = vmatpush.msra.mxu0 0.0
    %2245 = vmatpush.msra.mxu0 %v232
    %2246 = vmatpush.msra.mxu0 %v230
    %2247 = vmatpush.msra.mxu0 %v228
    %2248 = vmatpush.msra.mxu0 %v226
    %2249 = vmatpush.msra.mxu0 %v224
    %2250 = vmatmul.f32.gmra.mxu0 %v1908
    %v2251 = vpop.f32.mrf.mxu0
    %v2252 = vadd.f32 0.0, %v2251
    %2253 = vdwg.mxu0
    %2254 = vmatpush.msra.mxu0 0.0
    %2255 = vmatpush.msra.mxu0 0.0
    %2256 = vmatpush.msra.mxu0 0.0
    %2257 = vmatpush.msra.mxu0 0.0
    %2258 = vmatpush.msra.mxu0 0.0
    %2259 = vmatpush.msra.mxu0 0.0
    %2260 = vmatpush.msra.mxu0 0.0
    %2261 = vmatpush.msra.mxu0 0.0
    %2262 = vmatpush.msra.mxu0 0.0
    %2263 = vmatpush.msra.mxu0 0.0
    %2264 = vmatpush.msra.mxu0 0.0
    %2265 = vmatpush.msra.mxu0 %v233
    %2266 = vmatpush.msra.mxu0 %v231
    %2267 = vmatpush.msra.mxu0 %v229
    %2268 = vmatpush.msra.mxu0 %v227
    %2269 = vmatpush.msra.mxu0 %v225
    %2270 = vmatmul.f32.gmra.mxu0 %v1908
    %v2271 = vpop.f32.mrf.mxu0
    %v2272 = vadd.f32 0.0, %v2271
    %2273 = vdwg.mxu0
    %v2274 = vadd.f32 %v199, %v2252
    %v2275 = vadd.f32 %v222, %v2272
    %v2276 = vxor.u32 %v2274, 2147483648
    %v2277 = vmul.f32 %v2276, 1.442695
    %v2278 = vpow.pop %v2277
    %v2279 = vadd.f32 %v2278, 1.0
    %v2280 = vrcp.pop %v2279
    %v2281 = vmul.f32 %v2279, %v2280
    %v2282 = vsub.f32 1.0, %v2281
    %v2283 = vmul.f32 %v2280, %v2282
    %v2284 = vadd.f32 %v2280, %v2283
    %vm2285 = vweird.f32 %v2279
    %vm2286 = vweird.f32 %v2280
    %vm2287 = vmor %vm2285, %vm2286
    %v2288 = vsel %vm2287, %v2280, %v2284
    %v2289 = vand.u32 2147483647, %v2279
    %vm2290 = vcmp.eq.f32.partialorder %v2289, 8.507059e+37
    %v2291 = vand.u32 %v2279, 2147483648
    %v2292 = vor.u32 1.1754944e-38, %v2291
    %v2293 = vsel %vm2290, %v2292, %v2288
    %v2294 = vmul.f32 1.0, %v2293
    %v2295 = vtanh.pop %v2274
    %v2296 = vxor.u32 %v2275, 2147483648
    %v2297 = vmul.f32 %v2296, 1.442695
    %v2298 = vpow.pop %v2297
    %v2299 = vadd.f32 %v2298, 1.0
    %v2300 = vrcp.pop %v2299
    %v2301 = vmul.f32 %v2299, %v2300
    %v2302 = vsub.f32 1.0, %v2301
    %v2303 = vmul.f32 %v2300, %v2302
    %v2304 = vadd.f32 %v2300, %v2303
    %vm2305 = vweird.f32 %v2299
    %vm2306 = vweird.f32 %v2300
    %vm2307 = vmor %vm2305, %vm2306
    %v2308 = vsel %vm2307, %v2300, %v2304
    %v2309 = vand.u32 2147483647, %v2299
    %vm2310 = vcmp.eq.f32.partialorder %v2309, 8.507059e+37
    %v2311 = vand.u32 %v2299, 2147483648
    %v2312 = vor.u32 1.1754944e-38, %v2311
    %v2313 = vsel %vm2310, %v2312, %v2308
    %v2314 = vmul.f32 1.0, %v2313
    %v2316 = vrot.slane %v1851, 6
    %v2318 = vmul.f32 %v2294, %v2316
    %2320 = vrot.lane.b32.xlu0 %v2295, 48
    %v2321 = vpop.permute.xlu0 %2320
    %v2323 = vmul.f32 %v2294, %v2321
    %2325 = vrot.lane.b32.xlu0 %v2323, 40
    %v2326 = vpop.permute.xlu0 %2325
    %v2328 = vadd.f32 %v2318, %v2326
    %v2329 = vtanh.pop %v2328
    %2331 = vrot.lane.b32.xlu0 %v2329, 80
    %v2332 = vpop.permute.xlu0 %2331
    %v2334 = vmul.f32 %v2294, %v2332
    %v2335 = vmul.f32 %v2314, %v2332
    %2336 = vmatpush.msra.mxu0 0.0
    %2337 = vmatpush.msra.mxu0 0.0
    %2338 = vmatpush.msra.mxu0 0.0
    %2339 = vmatpush.msra.mxu0 0.0
    %2340 = vmatpush.msra.mxu0 0.0
    %2341 = vmatpush.msra.mxu0 0.0
    %2342 = vmatpush.msra.mxu0 0.0
    %2343 = vmatpush.msra.mxu0 0.0
    %2344 = vmatpush.msra.mxu0 0.0
    %2345 = vmatpush.msra.mxu0 0.0
    %2346 = vmatpush.msra.mxu0 0.0
    %2347 = vmatpush.msra.mxu0 %v252
    %2348 = vmatpush.msra.mxu0 %v250
    %2349 = vmatpush.msra.mxu0 %v248
    %2350 = vmatpush.msra.mxu0 %v246
    %2351 = vmatpush.msra.mxu0 %v244
    %2352 = vmatmul.f32.gmra.mxu0 %v2085
    %v2353 = vpop.f32.mrf.mxu0
    %v2354 = vadd.f32 0.0, %v2353
    %2355 = vdwg.mxu0
    %2356 = vmatpush.msra.mxu0 0.0
    %2357 = vmatpush.msra.mxu0 0.0
    %2358 = vmatpush.msra.mxu0 0.0
    %2359 = vmatpush.msra.mxu0 0.0
    %2360 = vmatpush.msra.mxu0 0.0
    %2361 = vmatpush.msra.mxu0 0.0
    %2362 = vmatpush.msra.mxu0 0.0
    %2363 = vmatpush.msra.mxu0 0.0
    %2364 = vmatpush.msra.mxu0 0.0
    %2365 = vmatpush.msra.mxu0 0.0
    %2366 = vmatpush.msra.mxu0 0.0
    %2367 = vmatpush.msra.mxu0 %v253
    %2368 = vmatpush.msra.mxu0 %v251
    %2369 = vmatpush.msra.mxu0 %v249
    %2370 = vmatpush.msra.mxu0 %v247
    %2371 = vmatpush.msra.mxu0 %v245
    %2372 = vmatmul.f32.gmra.mxu0 %v2085
    %v2373 = vpop.f32.mrf.mxu0
    %v2374 = vadd.f32 0.0, %v2373
    %2375 = vdwg.mxu0
    %2378 = vrot.lane.b32.xlu0 %v2334, 8
    %v2379 = vpop.permute.xlu0 %2378
    %2380 = vrot.lane.b32.xlu0 %v2335, 8
    %v2381 = vpop.permute.xlu0 %2380
    %v2382 = vsel %vm450, %v2379, %v2381
    %v2383 = vsel %vm301, %v2382, 0
    %2385 = vmatpush.msra.mxu0 0.0
    %2386 = vmatpush.msra.mxu0 0.0
    %2387 = vmatpush.msra.mxu0 0.0
    %2388 = vmatpush.msra.mxu0 0.0
    %2389 = vmatpush.msra.mxu0 0.0
    %2390 = vmatpush.msra.mxu0 0.0
    %2391 = vmatpush.msra.mxu0 0.0
    %2392 = vmatpush.msra.mxu0 0.0
    %2393 = vmatpush.msra.mxu0 0.0
    %2394 = vmatpush.msra.mxu0 0.0
    %2395 = vmatpush.msra.mxu0 0.0
    %2396 = vmatpush.msra.mxu0 %v242
    %2397 = vmatpush.msra.mxu0 %v240
    %2398 = vmatpush.msra.mxu0 %v238
    %2399 = vmatpush.msra.mxu0 %v236
    %2400 = vmatpush.msra.mxu0 %v234
    %2401 = vmatmul.f32.gmra.mxu0 %v2383
    %v2402 = vpop.f32.mrf.mxu0
    %v2403 = vadd.f32 %v2354, %v2402
    %2404 = vdwg.mxu0
    %2405 = vmatpush.msra.mxu0 0.0
    %2406 = vmatpush.msra.mxu0 0.0
    %2407 = vmatpush.msra.mxu0 0.0
    %2408 = vmatpush.msra.mxu0 0.0
    %2409 = vmatpush.msra.mxu0 0.0
    %2410 = vmatpush.msra.mxu0 0.0
    %2411 = vmatpush.msra.mxu0 0.0
    %2412 = vmatpush.msra.mxu0 0.0
    %2413 = vmatpush.msra.mxu0 0.0
    %2414 = vmatpush.msra.mxu0 0.0
    %2415 = vmatpush.msra.mxu0 0.0
    %2416 = vmatpush.msra.mxu0 %v243
    %2417 = vmatpush.msra.mxu0 %v241
    %2418 = vmatpush.msra.mxu0 %v239
    %2419 = vmatpush.msra.mxu0 %v237
    %2420 = vmatpush.msra.mxu0 %v235
    %2421 = vmatmul.f32.gmra.mxu0 %v2383
    %v2422 = vpop.f32.mrf.mxu0
    %v2423 = vadd.f32 %v2374, %v2422
    %2424 = vdwg.mxu0
    %v2425 = vadd.f32 %v2403, %v495
    %v2426 = vadd.f32 %v2423, %v496
    %v2427 = vxor.u32 %v2425, 2147483648
    %v2428 = vmul.f32 %v2427, 1.442695
    %v2429 = vpow.pop %v2428
    %v2430 = vadd.f32 %v2429, 1.0
    %v2431 = vrcp.pop %v2430
    %v2432 = vmul.f32 %v2430, %v2431
    %v2433 = vsub.f32 1.0, %v2432
    %v2434 = vmul.f32 %v2431, %v2433
    %v2435 = vadd.f32 %v2431, %v2434
    %vm2436 = vweird.f32 %v2430
    %vm2437 = vweird.f32 %v2431
    %vm2438 = vmor %vm2436, %vm2437
    %v2439 = vsel %vm2438, %v2431, %v2435
    %v2440 = vand.u32 2147483647, %v2430
    %vm2441 = vcmp.eq.f32.partialorder %v2440, 8.507059e+37
    %v2442 = vand.u32 %v2430, 2147483648
    %v2443 = vor.u32 1.1754944e-38, %v2442
    %v2444 = vsel %vm2441, %v2443, %v2439
    %v2445 = vmul.f32 1.0, %v2444
    %v2446 = vtanh.pop %v2425
    %v2447 = vxor.u32 %v2426, 2147483648
    %v2448 = vmul.f32 %v2447, 1.442695
    %v2449 = vpow.pop %v2448
    %v2450 = vadd.f32 %v2449, 1.0
    %v2451 = vrcp.pop %v2450
    %v2452 = vmul.f32 %v2450, %v2451
    %v2453 = vsub.f32 1.0, %v2452
    %v2454 = vmul.f32 %v2451, %v2453
    %v2455 = vadd.f32 %v2451, %v2454
    %vm2456 = vweird.f32 %v2450
    %vm2457 = vweird.f32 %v2451
    %vm2458 = vmor %vm2456, %vm2457
    %v2459 = vsel %vm2458, %v2451, %v2455
    %v2460 = vand.u32 2147483647, %v2450
    %vm2461 = vcmp.eq.f32.partialorder %v2460, 8.507059e+37
    %v2462 = vand.u32 %v2450, 2147483648
    %v2463 = vor.u32 1.1754944e-38, %v2462
    %v2464 = vsel %vm2461, %v2463, %v2459
    %v2465 = vmul.f32 1.0, %v2464
    %v2466 = vmul.f32 %v2445, %v2001
    %2468 = vrot.lane.b32.xlu0 %v2446, 48
    %v2469 = vpop.permute.xlu0 %2468
    %v2471 = vmul.f32 %v2445, %v2469
    %2473 = vrot.lane.b32.xlu0 %v2471, 40
    %v2474 = vpop.permute.xlu0 %2473
    %v2476 = vadd.f32 %v2466, %v2474
    %v2477 = vtanh.pop %v2476
    %2479 = vrot.lane.b32.xlu0 %v2477, 80
    %v2480 = vpop.permute.xlu0 %2479
    %v2482 = vmul.f32 %v2445, %v2480
    %v2483 = vmul.f32 %v2465, %v2480
    %2486 = vrot.lane.b32.xlu0 %v2232, 16
    %v2487 = vpop.permute.xlu0 %2486
    %2488 = vrot.lane.b32.xlu0 %v2233, 16
    %v2489 = vpop.permute.xlu0 %2488
    %v2490 = vsel %vm171, %v2487, %v2489
    %v2491 = vsel %vm558, %v2490, 0
    %2493 = vmatpush.msra.mxu0 0.0
    %2494 = vmatpush.msra.mxu0 0.0
    %2495 = vmatpush.msra.mxu0 0.0
    %2496 = vmatpush.msra.mxu0 0.0
    %2497 = vmatpush.msra.mxu0 0.0
    %2498 = vmatpush.msra.mxu0 0.0
    %2499 = vmatpush.msra.mxu0 %v297
    %2500 = vmatpush.msra.mxu0 %v294
    %2501 = vmatpush.msra.mxu0 %v291
    %2502 = vmatpush.msra.mxu0 %v288
    %2503 = vmatpush.msra.mxu0 %v285
    %2504 = vmatpush.msra.mxu0 %v282
    %2505 = vmatpush.msra.mxu0 %v279
    %2506 = vmatpush.msra.mxu0 %v276
    %2507 = vmatpush.msra.mxu0 %v273
    %2508 = vmatpush.msra.mxu0 %v270
    %2509 = vmatmul.f32.gmra.mxu0 %v2491
    %v2510 = vpop.f32.mrf.mxu0
    %v2511 = vadd.f32 0.0, %v2510
    %2512 = vdwg.mxu0
    %2513 = vmatpush.msra.mxu0 0.0
    %2514 = vmatpush.msra.mxu0 0.0
    %2515 = vmatpush.msra.mxu0 0.0
    %2516 = vmatpush.msra.mxu0 0.0
    %2517 = vmatpush.msra.mxu0 0.0
    %2518 = vmatpush.msra.mxu0 0.0
    %2519 = vmatpush.msra.mxu0 %v298
    %2520 = vmatpush.msra.mxu0 %v295
    %2521 = vmatpush.msra.mxu0 %v292
    %2522 = vmatpush.msra.mxu0 %v289
    %2523 = vmatpush.msra.mxu0 %v286
    %2524 = vmatpush.msra.mxu0 %v283
    %2525 = vmatpush.msra.mxu0 %v280
    %2526 = vmatpush.msra.mxu0 %v277
    %2527 = vmatpush.msra.mxu0 %v274
    %2528 = vmatpush.msra.mxu0 %v271
    %2529 = vmatmul.f32.gmra.mxu0 %v2491
    %v2530 = vpop.f32.mrf.mxu0
    %v2531 = vadd.f32 0.0, %v2530
    %2532 = vdwg.mxu0
    %2533 = vmatpush.msra.mxu0 0.0
    %2534 = vmatpush.msra.mxu0 0.0
    %2535 = vmatpush.msra.mxu0 0.0
    %2536 = vmatpush.msra.mxu0 0.0
    %2537 = vmatpush.msra.mxu0 0.0
    %2538 = vmatpush.msra.mxu0 0.0
    %2539 = vmatpush.msra.mxu0 %v299
    %2540 = vmatpush.msra.mxu0 %v296
    %2541 = vmatpush.msra.mxu0 %v293
    %2542 = vmatpush.msra.mxu0 %v290
    %2543 = vmatpush.msra.mxu0 %v287
    %2544 = vmatpush.msra.mxu0 %v284
    %2545 = vmatpush.msra.mxu0 %v281
    %2546 = vmatpush.msra.mxu0 %v278
    %2547 = vmatpush.msra.mxu0 %v275
    %2548 = vmatpush.msra.mxu0 %v272
    %2549 = vmatmul.f32.gmra.mxu0 %v2491
    %v2550 = vpop.f32.mrf.mxu0
    %v2551 = vadd.f32 0.0, %v2550
    %2552 = vdwg.mxu0
    %2555 = vrot.lane.b32.xlu0 %v2482, 8
    %v2556 = vpop.permute.xlu0 %2555
    %2557 = vrot.lane.b32.xlu0 %v2483, 8
    %v2558 = vpop.permute.xlu0 %2557
    %v2559 = vsel %vm450, %v2556, %v2558
    %v2560 = vsel %vm301, %v2559, 0
    %2562 = vmatpush.msra.mxu0 0.0
    %2563 = vmatpush.msra.mxu0 0.0
    %2564 = vmatpush.msra.mxu0 0.0
    %2565 = vmatpush.msra.mxu0 0.0
    %2566 = vmatpush.msra.mxu0 0.0
    %2567 = vmatpush.msra.mxu0 0.0
    %2568 = vmatpush.msra.mxu0 0.0
    %2569 = vmatpush.msra.mxu0 0.0
    %2570 = vmatpush.msra.mxu0 0.0
    %2571 = vmatpush.msra.mxu0 0.0
    %2572 = vmatpush.msra.mxu0 0.0
    %2573 = vmatpush.msra.mxu0 %v267
    %2574 = vmatpush.msra.mxu0 %v264
    %2575 = vmatpush.msra.mxu0 %v261
    %2576 = vmatpush.msra.mxu0 %v258
    %2577 = vmatpush.msra.mxu0 %v255
    %2578 = vmatmul.f32.gmra.mxu0 %v2560
    %v2579 = vpop.f32.mrf.mxu0
    %v2580 = vadd.f32 %v2511, %v2579
    %2581 = vdwg.mxu0
    %2582 = vmatpush.msra.mxu0 0.0
    %2583 = vmatpush.msra.mxu0 0.0
    %2584 = vmatpush.msra.mxu0 0.0
    %2585 = vmatpush.msra.mxu0 0.0
    %2586 = vmatpush.msra.mxu0 0.0
    %2587 = vmatpush.msra.mxu0 0.0
    %2588 = vmatpush.msra.mxu0 0.0
    %2589 = vmatpush.msra.mxu0 0.0
    %2590 = vmatpush.msra.mxu0 0.0
    %2591 = vmatpush.msra.mxu0 0.0
    %2592 = vmatpush.msra.mxu0 0.0
    %2593 = vmatpush.msra.mxu0 %v268
    %2594 = vmatpush.msra.mxu0 %v265
    %2595 = vmatpush.msra.mxu0 %v262
    %2596 = vmatpush.msra.mxu0 %v259
    %2597 = vmatpush.msra.mxu0 %v256
    %2598 = vmatmul.f32.gmra.mxu0 %v2560
    %v2599 = vpop.f32.mrf.mxu0
    %v2600 = vadd.f32 %v2531, %v2599
    %2601 = vdwg.mxu0
    %2602 = vmatpush.msra.mxu0 0.0
    %2603 = vmatpush.msra.mxu0 0.0
    %2604 = vmatpush.msra.mxu0 0.0
    %2605 = vmatpush.msra.mxu0 0.0
    %2606 = vmatpush.msra.mxu0 0.0
    %2607 = vmatpush.msra.mxu0 0.0
    %2608 = vmatpush.msra.mxu0 0.0
    %2609 = vmatpush.msra.mxu0 0.0
    %2610 = vmatpush.msra.mxu0 0.0
    %2611 = vmatpush.msra.mxu0 0.0
    %2612 = vmatpush.msra.mxu0 0.0
    %2613 = vmatpush.msra.mxu0 %v269
    %2614 = vmatpush.msra.mxu0 %v266
    %2615 = vmatpush.msra.mxu0 %v263
    %2616 = vmatpush.msra.mxu0 %v260
    %2617 = vmatpush.msra.mxu0 %v257
    %2618 = vmatmul.f32.gmra.mxu0 %v2560
    %v2619 = vpop.f32.mrf.mxu0
    %v2620 = vadd.f32 %v2551, %v2619
    %2621 = vdwg.mxu0
    %v2622 = vadd.f32 %v2580, %v691
    %v2623 = vadd.f32 %v2600, %v692
    %v2624 = vadd.f32 %v2620, %v693
    %v2625 = vxor.u32 %v2622, 2147483648
    %v2626 = vmul.f32 %v2625, 1.442695
    %v2627 = vpow.pop %v2626
    %v2628 = vadd.f32 %v2627, 1.0
    %v2629 = vrcp.pop %v2628
    %v2630 = vmul.f32 %v2628, %v2629
    %v2631 = vsub.f32 1.0, %v2630
    %v2632 = vmul.f32 %v2629, %v2631
    %v2633 = vadd.f32 %v2629, %v2632
    %vm2634 = vweird.f32 %v2628
    %vm2635 = vweird.f32 %v2629
    %vm2636 = vmor %vm2634, %vm2635
    %v2637 = vsel %vm2636, %v2629, %v2633
    %v2638 = vand.u32 2147483647, %v2628
    %vm2639 = vcmp.eq.f32.partialorder %v2638, 8.507059e+37
    %v2640 = vand.u32 %v2628, 2147483648
    %v2641 = vor.u32 1.1754944e-38, %v2640
    %v2642 = vsel %vm2639, %v2641, %v2637
    %v2643 = vmul.f32 1.0, %v2642
    %v2644 = vxor.u32 %v2623, 2147483648
    %v2645 = vmul.f32 %v2644, 1.442695
    %v2646 = vpow.pop %v2645
    %v2647 = vadd.f32 %v2646, 1.0
    %v2648 = vrcp.pop %v2647
    %v2649 = vmul.f32 %v2647, %v2648
    %v2650 = vsub.f32 1.0, %v2649
    %v2651 = vmul.f32 %v2648, %v2650
    %v2652 = vadd.f32 %v2648, %v2651
    %vm2653 = vweird.f32 %v2647
    %vm2654 = vweird.f32 %v2648
    %vm2655 = vmor %vm2653, %vm2654
    %v2656 = vsel %vm2655, %v2648, %v2652
    %v2657 = vand.u32 2147483647, %v2647
    %vm2658 = vcmp.eq.f32.partialorder %v2657, 8.507059e+37
    %v2659 = vand.u32 %v2647, 2147483648
    %v2660 = vor.u32 1.1754944e-38, %v2659
    %v2661 = vsel %vm2658, %v2660, %v2656
    %v2662 = vmul.f32 1.0, %v2661
    %v2663 = vtanh.pop %v2623
    %v2664 = vxor.u32 %v2624, 2147483648
    %v2665 = vmul.f32 %v2664, 1.442695
    %v2666 = vpow.pop %v2665
    %v2667 = vadd.f32 %v2666, 1.0
    %v2668 = vrcp.pop %v2667
    %v2669 = vmul.f32 %v2667, %v2668
    %v2670 = vsub.f32 1.0, %v2669
    %v2671 = vmul.f32 %v2668, %v2670
    %v2672 = vadd.f32 %v2668, %v2671
    %vm2673 = vweird.f32 %v2667
    %vm2674 = vweird.f32 %v2668
    %vm2675 = vmor %vm2673, %vm2674
    %v2676 = vsel %vm2675, %v2668, %v2672
    %v2677 = vand.u32 2147483647, %v2667
    %vm2678 = vcmp.eq.f32.partialorder %v2677, 8.507059e+37
    %v2679 = vand.u32 %v2667, 2147483648
    %v2680 = vor.u32 1.1754944e-38, %v2679
    %v2681 = vsel %vm2678, %v2680, %v2676
    %v2682 = vmul.f32 1.0, %v2681
    %v2683 = vmul.f32 %v2643, %v2219
    %v2684 = vmul.f32 %v2662, %v2220
    %2686 = vrot.lane.b32.xlu0 %v2663, 96
    %v2687 = vpop.permute.xlu0 %2686
    %v2689 = vmul.f32 %v2643, %v2687
    %2691 = vrot.lane.b32.xlu0 %v2689, 80
    %v2692 = vpop.permute.xlu0 %2691
    %v2694 = vadd.f32 %v2683, %v2692
    %v2695 = vadd.f32 %v2684, %v2692
    %v2696 = vtanh.pop %v2694
    %v2697 = vtanh.pop %v2695
    %2700 = vrot.lane.b32.xlu0 %v2696, 32
    %v2701 = vpop.permute.xlu0 %2700
    %2702 = vrot.lane.b32.xlu0 %v2697, 32
    %v2703 = vpop.permute.xlu0 %2702
    %v2704 = vsel %vm779, %v2701, %v2703
    %v2707 = vmul.f32 %v2662, %v2701
    %v2708 = vmul.f32 %v2682, %v2704
    %2709 = vmatpush.msra.mxu0 0.0
    %2710 = vmatpush.msra.mxu0 0.0
    %2711 = vmatpush.msra.mxu0 0.0
    %2712 = vmatpush.msra.mxu0 0.0
    %2713 = vmatpush.msra.mxu0 0.0
    %2714 = vmatpush.msra.mxu0 0.0
    %2715 = vmatpush.msra.mxu0 0.0
    %2716 = vmatpush.msra.mxu0 0.0
    %2717 = vmatpush.msra.mxu0 0.0
    %2718 = vmatpush.msra.mxu0 0.0
    %2719 = vmatpush.msra.mxu0 0.0
    %2720 = vmatpush.msra.mxu0 %v232
    %2721 = vmatpush.msra.mxu0 %v230
    %2722 = vmatpush.msra.mxu0 %v228
    %2723 = vmatpush.msra.mxu0 %v226
    %2724 = vmatpush.msra.mxu0 %v224
    %2725 = vmatmul.f32.gmra.mxu0 %v2383
    %v2726 = vpop.f32.mrf.mxu0
    %v2727 = vadd.f32 0.0, %v2726
    %2728 = vdwg.mxu0
    %2729 = vmatpush.msra.mxu0 0.0
    %2730 = vmatpush.msra.mxu0 0.0
    %2731 = vmatpush.msra.mxu0 0.0
    %2732 = vmatpush.msra.mxu0 0.0
    %2733 = vmatpush.msra.mxu0 0.0
    %2734 = vmatpush.msra.mxu0 0.0
    %2735 = vmatpush.msra.mxu0 0.0
    %2736 = vmatpush.msra.mxu0 0.0
    %2737 = vmatpush.msra.mxu0 0.0
    %2738 = vmatpush.msra.mxu0 0.0
    %2739 = vmatpush.msra.mxu0 0.0
    %2740 = vmatpush.msra.mxu0 %v233
    %2741 = vmatpush.msra.mxu0 %v231
    %2742 = vmatpush.msra.mxu0 %v229
    %2743 = vmatpush.msra.mxu0 %v227
    %2744 = vmatpush.msra.mxu0 %v225
    %2745 = vmatmul.f32.gmra.mxu0 %v2383
    %v2746 = vpop.f32.mrf.mxu0
    %v2747 = vadd.f32 0.0, %v2746
    %2748 = vdwg.mxu0
    %v2751 = vrot.slane %v2727, 6
    %v2752 = vrot.slane %v2747, 6
    %v2755 = vadd.f32 %v199, %v2751
    %v2756 = vadd.f32 %v222, %v2752
    %v2757 = vxor.u32 %v2755, 2147483648
    %v2758 = vmul.f32 %v2757, 1.442695
    %v2759 = vpow.pop %v2758
    %v2760 = vadd.f32 %v2759, 1.0
    %v2761 = vrcp.pop %v2760
    %v2762 = vmul.f32 %v2760, %v2761
    %v2763 = vsub.f32 1.0, %v2762
    %v2764 = vmul.f32 %v2761, %v2763
    %v2765 = vadd.f32 %v2761, %v2764
    %vm2766 = vweird.f32 %v2760
    %vm2767 = vweird.f32 %v2761
    %vm2768 = vmor %vm2766, %vm2767
    %v2769 = vsel %vm2768, %v2761, %v2765
    %v2770 = vand.u32 2147483647, %v2760
    %vm2771 = vcmp.eq.f32.partialorder %v2770, 8.507059e+37
    %v2772 = vand.u32 %v2760, 2147483648
    %v2773 = vor.u32 1.1754944e-38, %v2772
    %v2774 = vsel %vm2771, %v2773, %v2769
    %v2775 = vmul.f32 1.0, %v2774
    %v2776 = vtanh.pop %v2755
    %v2777 = vxor.u32 %v2756, 2147483648
    %v2778 = vmul.f32 %v2777, 1.442695
    %v2779 = vpow.pop %v2778
    %v2780 = vadd.f32 %v2779, 1.0
    %v2781 = vrcp.pop %v2780
    %v2782 = vmul.f32 %v2780, %v2781
    %v2783 = vsub.f32 1.0, %v2782
    %v2784 = vmul.f32 %v2781, %v2783
    %v2785 = vadd.f32 %v2781, %v2784
    %vm2786 = vweird.f32 %v2780
    %vm2787 = vweird.f32 %v2781
    %vm2788 = vmor %vm2786, %vm2787
    %v2789 = vsel %vm2788, %v2781, %v2785
    %v2790 = vand.u32 2147483647, %v2780
    %vm2791 = vcmp.eq.f32.partialorder %v2790, 8.507059e+37
    %v2792 = vand.u32 %v2780, 2147483648
    %v2793 = vor.u32 1.1754944e-38, %v2792
    %v2794 = vsel %vm2791, %v2793, %v2789
    %v2795 = vmul.f32 1.0, %v2794
    %v2797 = vrot.slane %v2328, 6
    %v2799 = vmul.f32 %v2775, %v2797
    %2801 = vrot.lane.b32.xlu0 %v2776, 48
    %v2802 = vpop.permute.xlu0 %2801
    %v2804 = vmul.f32 %v2775, %v2802
    %2806 = vrot.lane.b32.xlu0 %v2804, 40
    %v2807 = vpop.permute.xlu0 %2806
    %v2809 = vadd.f32 %v2799, %v2807
    %v2810 = vtanh.pop %v2809
    %2812 = vrot.lane.b32.xlu0 %v2810, 80
    %v2813 = vpop.permute.xlu0 %2812
    %v2815 = vmul.f32 %v2775, %v2813
    %v2816 = vmul.f32 %v2795, %v2813
    %2817 = vmatpush.msra.mxu0 0.0
    %2818 = vmatpush.msra.mxu0 0.0
    %2819 = vmatpush.msra.mxu0 0.0
    %2820 = vmatpush.msra.mxu0 0.0
    %2821 = vmatpush.msra.mxu0 0.0
    %2822 = vmatpush.msra.mxu0 0.0
    %2823 = vmatpush.msra.mxu0 0.0
    %2824 = vmatpush.msra.mxu0 0.0
    %2825 = vmatpush.msra.mxu0 0.0
    %2826 = vmatpush.msra.mxu0 0.0
    %2827 = vmatpush.msra.mxu0 0.0
    %2828 = vmatpush.msra.mxu0 %v252
    %2829 = vmatpush.msra.mxu0 %v250
    %2830 = vmatpush.msra.mxu0 %v248
    %2831 = vmatpush.msra.mxu0 %v246
    %2832 = vmatpush.msra.mxu0 %v244
    %2833 = vmatmul.f32.gmra.mxu0 %v2560
    %v2834 = vpop.f32.mrf.mxu0
    %v2835 = vadd.f32 0.0, %v2834
    %2836 = vdwg.mxu0
    %2837 = vmatpush.msra.mxu0 0.0
    %2838 = vmatpush.msra.mxu0 0.0
    %2839 = vmatpush.msra.mxu0 0.0
    %2840 = vmatpush.msra.mxu0 0.0
    %2841 = vmatpush.msra.mxu0 0.0
    %2842 = vmatpush.msra.mxu0 0.0
    %2843 = vmatpush.msra.mxu0 0.0
    %2844 = vmatpush.msra.mxu0 0.0
    %2845 = vmatpush.msra.mxu0 0.0
    %2846 = vmatpush.msra.mxu0 0.0
    %2847 = vmatpush.msra.mxu0 0.0
    %2848 = vmatpush.msra.mxu0 %v253
    %2849 = vmatpush.msra.mxu0 %v251
    %2850 = vmatpush.msra.mxu0 %v249
    %2851 = vmatpush.msra.mxu0 %v247
    %2852 = vmatpush.msra.mxu0 %v245
    %2853 = vmatmul.f32.gmra.mxu0 %v2560
    %v2854 = vpop.f32.mrf.mxu0
    %v2855 = vadd.f32 0.0, %v2854
    %2856 = vdwg.mxu0
    %v2859 = vrot.slane %v2815, 2
    %v2860 = vrot.slane %v2816, 2
    %2861 = vrot.lane.b32.xlu0 %v2859, 8
    %v2862 = vpop.permute.xlu0 %2861
    %2863 = vrot.lane.b32.xlu0 %v2860, 8
    %v2864 = vpop.permute.xlu0 %2863
    %v2865 = vsel %vm450, %v2862, %v2864
    %v2866 = vsel %vm301, %v2865, 0
    %2868 = vmatpush.msra.mxu0 0.0
    %2869 = vmatpush.msra.mxu0 0.0
    %2870 = vmatpush.msra.mxu0 0.0
    %2871 = vmatpush.msra.mxu0 0.0
    %2872 = vmatpush.msra.mxu0 0.0
    %2873 = vmatpush.msra.mxu0 0.0
    %2874 = vmatpush.msra.mxu0 0.0
    %2875 = vmatpush.msra.mxu0 0.0
    %2876 = vmatpush.msra.mxu0 0.0
    %2877 = vmatpush.msra.mxu0 0.0
    %2878 = vmatpush.msra.mxu0 0.0
    %2879 = vmatpush.msra.mxu0 %v242
    %2880 = vmatpush.msra.mxu0 %v240
    %2881 = vmatpush.msra.mxu0 %v238
    %2882 = vmatpush.msra.mxu0 %v236
    %2883 = vmatpush.msra.mxu0 %v234
    %2884 = vmatmul.f32.gmra.mxu0 %v2866
    %v2885 = vpop.f32.mrf.mxu0
    %v2886 = vadd.f32 %v2835, %v2885
    %2887 = vdwg.mxu0
    %2888 = vmatpush.msra.mxu0 0.0
    %2889 = vmatpush.msra.mxu0 0.0
    %2890 = vmatpush.msra.mxu0 0.0
    %2891 = vmatpush.msra.mxu0 0.0
    %2892 = vmatpush.msra.mxu0 0.0
    %2893 = vmatpush.msra.mxu0 0.0
    %2894 = vmatpush.msra.mxu0 0.0
    %2895 = vmatpush.msra.mxu0 0.0
    %2896 = vmatpush.msra.mxu0 0.0
    %2897 = vmatpush.msra.mxu0 0.0
    %2898 = vmatpush.msra.mxu0 0.0
    %2899 = vmatpush.msra.mxu0 %v243
    %2900 = vmatpush.msra.mxu0 %v241
    %2901 = vmatpush.msra.mxu0 %v239
    %2902 = vmatpush.msra.mxu0 %v237
    %2903 = vmatpush.msra.mxu0 %v235
    %2904 = vmatmul.f32.gmra.mxu0 %v2866
    %v2905 = vpop.f32.mrf.mxu0
    %v2906 = vadd.f32 %v2855, %v2905
    %2907 = vdwg.mxu0
    %v2908 = vadd.f32 %v2886, %v495
    %v2909 = vadd.f32 %v2906, %v496
    %v2910 = vxor.u32 %v2908, 2147483648
    %v2911 = vmul.f32 %v2910, 1.442695
    %v2912 = vpow.pop %v2911
    %v2913 = vadd.f32 %v2912, 1.0
    %v2914 = vrcp.pop %v2913
    %v2915 = vmul.f32 %v2913, %v2914
    %v2916 = vsub.f32 1.0, %v2915
    %v2917 = vmul.f32 %v2914, %v2916
    %v2918 = vadd.f32 %v2914, %v2917
    %vm2919 = vweird.f32 %v2913
    %vm2920 = vweird.f32 %v2914
    %vm2921 = vmor %vm2919, %vm2920
    %v2922 = vsel %vm2921, %v2914, %v2918
    %v2923 = vand.u32 2147483647, %v2913
    %vm2924 = vcmp.eq.f32.partialorder %v2923, 8.507059e+37
    %v2925 = vand.u32 %v2913, 2147483648
    %v2926 = vor.u32 1.1754944e-38, %v2925
    %v2927 = vsel %vm2924, %v2926, %v2922
    %v2928 = vmul.f32 1.0, %v2927
    %v2929 = vtanh.pop %v2908
    %v2930 = vxor.u32 %v2909, 2147483648
    %v2931 = vmul.f32 %v2930, 1.442695
    %v2932 = vpow.pop %v2931
    %v2933 = vadd.f32 %v2932, 1.0
    %v2934 = vrcp.pop %v2933
    %v2935 = vmul.f32 %v2933, %v2934
    %v2936 = vsub.f32 1.0, %v2935
    %v2937 = vmul.f32 %v2934, %v2936
    %v2938 = vadd.f32 %v2934, %v2937
    %vm2939 = vweird.f32 %v2933
    %vm2940 = vweird.f32 %v2934
    %vm2941 = vmor %vm2939, %vm2940
    %v2942 = vsel %vm2941, %v2934, %v2938
    %v2943 = vand.u32 2147483647, %v2933
    %vm2944 = vcmp.eq.f32.partialorder %v2943, 8.507059e+37
    %v2945 = vand.u32 %v2933, 2147483648
    %v2946 = vor.u32 1.1754944e-38, %v2945
    %v2947 = vsel %vm2944, %v2946, %v2942
    %v2948 = vmul.f32 1.0, %v2947
    %v2949 = vmul.f32 %v2928, %v2476
    %2951 = vrot.lane.b32.xlu0 %v2929, 48
    %v2952 = vpop.permute.xlu0 %2951
    %v2954 = vmul.f32 %v2928, %v2952
    %2956 = vrot.lane.b32.xlu0 %v2954, 40
    %v2957 = vpop.permute.xlu0 %2956
    %v2959 = vadd.f32 %v2949, %v2957
    %v2960 = vtanh.pop %v2959
    %2962 = vrot.lane.b32.xlu0 %v2960, 80
    %v2963 = vpop.permute.xlu0 %2962
    %v2965 = vmul.f32 %v2928, %v2963
    %v2966 = vmul.f32 %v2948, %v2963
    %2969 = vrot.lane.b32.xlu0 %v2707, 16
    %v2970 = vpop.permute.xlu0 %2969
    %2971 = vrot.lane.b32.xlu0 %v2708, 16
    %v2972 = vpop.permute.xlu0 %2971
    %v2973 = vsel %vm171, %v2970, %v2972
    %v2974 = vsel %vm558, %v2973, 0
    %2976 = vmatpush.msra.mxu0 0.0
    %2977 = vmatpush.msra.mxu0 0.0
    %2978 = vmatpush.msra.mxu0 0.0
    %2979 = vmatpush.msra.mxu0 0.0
    %2980 = vmatpush.msra.mxu0 0.0
    %2981 = vmatpush.msra.mxu0 0.0
    %2982 = vmatpush.msra.mxu0 %v297
    %2983 = vmatpush.msra.mxu0 %v294
    %2984 = vmatpush.msra.mxu0 %v291
    %2985 = vmatpush.msra.mxu0 %v288
    %2986 = vmatpush.msra.mxu0 %v285
    %2987 = vmatpush.msra.mxu0 %v282
    %2988 = vmatpush.msra.mxu0 %v279
    %2989 = vmatpush.msra.mxu0 %v276
    %2990 = vmatpush.msra.mxu0 %v273
    %2991 = vmatpush.msra.mxu0 %v270
    %2992 = vmatmul.f32.gmra.mxu0 %v2974
    %v2993 = vpop.f32.mrf.mxu0
    %v2994 = vadd.f32 0.0, %v2993
    %2995 = vdwg.mxu0
    %2996 = vmatpush.msra.mxu0 0.0
    %2997 = vmatpush.msra.mxu0 0.0
    %2998 = vmatpush.msra.mxu0 0.0
    %2999 = vmatpush.msra.mxu0 0.0
    %3000 = vmatpush.msra.mxu0 0.0
    %3001 = vmatpush.msra.mxu0 0.0
    %3002 = vmatpush.msra.mxu0 %v298
    %3003 = vmatpush.msra.mxu0 %v295
    %3004 = vmatpush.msra.mxu0 %v292
    %3005 = vmatpush.msra.mxu0 %v289
    %3006 = vmatpush.msra.mxu0 %v286
    %3007 = vmatpush.msra.mxu0 %v283
    %3008 = vmatpush.msra.mxu0 %v280
    %3009 = vmatpush.msra.mxu0 %v277
    %3010 = vmatpush.msra.mxu0 %v274
    %3011 = vmatpush.msra.mxu0 %v271
    %3012 = vmatmul.f32.gmra.mxu0 %v2974
    %v3013 = vpop.f32.mrf.mxu0
    %v3014 = vadd.f32 0.0, %v3013
    %3015 = vdwg.mxu0
    %3016 = vmatpush.msra.mxu0 0.0
    %3017 = vmatpush.msra.mxu0 0.0
    %3018 = vmatpush.msra.mxu0 0.0
    %3019 = vmatpush.msra.mxu0 0.0
    %3020 = vmatpush.msra.mxu0 0.0
    %3021 = vmatpush.msra.mxu0 0.0
    %3022 = vmatpush.msra.mxu0 %v299
    %3023 = vmatpush.msra.mxu0 %v296
    %3024 = vmatpush.msra.mxu0 %v293
    %3025 = vmatpush.msra.mxu0 %v290
    %3026 = vmatpush.msra.mxu0 %v287
    %3027 = vmatpush.msra.mxu0 %v284
    %3028 = vmatpush.msra.mxu0 %v281
    %3029 = vmatpush.msra.mxu0 %v278
    %3030 = vmatpush.msra.mxu0 %v275
    %3031 = vmatpush.msra.mxu0 %v272
    %3032 = vmatmul.f32.gmra.mxu0 %v2974
    %v3033 = vpop.f32.mrf.mxu0
    %v3034 = vadd.f32 0.0, %v3033
    %3035 = vdwg.mxu0
    %3038 = vrot.lane.b32.xlu0 %v2965, 8
    %v3039 = vpop.permute.xlu0 %3038
    %3040 = vrot.lane.b32.xlu0 %v2966, 8
    %v3041 = vpop.permute.xlu0 %3040
    %v3042 = vsel %vm450, %v3039, %v3041
    %v3043 = vsel %vm301, %v3042, 0
    %3045 = vmatpush.msra.mxu0 0.0
    %3046 = vmatpush.msra.mxu0 0.0
    %3047 = vmatpush.msra.mxu0 0.0
    %3048 = vmatpush.msra.mxu0 0.0
    %3049 = vmatpush.msra.mxu0 0.0
    %3050 = vmatpush.msra.mxu0 0.0
    %3051 = vmatpush.msra.mxu0 0.0
    %3052 = vmatpush.msra.mxu0 0.0
    %3053 = vmatpush.msra.mxu0 0.0
    %3054 = vmatpush.msra.mxu0 0.0
    %3055 = vmatpush.msra.mxu0 0.0
    %3056 = vmatpush.msra.mxu0 %v267
    %3057 = vmatpush.msra.mxu0 %v264
    %3058 = vmatpush.msra.mxu0 %v261
    %3059 = vmatpush.msra.mxu0 %v258
    %3060 = vmatpush.msra.mxu0 %v255
    %3061 = vmatmul.f32.gmra.mxu0 %v3043
    %v3062 = vpop.f32.mrf.mxu0
    %v3063 = vadd.f32 %v2994, %v3062
    %3064 = vdwg.mxu0
    %3065 = vmatpush.msra.mxu0 0.0
    %3066 = vmatpush.msra.mxu0 0.0
    %3067 = vmatpush.msra.mxu0 0.0
    %3068 = vmatpush.msra.mxu0 0.0
    %3069 = vmatpush.msra.mxu0 0.0
    %3070 = vmatpush.msra.mxu0 0.0
    %3071 = vmatpush.msra.mxu0 0.0
    %3072 = vmatpush.msra.mxu0 0.0
    %3073 = vmatpush.msra.mxu0 0.0
    %3074 = vmatpush.msra.mxu0 0.0
    %3075 = vmatpush.msra.mxu0 0.0
    %3076 = vmatpush.msra.mxu0 %v268
    %3077 = vmatpush.msra.mxu0 %v265
    %3078 = vmatpush.msra.mxu0 %v262
    %3079 = vmatpush.msra.mxu0 %v259
    %3080 = vmatpush.msra.mxu0 %v256
    %3081 = vmatmul.f32.gmra.mxu0 %v3043
    %v3082 = vpop.f32.mrf.mxu0
    %v3083 = vadd.f32 %v3014, %v3082
    %3084 = vdwg.mxu0
    %3085 = vmatpush.msra.mxu0 0.0
    %3086 = vmatpush.msra.mxu0 0.0
    %3087 = vmatpush.msra.mxu0 0.0
    %3088 = vmatpush.msra.mxu0 0.0
    %3089 = vmatpush.msra.mxu0 0.0
    %3090 = vmatpush.msra.mxu0 0.0
    %3091 = vmatpush.msra.mxu0 0.0
    %3092 = vmatpush.msra.mxu0 0.0
    %3093 = vmatpush.msra.mxu0 0.0
    %3094 = vmatpush.msra.mxu0 0.0
    %3095 = vmatpush.msra.mxu0 0.0
    %3096 = vmatpush.msra.mxu0 %v269
    %3097 = vmatpush.msra.mxu0 %v266
    %3098 = vmatpush.msra.mxu0 %v263
    %3099 = vmatpush.msra.mxu0 %v260
    %3100 = vmatpush.msra.mxu0 %v257
    %3101 = vmatmul.f32.gmra.mxu0 %v3043
    %v3102 = vpop.f32.mrf.mxu0
    %v3103 = vadd.f32 %v3034, %v3102
    %3104 = vdwg.mxu0
    %v3105 = vadd.f32 %v3063, %v691
    %v3106 = vadd.f32 %v3083, %v692
    %v3107 = vadd.f32 %v3103, %v693
    %v3108 = vxor.u32 %v3105, 2147483648
    %v3109 = vmul.f32 %v3108, 1.442695
    %v3110 = vpow.pop %v3109
    %v3111 = vadd.f32 %v3110, 1.0
    %v3112 = vrcp.pop %v3111
    %v3113 = vmul.f32 %v3111, %v3112
    %v3114 = vsub.f32 1.0, %v3113
    %v3115 = vmul.f32 %v3112, %v3114
    %v3116 = vadd.f32 %v3112, %v3115
    %vm3117 = vweird.f32 %v3111
    %vm3118 = vweird.f32 %v3112
    %vm3119 = vmor %vm3117, %vm3118
    %v3120 = vsel %vm3119, %v3112, %v3116
    %v3121 = vand.u32 2147483647, %v3111
    %vm3122 = vcmp.eq.f32.partialorder %v3121, 8.507059e+37
    %v3123 = vand.u32 %v3111, 2147483648
    %v3124 = vor.u32 1.1754944e-38, %v3123
    %v3125 = vsel %vm3122, %v3124, %v3120
    %v3126 = vmul.f32 1.0, %v3125
    %v3127 = vxor.u32 %v3106, 2147483648
    %v3128 = vmul.f32 %v3127, 1.442695
    %v3129 = vpow.pop %v3128
    %v3130 = vadd.f32 %v3129, 1.0
    %v3131 = vrcp.pop %v3130
    %v3132 = vmul.f32 %v3130, %v3131
    %v3133 = vsub.f32 1.0, %v3132
    %v3134 = vmul.f32 %v3131, %v3133
    %v3135 = vadd.f32 %v3131, %v3134
    %vm3136 = vweird.f32 %v3130
    %vm3137 = vweird.f32 %v3131
    %vm3138 = vmor %vm3136, %vm3137
    %v3139 = vsel %vm3138, %v3131, %v3135
    %v3140 = vand.u32 2147483647, %v3130
    %vm3141 = vcmp.eq.f32.partialorder %v3140, 8.507059e+37
    %v3142 = vand.u32 %v3130, 2147483648
    %v3143 = vor.u32 1.1754944e-38, %v3142
    %v3144 = vsel %vm3141, %v3143, %v3139
    %v3145 = vmul.f32 1.0, %v3144
    %v3146 = vtanh.pop %v3106
    %v3147 = vxor.u32 %v3107, 2147483648
    %v3148 = vmul.f32 %v3147, 1.442695
    %v3149 = vpow.pop %v3148
    %v3150 = vadd.f32 %v3149, 1.0
    %v3151 = vrcp.pop %v3150
    %v3152 = vmul.f32 %v3150, %v3151
    %v3153 = vsub.f32 1.0, %v3152
    %v3154 = vmul.f32 %v3151, %v3153
    %v3155 = vadd.f32 %v3151, %v3154
    %vm3156 = vweird.f32 %v3150
    %vm3157 = vweird.f32 %v3151
    %vm3158 = vmor %vm3156, %vm3157
    %v3159 = vsel %vm3158, %v3151, %v3155
    %v3160 = vand.u32 2147483647, %v3150
    %vm3161 = vcmp.eq.f32.partialorder %v3160, 8.507059e+37
    %v3162 = vand.u32 %v3150, 2147483648
    %v3163 = vor.u32 1.1754944e-38, %v3162
    %v3164 = vsel %vm3161, %v3163, %v3159
    %v3165 = vmul.f32 1.0, %v3164
    %v3166 = vmul.f32 %v3126, %v2694
    %v3167 = vmul.f32 %v3145, %v2695
    %3169 = vrot.lane.b32.xlu0 %v3146, 96
    %v3170 = vpop.permute.xlu0 %3169
    %v3172 = vmul.f32 %v3126, %v3170
    %3174 = vrot.lane.b32.xlu0 %v3172, 80
    %v3175 = vpop.permute.xlu0 %3174
    %v3177 = vadd.f32 %v3166, %v3175
    %v3178 = vadd.f32 %v3167, %v3175
    %v3179 = vtanh.pop %v3177
    %v3180 = vtanh.pop %v3178
    %3183 = vrot.lane.b32.xlu0 %v3179, 32
    %v3184 = vpop.permute.xlu0 %3183
    %3185 = vrot.lane.b32.xlu0 %v3180, 32
    %v3186 = vpop.permute.xlu0 %3185
    %v3187 = vsel %vm779, %v3184, %v3186
    %v3190 = vmul.f32 %v3145, %v3184
    %v3191 = vmul.f32 %v3165, %v3187
    %3192 = vmatpush.msra.mxu0 0.0
    %3193 = vmatpush.msra.mxu0 0.0
    %3194 = vmatpush.msra.mxu0 0.0
    %3195 = vmatpush.msra.mxu0 0.0
    %3196 = vmatpush.msra.mxu0 0.0
    %3197 = vmatpush.msra.mxu0 0.0
    %3198 = vmatpush.msra.mxu0 0.0
    %3199 = vmatpush.msra.mxu0 0.0
    %3200 = vmatpush.msra.mxu0 0.0
    %3201 = vmatpush.msra.mxu0 0.0
    %3202 = vmatpush.msra.mxu0 0.0
    %3203 = vmatpush.msra.mxu0 %v232
    %3204 = vmatpush.msra.mxu0 %v230
    %3205 = vmatpush.msra.mxu0 %v228
    %3206 = vmatpush.msra.mxu0 %v226
    %3207 = vmatpush.msra.mxu0 %v224
    %3208 = vmatmul.f32.gmra.mxu0 %v2866
    %v3209 = vpop.f32.mrf.mxu0
    %v3210 = vadd.f32 0.0, %v3209
    %3211 = vdwg.mxu0
    %3212 = vmatpush.msra.mxu0 0.0
    %3213 = vmatpush.msra.mxu0 0.0
    %3214 = vmatpush.msra.mxu0 0.0
    %3215 = vmatpush.msra.mxu0 0.0
    %3216 = vmatpush.msra.mxu0 0.0
    %3217 = vmatpush.msra.mxu0 0.0
    %3218 = vmatpush.msra.mxu0 0.0
    %3219 = vmatpush.msra.mxu0 0.0
    %3220 = vmatpush.msra.mxu0 0.0
    %3221 = vmatpush.msra.mxu0 0.0
    %3222 = vmatpush.msra.mxu0 0.0
    %3223 = vmatpush.msra.mxu0 %v233
    %3224 = vmatpush.msra.mxu0 %v231
    %3225 = vmatpush.msra.mxu0 %v229
    %3226 = vmatpush.msra.mxu0 %v227
    %3227 = vmatpush.msra.mxu0 %v225
    %3228 = vmatmul.f32.gmra.mxu0 %v2866
    %v3229 = vpop.f32.mrf.mxu0
    %v3230 = vadd.f32 0.0, %v3229
    %3231 = vdwg.mxu0
    %v3234 = vrot.slane %v3210, 4
    %v3235 = vrot.slane %v3230, 4
    %v3238 = vadd.f32 %v199, %v3234
    %v3239 = vadd.f32 %v222, %v3235
    %v3240 = vxor.u32 %v3238, 2147483648
    %v3241 = vmul.f32 %v3240, 1.442695
    %v3242 = vpow.pop %v3241
    %v3243 = vadd.f32 %v3242, 1.0
    %v3244 = vrcp.pop %v3243
    %v3245 = vmul.f32 %v3243, %v3244
    %v3246 = vsub.f32 1.0, %v3245
    %v3247 = vmul.f32 %v3244, %v3246
    %v3248 = vadd.f32 %v3244, %v3247
    %vm3249 = vweird.f32 %v3243
    %vm3250 = vweird.f32 %v3244
    %vm3251 = vmor %vm3249, %vm3250
    %v3252 = vsel %vm3251, %v3244, %v3248
    %v3253 = vand.u32 2147483647, %v3243
    %vm3254 = vcmp.eq.f32.partialorder %v3253, 8.507059e+37
    %v3255 = vand.u32 %v3243, 2147483648
    %v3256 = vor.u32 1.1754944e-38, %v3255
    %v3257 = vsel %vm3254, %v3256, %v3252
    %v3258 = vmul.f32 1.0, %v3257
    %v3259 = vtanh.pop %v3238
    %v3260 = vxor.u32 %v3239, 2147483648
    %v3261 = vmul.f32 %v3260, 1.442695
    %v3262 = vpow.pop %v3261
    %v3263 = vadd.f32 %v3262, 1.0
    %v3264 = vrcp.pop %v3263
    %v3265 = vmul.f32 %v3263, %v3264
    %v3266 = vsub.f32 1.0, %v3265
    %v3267 = vmul.f32 %v3264, %v3266
    %v3268 = vadd.f32 %v3264, %v3267
    %vm3269 = vweird.f32 %v3263
    %vm3270 = vweird.f32 %v3264
    %vm3271 = vmor %vm3269, %vm3270
    %v3272 = vsel %vm3271, %v3264, %v3268
    %v3273 = vand.u32 2147483647, %v3263
    %vm3274 = vcmp.eq.f32.partialorder %v3273, 8.507059e+37
    %v3275 = vand.u32 %v3263, 2147483648
    %v3276 = vor.u32 1.1754944e-38, %v3275
    %v3277 = vsel %vm3274, %v3276, %v3272
    %v3278 = vmul.f32 1.0, %v3277
    %v3280 = vrot.slane %v2809, 6
    %v3282 = vmul.f32 %v3258, %v3280
    %3284 = vrot.lane.b32.xlu0 %v3259, 48
    %v3285 = vpop.permute.xlu0 %3284
    %v3287 = vmul.f32 %v3258, %v3285
    %3289 = vrot.lane.b32.xlu0 %v3287, 40
    %v3290 = vpop.permute.xlu0 %3289
    %v3292 = vadd.f32 %v3282, %v3290
    %v3293 = vtanh.pop %v3292
    %3295 = vrot.lane.b32.xlu0 %v3293, 80
    %v3296 = vpop.permute.xlu0 %3295
    %v3298 = vmul.f32 %v3258, %v3296
    %v3299 = vmul.f32 %v3278, %v3296
    %3300 = vmatpush.msra.mxu0 0.0
    %3301 = vmatpush.msra.mxu0 0.0
    %3302 = vmatpush.msra.mxu0 0.0
    %3303 = vmatpush.msra.mxu0 0.0
    %3304 = vmatpush.msra.mxu0 0.0
    %3305 = vmatpush.msra.mxu0 0.0
    %3306 = vmatpush.msra.mxu0 0.0
    %3307 = vmatpush.msra.mxu0 0.0
    %3308 = vmatpush.msra.mxu0 0.0
    %3309 = vmatpush.msra.mxu0 0.0
    %3310 = vmatpush.msra.mxu0 0.0
    %3311 = vmatpush.msra.mxu0 %v252
    %3312 = vmatpush.msra.mxu0 %v250
    %3313 = vmatpush.msra.mxu0 %v248
    %3314 = vmatpush.msra.mxu0 %v246
    %3315 = vmatpush.msra.mxu0 %v244
    %3316 = vmatmul.f32.gmra.mxu0 %v3043
    %v3317 = vpop.f32.mrf.mxu0
    %v3318 = vadd.f32 0.0, %v3317
    %3319 = vdwg.mxu0
    %3320 = vmatpush.msra.mxu0 0.0
    %3321 = vmatpush.msra.mxu0 0.0
    %3322 = vmatpush.msra.mxu0 0.0
    %3323 = vmatpush.msra.mxu0 0.0
    %3324 = vmatpush.msra.mxu0 0.0
    %3325 = vmatpush.msra.mxu0 0.0
    %3326 = vmatpush.msra.mxu0 0.0
    %3327 = vmatpush.msra.mxu0 0.0
    %3328 = vmatpush.msra.mxu0 0.0
    %3329 = vmatpush.msra.mxu0 0.0
    %3330 = vmatpush.msra.mxu0 0.0
    %3331 = vmatpush.msra.mxu0 %v253
    %3332 = vmatpush.msra.mxu0 %v251
    %3333 = vmatpush.msra.mxu0 %v249
    %3334 = vmatpush.msra.mxu0 %v247
    %3335 = vmatpush.msra.mxu0 %v245
    %3336 = vmatmul.f32.gmra.mxu0 %v3043
    %v3337 = vpop.f32.mrf.mxu0
    %v3338 = vadd.f32 0.0, %v3337
    %3339 = vdwg.mxu0
    %v3342 = vrot.slane %v3298, 4
    %v3343 = vrot.slane %v3299, 4
    %3344 = vrot.lane.b32.xlu0 %v3342, 8
    %v3345 = vpop.permute.xlu0 %3344
    %3346 = vrot.lane.b32.xlu0 %v3343, 8
    %v3347 = vpop.permute.xlu0 %3346
    %v3348 = vsel %vm450, %v3345, %v3347
    %v3349 = vsel %vm301, %v3348, 0
    %3351 = vmatpush.msra.mxu0 0.0
    %3352 = vmatpush.msra.mxu0 0.0
    %3353 = vmatpush.msra.mxu0 0.0
    %3354 = vmatpush.msra.mxu0 0.0
    %3355 = vmatpush.msra.mxu0 0.0
    %3356 = vmatpush.msra.mxu0 0.0
    %3357 = vmatpush.msra.mxu0 0.0
    %3358 = vmatpush.msra.mxu0 0.0
    %3359 = vmatpush.msra.mxu0 0.0
    %3360 = vmatpush.msra.mxu0 0.0
    %3361 = vmatpush.msra.mxu0 0.0
    %3362 = vmatpush.msra.mxu0 %v242
    %3363 = vmatpush.msra.mxu0 %v240
    %3364 = vmatpush.msra.mxu0 %v238
    %3365 = vmatpush.msra.mxu0 %v236
    %3366 = vmatpush.msra.mxu0 %v234
    %3367 = vmatmul.f32.gmra.mxu0 %v3349
    %v3368 = vpop.f32.mrf.mxu0
    %v3369 = vadd.f32 %v3318, %v3368
    %3370 = vdwg.mxu0
    %3371 = vmatpush.msra.mxu0 0.0
    %3372 = vmatpush.msra.mxu0 0.0
    %3373 = vmatpush.msra.mxu0 0.0
    %3374 = vmatpush.msra.mxu0 0.0
    %3375 = vmatpush.msra.mxu0 0.0
    %3376 = vmatpush.msra.mxu0 0.0
    %3377 = vmatpush.msra.mxu0 0.0
    %3378 = vmatpush.msra.mxu0 0.0
    %3379 = vmatpush.msra.mxu0 0.0
    %3380 = vmatpush.msra.mxu0 0.0
    %3381 = vmatpush.msra.mxu0 0.0
    %3382 = vmatpush.msra.mxu0 %v243
    %3383 = vmatpush.msra.mxu0 %v241
    %3384 = vmatpush.msra.mxu0 %v239
    %3385 = vmatpush.msra.mxu0 %v237
    %3386 = vmatpush.msra.mxu0 %v235
    %3387 = vmatmul.f32.gmra.mxu0 %v3349
    %v3388 = vpop.f32.mrf.mxu0
    %v3389 = vadd.f32 %v3338, %v3388
    %3390 = vdwg.mxu0
    %v3391 = vadd.f32 %v3369, %v495
    %v3392 = vadd.f32 %v3389, %v496
    %v3393 = vxor.u32 %v3391, 2147483648
    %v3394 = vmul.f32 %v3393, 1.442695
    %v3395 = vpow.pop %v3394
    %v3396 = vadd.f32 %v3395, 1.0
    %v3397 = vrcp.pop %v3396
    %v3398 = vmul.f32 %v3396, %v3397
    %v3399 = vsub.f32 1.0, %v3398
    %v3400 = vmul.f32 %v3397, %v3399
    %v3401 = vadd.f32 %v3397, %v3400
    %vm3402 = vweird.f32 %v3396
    %vm3403 = vweird.f32 %v3397
    %vm3404 = vmor %vm3402, %vm3403
    %v3405 = vsel %vm3404, %v3397, %v3401
    %v3406 = vand.u32 2147483647, %v3396
    %vm3407 = vcmp.eq.f32.partialorder %v3406, 8.507059e+37
    %v3408 = vand.u32 %v3396, 2147483648
    %v3409 = vor.u32 1.1754944e-38, %v3408
    %v3410 = vsel %vm3407, %v3409, %v3405
    %v3411 = vmul.f32 1.0, %v3410
    %v3412 = vtanh.pop %v3391
    %v3413 = vxor.u32 %v3392, 2147483648
    %v3414 = vmul.f32 %v3413, 1.442695
    %v3415 = vpow.pop %v3414
    %v3416 = vadd.f32 %v3415, 1.0
    %v3417 = vrcp.pop %v3416
    %v3418 = vmul.f32 %v3416, %v3417
    %v3419 = vsub.f32 1.0, %v3418
    %v3420 = vmul.f32 %v3417, %v3419
    %v3421 = vadd.f32 %v3417, %v3420
    %vm3422 = vweird.f32 %v3416
    %vm3423 = vweird.f32 %v3417
    %vm3424 = vmor %vm3422, %vm3423
    %v3425 = vsel %vm3424, %v3417, %v3421
    %v3426 = vand.u32 2147483647, %v3416
    %vm3427 = vcmp.eq.f32.partialorder %v3426, 8.507059e+37
    %v3428 = vand.u32 %v3416, 2147483648
    %v3429 = vor.u32 1.1754944e-38, %v3428
    %v3430 = vsel %vm3427, %v3429, %v3425
    %v3431 = vmul.f32 1.0, %v3430
    %v3432 = vmul.f32 %v3411, %v2959
    %3434 = vrot.lane.b32.xlu0 %v3412, 48
    %v3435 = vpop.permute.xlu0 %3434
    %v3437 = vmul.f32 %v3411, %v3435
    %3439 = vrot.lane.b32.xlu0 %v3437, 40
    %v3440 = vpop.permute.xlu0 %3439
    %v3442 = vadd.f32 %v3432, %v3440
    %v3443 = vtanh.pop %v3442
    %3445 = vrot.lane.b32.xlu0 %v3443, 80
    %v3446 = vpop.permute.xlu0 %3445
    %v3448 = vmul.f32 %v3411, %v3446
    %v3449 = vmul.f32 %v3431, %v3446
    %3452 = vrot.lane.b32.xlu0 %v3190, 16
    %v3453 = vpop.permute.xlu0 %3452
    %3454 = vrot.lane.b32.xlu0 %v3191, 16
    %v3455 = vpop.permute.xlu0 %3454
    %v3456 = vsel %vm171, %v3453, %v3455
    %v3457 = vsel %vm558, %v3456, 0
    %3459 = vmatpush.msra.mxu0 0.0
    %3460 = vmatpush.msra.mxu0 0.0
    %3461 = vmatpush.msra.mxu0 0.0
    %3462 = vmatpush.msra.mxu0 0.0
    %3463 = vmatpush.msra.mxu0 0.0
    %3464 = vmatpush.msra.mxu0 0.0
    %3465 = vmatpush.msra.mxu0 %v297
    %3466 = vmatpush.msra.mxu0 %v294
    %3467 = vmatpush.msra.mxu0 %v291
    %3468 = vmatpush.msra.mxu0 %v288
    %3469 = vmatpush.msra.mxu0 %v285
    %3470 = vmatpush.msra.mxu0 %v282
    %3471 = vmatpush.msra.mxu0 %v279
    %3472 = vmatpush.msra.mxu0 %v276
    %3473 = vmatpush.msra.mxu0 %v273
    %3474 = vmatpush.msra.mxu0 %v270
    %3475 = vmatmul.f32.gmra.mxu0 %v3457
    %v3476 = vpop.f32.mrf.mxu0
    %v3477 = vadd.f32 0.0, %v3476
    %3478 = vdwg.mxu0
    %3479 = vmatpush.msra.mxu0 0.0
    %3480 = vmatpush.msra.mxu0 0.0
    %3481 = vmatpush.msra.mxu0 0.0
    %3482 = vmatpush.msra.mxu0 0.0
    %3483 = vmatpush.msra.mxu0 0.0
    %3484 = vmatpush.msra.mxu0 0.0
    %3485 = vmatpush.msra.mxu0 %v298
    %3486 = vmatpush.msra.mxu0 %v295
    %3487 = vmatpush.msra.mxu0 %v292
    %3488 = vmatpush.msra.mxu0 %v289
    %3489 = vmatpush.msra.mxu0 %v286
    %3490 = vmatpush.msra.mxu0 %v283
    %3491 = vmatpush.msra.mxu0 %v280
    %3492 = vmatpush.msra.mxu0 %v277
    %3493 = vmatpush.msra.mxu0 %v274
    %3494 = vmatpush.msra.mxu0 %v271
    %3495 = vmatmul.f32.gmra.mxu0 %v3457
    %v3496 = vpop.f32.mrf.mxu0
    %v3497 = vadd.f32 0.0, %v3496
    %3498 = vdwg.mxu0
    %3499 = vmatpush.msra.mxu0 0.0
    %3500 = vmatpush.msra.mxu0 0.0
    %3501 = vmatpush.msra.mxu0 0.0
    %3502 = vmatpush.msra.mxu0 0.0
    %3503 = vmatpush.msra.mxu0 0.0
    %3504 = vmatpush.msra.mxu0 0.0
    %3505 = vmatpush.msra.mxu0 %v299
    %3506 = vmatpush.msra.mxu0 %v296
    %3507 = vmatpush.msra.mxu0 %v293
    %3508 = vmatpush.msra.mxu0 %v290
    %3509 = vmatpush.msra.mxu0 %v287
    %3510 = vmatpush.msra.mxu0 %v284
    %3511 = vmatpush.msra.mxu0 %v281
    %3512 = vmatpush.msra.mxu0 %v278
    %3513 = vmatpush.msra.mxu0 %v275
    %3514 = vmatpush.msra.mxu0 %v272
    %3515 = vmatmul.f32.gmra.mxu0 %v3457
    %v3516 = vpop.f32.mrf.mxu0
    %v3517 = vadd.f32 0.0, %v3516
    %3518 = vdwg.mxu0
    %3521 = vrot.lane.b32.xlu0 %v3448, 8
    %v3522 = vpop.permute.xlu0 %3521
    %3523 = vrot.lane.b32.xlu0 %v3449, 8
    %v3524 = vpop.permute.xlu0 %3523
    %v3525 = vsel %vm450, %v3522, %v3524
    %v3526 = vsel %vm301, %v3525, 0
    %3528 = vmatpush.msra.mxu0 0.0
    %3529 = vmatpush.msra.mxu0 0.0
    %3530 = vmatpush.msra.mxu0 0.0
    %3531 = vmatpush.msra.mxu0 0.0
    %3532 = vmatpush.msra.mxu0 0.0
    %3533 = vmatpush.msra.mxu0 0.0
    %3534 = vmatpush.msra.mxu0 0.0
    %3535 = vmatpush.msra.mxu0 0.0
    %3536 = vmatpush.msra.mxu0 0.0
    %3537 = vmatpush.msra.mxu0 0.0
    %3538 = vmatpush.msra.mxu0 0.0
    %3539 = vmatpush.msra.mxu0 %v267
    %3540 = vmatpush.msra.mxu0 %v264
    %3541 = vmatpush.msra.mxu0 %v261
    %3542 = vmatpush.msra.mxu0 %v258
    %3543 = vmatpush.msra.mxu0 %v255
    %3544 = vmatmul.f32.gmra.mxu0 %v3526
    %v3545 = vpop.f32.mrf.mxu0
    %v3546 = vadd.f32 %v3477, %v3545
    %3547 = vdwg.mxu0
    %3548 = vmatpush.msra.mxu0 0.0
    %3549 = vmatpush.msra.mxu0 0.0
    %3550 = vmatpush.msra.mxu0 0.0
    %3551 = vmatpush.msra.mxu0 0.0
    %3552 = vmatpush.msra.mxu0 0.0
    %3553 = vmatpush.msra.mxu0 0.0
    %3554 = vmatpush.msra.mxu0 0.0
    %3555 = vmatpush.msra.mxu0 0.0
    %3556 = vmatpush.msra.mxu0 0.0
    %3557 = vmatpush.msra.mxu0 0.0
    %3558 = vmatpush.msra.mxu0 0.0
    %3559 = vmatpush.msra.mxu0 %v268
    %3560 = vmatpush.msra.mxu0 %v265
    %3561 = vmatpush.msra.mxu0 %v262
    %3562 = vmatpush.msra.mxu0 %v259
    %3563 = vmatpush.msra.mxu0 %v256
    %3564 = vmatmul.f32.gmra.mxu0 %v3526
    %v3565 = vpop.f32.mrf.mxu0
    %v3566 = vadd.f32 %v3497, %v3565
    %3567 = vdwg.mxu0
    %3568 = vmatpush.msra.mxu0 0.0
    %3569 = vmatpush.msra.mxu0 0.0
    %3570 = vmatpush.msra.mxu0 0.0
    %3571 = vmatpush.msra.mxu0 0.0
    %3572 = vmatpush.msra.mxu0 0.0
    %3573 = vmatpush.msra.mxu0 0.0
    %3574 = vmatpush.msra.mxu0 0.0
    %3575 = vmatpush.msra.mxu0 0.0
    %3576 = vmatpush.msra.mxu0 0.0
    %3577 = vmatpush.msra.mxu0 0.0
    %3578 = vmatpush.msra.mxu0 0.0
    %3579 = vmatpush.msra.mxu0 %v269
    %3580 = vmatpush.msra.mxu0 %v266
    %3581 = vmatpush.msra.mxu0 %v263
    %3582 = vmatpush.msra.mxu0 %v260
    %3583 = vmatpush.msra.mxu0 %v257
    %3584 = vmatmul.f32.gmra.mxu0 %v3526
    %v3585 = vpop.f32.mrf.mxu0
    %v3586 = vadd.f32 %v3517, %v3585
    %3587 = vdwg.mxu0
    %v3588 = vadd.f32 %v3546, %v691
    %v3589 = vadd.f32 %v3566, %v692
    %v3590 = vadd.f32 %v3586, %v693
    %v3591 = vxor.u32 %v3588, 2147483648
    %v3592 = vmul.f32 %v3591, 1.442695
    %v3593 = vpow.pop %v3592
    %v3594 = vadd.f32 %v3593, 1.0
    %v3595 = vrcp.pop %v3594
    %v3596 = vmul.f32 %v3594, %v3595
    %v3597 = vsub.f32 1.0, %v3596
    %v3598 = vmul.f32 %v3595, %v3597
    %v3599 = vadd.f32 %v3595, %v3598
    %vm3600 = vweird.f32 %v3594
    %vm3601 = vweird.f32 %v3595
    %vm3602 = vmor %vm3600, %vm3601
    %v3603 = vsel %vm3602, %v3595, %v3599
    %v3604 = vand.u32 2147483647, %v3594
    %vm3605 = vcmp.eq.f32.partialorder %v3604, 8.507059e+37
    %v3606 = vand.u32 %v3594, 2147483648
    %v3607 = vor.u32 1.1754944e-38, %v3606
    %v3608 = vsel %vm3605, %v3607, %v3603
    %v3609 = vmul.f32 1.0, %v3608
    %v3610 = vxor.u32 %v3589, 2147483648
    %v3611 = vmul.f32 %v3610, 1.442695
    %v3612 = vpow.pop %v3611
    %v3613 = vadd.f32 %v3612, 1.0
    %v3614 = vrcp.pop %v3613
    %v3615 = vmul.f32 %v3613, %v3614
    %v3616 = vsub.f32 1.0, %v3615
    %v3617 = vmul.f32 %v3614, %v3616
    %v3618 = vadd.f32 %v3614, %v3617
    %vm3619 = vweird.f32 %v3613
    %vm3620 = vweird.f32 %v3614
    %vm3621 = vmor %vm3619, %vm3620
    %v3622 = vsel %vm3621, %v3614, %v3618
    %v3623 = vand.u32 2147483647, %v3613
    %vm3624 = vcmp.eq.f32.partialorder %v3623, 8.507059e+37
    %v3625 = vand.u32 %v3613, 2147483648
    %v3626 = vor.u32 1.1754944e-38, %v3625
    %v3627 = vsel %vm3624, %v3626, %v3622
    %v3628 = vmul.f32 1.0, %v3627
    %v3629 = vtanh.pop %v3589
    %v3630 = vxor.u32 %v3590, 2147483648
    %v3631 = vmul.f32 %v3630, 1.442695
    %v3632 = vpow.pop %v3631
    %v3633 = vadd.f32 %v3632, 1.0
    %v3634 = vrcp.pop %v3633
    %v3635 = vmul.f32 %v3633, %v3634
    %v3636 = vsub.f32 1.0, %v3635
    %v3637 = vmul.f32 %v3634, %v3636
    %v3638 = vadd.f32 %v3634, %v3637
    %vm3639 = vweird.f32 %v3633
    %vm3640 = vweird.f32 %v3634
    %vm3641 = vmor %vm3639, %vm3640
    %v3642 = vsel %vm3641, %v3634, %v3638
    %v3643 = vand.u32 2147483647, %v3633
    %vm3644 = vcmp.eq.f32.partialorder %v3643, 8.507059e+37
    %v3645 = vand.u32 %v3633, 2147483648
    %v3646 = vor.u32 1.1754944e-38, %v3645
    %v3647 = vsel %vm3644, %v3646, %v3642
    %v3648 = vmul.f32 1.0, %v3647
    %v3649 = vmul.f32 %v3609, %v3177
    %v3650 = vmul.f32 %v3628, %v3178
    %3652 = vrot.lane.b32.xlu0 %v3629, 96
    %v3653 = vpop.permute.xlu0 %3652
    %v3655 = vmul.f32 %v3609, %v3653
    %3657 = vrot.lane.b32.xlu0 %v3655, 80
    %v3658 = vpop.permute.xlu0 %3657
    %v3660 = vadd.f32 %v3649, %v3658
    %v3661 = vadd.f32 %v3650, %v3658
    %v3662 = vtanh.pop %v3660
    %v3663 = vtanh.pop %v3661
    %3666 = vrot.lane.b32.xlu0 %v3662, 32
    %v3667 = vpop.permute.xlu0 %3666
    %3668 = vrot.lane.b32.xlu0 %v3663, 32
    %v3669 = vpop.permute.xlu0 %3668
    %v3670 = vsel %vm779, %v3667, %v3669
    %v3673 = vmul.f32 %v3628, %v3667
    %v3674 = vmul.f32 %v3648, %v3670
    %3675 = vmatpush.msra.mxu0 0.0
    %3676 = vmatpush.msra.mxu0 0.0
    %3677 = vmatpush.msra.mxu0 0.0
    %3678 = vmatpush.msra.mxu0 0.0
    %3679 = vmatpush.msra.mxu0 0.0
    %3680 = vmatpush.msra.mxu0 0.0
    %3681 = vmatpush.msra.mxu0 0.0
    %3682 = vmatpush.msra.mxu0 0.0
    %3683 = vmatpush.msra.mxu0 0.0
    %3684 = vmatpush.msra.mxu0 0.0
    %3685 = vmatpush.msra.mxu0 0.0
    %3686 = vmatpush.msra.mxu0 %v232
    %3687 = vmatpush.msra.mxu0 %v230
    %3688 = vmatpush.msra.mxu0 %v228
    %3689 = vmatpush.msra.mxu0 %v226
    %3690 = vmatpush.msra.mxu0 %v224
    %3691 = vmatmul.f32.gmra.mxu0 %v3349
    %v3692 = vpop.f32.mrf.mxu0
    %v3693 = vadd.f32 0.0, %v3692
    %3694 = vdwg.mxu0
    %3695 = vmatpush.msra.mxu0 0.0
    %3696 = vmatpush.msra.mxu0 0.0
    %3697 = vmatpush.msra.mxu0 0.0
    %3698 = vmatpush.msra.mxu0 0.0
    %3699 = vmatpush.msra.mxu0 0.0
    %3700 = vmatpush.msra.mxu0 0.0
    %3701 = vmatpush.msra.mxu0 0.0
    %3702 = vmatpush.msra.mxu0 0.0
    %3703 = vmatpush.msra.mxu0 0.0
    %3704 = vmatpush.msra.mxu0 0.0
    %3705 = vmatpush.msra.mxu0 0.0
    %3706 = vmatpush.msra.mxu0 %v233
    %3707 = vmatpush.msra.mxu0 %v231
    %3708 = vmatpush.msra.mxu0 %v229
    %3709 = vmatpush.msra.mxu0 %v227
    %3710 = vmatpush.msra.mxu0 %v225
    %3711 = vmatmul.f32.gmra.mxu0 %v3349
    %v3712 = vpop.f32.mrf.mxu0
    %v3713 = vadd.f32 0.0, %v3712
    %3714 = vdwg.mxu0
    %v3717 = vrot.slane %v3693, 2
    %v3718 = vrot.slane %v3713, 2
    %v3721 = vadd.f32 %v199, %v3717
    %v3722 = vadd.f32 %v222, %v3718
    %v3723 = vxor.u32 %v3721, 2147483648
    %v3724 = vmul.f32 %v3723, 1.442695
    %v3725 = vpow.pop %v3724
    %v3726 = vadd.f32 %v3725, 1.0
    %v3727 = vrcp.pop %v3726
    %v3728 = vmul.f32 %v3726, %v3727
    %v3729 = vsub.f32 1.0, %v3728
    %v3730 = vmul.f32 %v3727, %v3729
    %v3731 = vadd.f32 %v3727, %v3730
    %vm3732 = vweird.f32 %v3726
    %vm3733 = vweird.f32 %v3727
    %vm3734 = vmor %vm3732, %vm3733
    %v3735 = vsel %vm3734, %v3727, %v3731
    %v3736 = vand.u32 2147483647, %v3726
    %vm3737 = vcmp.eq.f32.partialorder %v3736, 8.507059e+37
    %v3738 = vand.u32 %v3726, 2147483648
    %v3739 = vor.u32 1.1754944e-38, %v3738
    %v3740 = vsel %vm3737, %v3739, %v3735
    %v3741 = vmul.f32 1.0, %v3740
    %v3742 = vtanh.pop %v3721
    %v3743 = vxor.u32 %v3722, 2147483648
    %v3744 = vmul.f32 %v3743, 1.442695
    %v3745 = vpow.pop %v3744
    %v3746 = vadd.f32 %v3745, 1.0
    %v3747 = vrcp.pop %v3746
    %v3748 = vmul.f32 %v3746, %v3747
    %v3749 = vsub.f32 1.0, %v3748
    %v3750 = vmul.f32 %v3747, %v3749
    %v3751 = vadd.f32 %v3747, %v3750
    %vm3752 = vweird.f32 %v3746
    %vm3753 = vweird.f32 %v3747
    %vm3754 = vmor %vm3752, %vm3753
    %v3755 = vsel %vm3754, %v3747, %v3751
    %v3756 = vand.u32 2147483647, %v3746
    %vm3757 = vcmp.eq.f32.partialorder %v3756, 8.507059e+37
    %v3758 = vand.u32 %v3746, 2147483648
    %v3759 = vor.u32 1.1754944e-38, %v3758
    %v3760 = vsel %vm3757, %v3759, %v3755
    %v3761 = vmul.f32 1.0, %v3760
    %v3763 = vrot.slane %v3292, 6
    %v3765 = vmul.f32 %v3741, %v3763
    %3767 = vrot.lane.b32.xlu0 %v3742, 48
    %v3768 = vpop.permute.xlu0 %3767
    %v3770 = vmul.f32 %v3741, %v3768
    %3772 = vrot.lane.b32.xlu0 %v3770, 40
    %v3773 = vpop.permute.xlu0 %3772
    %v3775 = vadd.f32 %v3765, %v3773
    %v3776 = vtanh.pop %v3775
    %3778 = vrot.lane.b32.xlu0 %v3776, 80
    %v3779 = vpop.permute.xlu0 %3778
    %v3781 = vmul.f32 %v3741, %v3779
    %v3782 = vmul.f32 %v3761, %v3779
    %3783 = vmatpush.msra.mxu0 0.0
    %3784 = vmatpush.msra.mxu0 0.0
    %3785 = vmatpush.msra.mxu0 0.0
    %3786 = vmatpush.msra.mxu0 0.0
    %3787 = vmatpush.msra.mxu0 0.0
    %3788 = vmatpush.msra.mxu0 0.0
    %3789 = vmatpush.msra.mxu0 0.0
    %3790 = vmatpush.msra.mxu0 0.0
    %3791 = vmatpush.msra.mxu0 0.0
    %3792 = vmatpush.msra.mxu0 0.0
    %3793 = vmatpush.msra.mxu0 0.0
    %3794 = vmatpush.msra.mxu0 %v252
    %3795 = vmatpush.msra.mxu0 %v250
    %3796 = vmatpush.msra.mxu0 %v248
    %3797 = vmatpush.msra.mxu0 %v246
    %3798 = vmatpush.msra.mxu0 %v244
    %3799 = vmatmul.f32.gmra.mxu0 %v3526
    %v3800 = vpop.f32.mrf.mxu0
    %v3801 = vadd.f32 0.0, %v3800
    %3802 = vdwg.mxu0
    %3803 = vmatpush.msra.mxu0 0.0
    %3804 = vmatpush.msra.mxu0 0.0
    %3805 = vmatpush.msra.mxu0 0.0
    %3806 = vmatpush.msra.mxu0 0.0
    %3807 = vmatpush.msra.mxu0 0.0
    %3808 = vmatpush.msra.mxu0 0.0
    %3809 = vmatpush.msra.mxu0 0.0
    %3810 = vmatpush.msra.mxu0 0.0
    %3811 = vmatpush.msra.mxu0 0.0
    %3812 = vmatpush.msra.mxu0 0.0
    %3813 = vmatpush.msra.mxu0 0.0
    %3814 = vmatpush.msra.mxu0 %v253
    %3815 = vmatpush.msra.mxu0 %v251
    %3816 = vmatpush.msra.mxu0 %v249
    %3817 = vmatpush.msra.mxu0 %v247
    %3818 = vmatpush.msra.mxu0 %v245
    %3819 = vmatmul.f32.gmra.mxu0 %v3526
    %v3820 = vpop.f32.mrf.mxu0
    %v3821 = vadd.f32 0.0, %v3820
    %3822 = vdwg.mxu0
    %v3825 = vrot.slane %v3781, 6
    %v3826 = vrot.slane %v3782, 6
    %3827 = vrot.lane.b32.xlu0 %v3825, 8
    %v3828 = vpop.permute.xlu0 %3827
    %3829 = vrot.lane.b32.xlu0 %v3826, 8
    %v3830 = vpop.permute.xlu0 %3829
    %v3831 = vsel %vm450, %v3828, %v3830
    %v3832 = vsel %vm301, %v3831, 0
    %3834 = vmatpush.msra.mxu0 0.0
    %3835 = vmatpush.msra.mxu0 0.0
    %3836 = vmatpush.msra.mxu0 0.0
    %3837 = vmatpush.msra.mxu0 0.0
    %3838 = vmatpush.msra.mxu0 0.0
    %3839 = vmatpush.msra.mxu0 0.0
    %3840 = vmatpush.msra.mxu0 0.0
    %3841 = vmatpush.msra.mxu0 0.0
    %3842 = vmatpush.msra.mxu0 0.0
    %3843 = vmatpush.msra.mxu0 0.0
    %3844 = vmatpush.msra.mxu0 0.0
    %3845 = vmatpush.msra.mxu0 %v242
    %3846 = vmatpush.msra.mxu0 %v240
    %3847 = vmatpush.msra.mxu0 %v238
    %3848 = vmatpush.msra.mxu0 %v236
    %3849 = vmatpush.msra.mxu0 %v234
    %3850 = vmatmul.f32.gmra.mxu0 %v3832
    %v3851 = vpop.f32.mrf.mxu0
    %v3852 = vadd.f32 %v3801, %v3851
    %3853 = vdwg.mxu0
    %3854 = vmatpush.msra.mxu0 0.0
    %3855 = vmatpush.msra.mxu0 0.0
    %3856 = vmatpush.msra.mxu0 0.0
    %3857 = vmatpush.msra.mxu0 0.0
    %3858 = vmatpush.msra.mxu0 0.0
    %3859 = vmatpush.msra.mxu0 0.0
    %3860 = vmatpush.msra.mxu0 0.0
    %3861 = vmatpush.msra.mxu0 0.0
    %3862 = vmatpush.msra.mxu0 0.0
    %3863 = vmatpush.msra.mxu0 0.0
    %3864 = vmatpush.msra.mxu0 0.0
    %3865 = vmatpush.msra.mxu0 %v243
    %3866 = vmatpush.msra.mxu0 %v241
    %3867 = vmatpush.msra.mxu0 %v239
    %3868 = vmatpush.msra.mxu0 %v237
    %3869 = vmatpush.msra.mxu0 %v235
    %3870 = vmatmul.f32.gmra.mxu0 %v3832
    %v3871 = vpop.f32.mrf.mxu0
    %v3872 = vadd.f32 %v3821, %v3871
    %3873 = vdwg.mxu0
    %v3874 = vadd.f32 %v3852, %v495
    %v3875 = vadd.f32 %v3872, %v496
    %v3876 = vxor.u32 %v3874, 2147483648
    %v3877 = vmul.f32 %v3876, 1.442695
    %v3878 = vpow.pop %v3877
    %v3879 = vadd.f32 %v3878, 1.0
    %v3880 = vrcp.pop %v3879
    %v3881 = vmul.f32 %v3879, %v3880
    %v3882 = vsub.f32 1.0, %v3881
    %v3883 = vmul.f32 %v3880, %v3882
    %v3884 = vadd.f32 %v3880, %v3883
    %vm3885 = vweird.f32 %v3879
    %vm3886 = vweird.f32 %v3880
    %vm3887 = vmor %vm3885, %vm3886
    %v3888 = vsel %vm3887, %v3880, %v3884
    %v3889 = vand.u32 2147483647, %v3879
    %vm3890 = vcmp.eq.f32.partialorder %v3889, 8.507059e+37
    %v3891 = vand.u32 %v3879, 2147483648
    %v3892 = vor.u32 1.1754944e-38, %v3891
    %v3893 = vsel %vm3890, %v3892, %v3888
    %v3894 = vmul.f32 1.0, %v3893
    %v3895 = vtanh.pop %v3874
    %v3896 = vxor.u32 %v3875, 2147483648
    %v3897 = vmul.f32 %v3896, 1.442695
    %v3898 = vpow.pop %v3897
    %v3899 = vadd.f32 %v3898, 1.0
    %v3900 = vrcp.pop %v3899
    %v3901 = vmul.f32 %v3899, %v3900
    %v3902 = vsub.f32 1.0, %v3901
    %v3903 = vmul.f32 %v3900, %v3902
    %v3904 = vadd.f32 %v3900, %v3903
    %vm3905 = vweird.f32 %v3899
    %vm3906 = vweird.f32 %v3900
    %vm3907 = vmor %vm3905, %vm3906
    %v3908 = vsel %vm3907, %v3900, %v3904
    %v3909 = vand.u32 2147483647, %v3899
    %vm3910 = vcmp.eq.f32.partialorder %v3909, 8.507059e+37
    %v3911 = vand.u32 %v3899, 2147483648
    %v3912 = vor.u32 1.1754944e-38, %v3911
    %v3913 = vsel %vm3910, %v3912, %v3908
    %v3914 = vmul.f32 1.0, %v3913
    %v3915 = vmul.f32 %v3894, %v3442
    %3917 = vrot.lane.b32.xlu0 %v3895, 48
    %v3918 = vpop.permute.xlu0 %3917
    %v3920 = vmul.f32 %v3894, %v3918
    %3922 = vrot.lane.b32.xlu0 %v3920, 40
    %v3923 = vpop.permute.xlu0 %3922
    %v3925 = vadd.f32 %v3915, %v3923
    %v3926 = vtanh.pop %v3925
    %3928 = vrot.lane.b32.xlu0 %v3926, 80
    %v3929 = vpop.permute.xlu0 %3928
    %v3931 = vmul.f32 %v3894, %v3929
    %v3932 = vmul.f32 %v3914, %v3929
    %3935 = vrot.lane.b32.xlu0 %v3673, 16
    %v3936 = vpop.permute.xlu0 %3935
    %3937 = vrot.lane.b32.xlu0 %v3674, 16
    %v3938 = vpop.permute.xlu0 %3937
    %v3939 = vsel %vm171, %v3936, %v3938
    %v3940 = vsel %vm558, %v3939, 0
    %3942 = vmatpush.msra.mxu0 0.0
    %3943 = vmatpush.msra.mxu0 0.0
    %3944 = vmatpush.msra.mxu0 0.0
    %3945 = vmatpush.msra.mxu0 0.0
    %3946 = vmatpush.msra.mxu0 0.0
    %3947 = vmatpush.msra.mxu0 0.0
    %3948 = vmatpush.msra.mxu0 %v297
    %3949 = vmatpush.msra.mxu0 %v294
    %3950 = vmatpush.msra.mxu0 %v291
    %3951 = vmatpush.msra.mxu0 %v288
    %3952 = vmatpush.msra.mxu0 %v285
    %3953 = vmatpush.msra.mxu0 %v282
    %3954 = vmatpush.msra.mxu0 %v279
    %3955 = vmatpush.msra.mxu0 %v276
    %3956 = vmatpush.msra.mxu0 %v273
    %3957 = vmatpush.msra.mxu0 %v270
    %3958 = vmatmul.f32.gmra.mxu0 %v3940
    %v3959 = vpop.f32.mrf.mxu0
    %v3960 = vadd.f32 0.0, %v3959
    %3961 = vdwg.mxu0
    %3962 = vmatpush.msra.mxu0 0.0
    %3963 = vmatpush.msra.mxu0 0.0
    %3964 = vmatpush.msra.mxu0 0.0
    %3965 = vmatpush.msra.mxu0 0.0
    %3966 = vmatpush.msra.mxu0 0.0
    %3967 = vmatpush.msra.mxu0 0.0
    %3968 = vmatpush.msra.mxu0 %v298
    %3969 = vmatpush.msra.mxu0 %v295
    %3970 = vmatpush.msra.mxu0 %v292
    %3971 = vmatpush.msra.mxu0 %v289
    %3972 = vmatpush.msra.mxu0 %v286
    %3973 = vmatpush.msra.mxu0 %v283
    %3974 = vmatpush.msra.mxu0 %v280
    %3975 = vmatpush.msra.mxu0 %v277
    %3976 = vmatpush.msra.mxu0 %v274
    %3977 = vmatpush.msra.mxu0 %v271
    %3978 = vmatmul.f32.gmra.mxu0 %v3940
    %v3979 = vpop.f32.mrf.mxu0
    %v3980 = vadd.f32 0.0, %v3979
    %3981 = vdwg.mxu0
    %3982 = vmatpush.msra.mxu0 0.0
    %3983 = vmatpush.msra.mxu0 0.0
    %3984 = vmatpush.msra.mxu0 0.0
    %3985 = vmatpush.msra.mxu0 0.0
    %3986 = vmatpush.msra.mxu0 0.0
    %3987 = vmatpush.msra.mxu0 0.0
    %3988 = vmatpush.msra.mxu0 %v299
    %3989 = vmatpush.msra.mxu0 %v296
    %3990 = vmatpush.msra.mxu0 %v293
    %3991 = vmatpush.msra.mxu0 %v290
    %3992 = vmatpush.msra.mxu0 %v287
    %3993 = vmatpush.msra.mxu0 %v284
    %3994 = vmatpush.msra.mxu0 %v281
    %3995 = vmatpush.msra.mxu0 %v278
    %3996 = vmatpush.msra.mxu0 %v275
    %3997 = vmatpush.msra.mxu0 %v272
    %3998 = vmatmul.f32.gmra.mxu0 %v3940
    %v3999 = vpop.f32.mrf.mxu0
    %v4000 = vadd.f32 0.0, %v3999
    %4001 = vdwg.mxu0
    %4004 = vrot.lane.b32.xlu0 %v3931, 8
    %v4005 = vpop.permute.xlu0 %4004
    %4006 = vrot.lane.b32.xlu0 %v3932, 8
    %v4007 = vpop.permute.xlu0 %4006
    %v4008 = vsel %vm450, %v4005, %v4007
    %v4009 = vsel %vm301, %v4008, 0
    %4011 = vmatpush.msra.mxu0 0.0
    %4012 = vmatpush.msra.mxu0 0.0
    %4013 = vmatpush.msra.mxu0 0.0
    %4014 = vmatpush.msra.mxu0 0.0
    %4015 = vmatpush.msra.mxu0 0.0
    %4016 = vmatpush.msra.mxu0 0.0
    %4017 = vmatpush.msra.mxu0 0.0
    %4018 = vmatpush.msra.mxu0 0.0
    %4019 = vmatpush.msra.mxu0 0.0
    %4020 = vmatpush.msra.mxu0 0.0
    %4021 = vmatpush.msra.mxu0 0.0
    %4022 = vmatpush.msra.mxu0 %v267
    %4023 = vmatpush.msra.mxu0 %v264
    %4024 = vmatpush.msra.mxu0 %v261
    %4025 = vmatpush.msra.mxu0 %v258
    %4026 = vmatpush.msra.mxu0 %v255
    %4027 = vmatmul.f32.gmra.mxu0 %v4009
    %v4028 = vpop.f32.mrf.mxu0
    %v4029 = vadd.f32 %v3960, %v4028
    %4030 = vdwg.mxu0
    %4031 = vmatpush.msra.mxu0 0.0
    %4032 = vmatpush.msra.mxu0 0.0
    %4033 = vmatpush.msra.mxu0 0.0
    %4034 = vmatpush.msra.mxu0 0.0
    %4035 = vmatpush.msra.mxu0 0.0
    %4036 = vmatpush.msra.mxu0 0.0
    %4037 = vmatpush.msra.mxu0 0.0
    %4038 = vmatpush.msra.mxu0 0.0
    %4039 = vmatpush.msra.mxu0 0.0
    %4040 = vmatpush.msra.mxu0 0.0
    %4041 = vmatpush.msra.mxu0 0.0
    %4042 = vmatpush.msra.mxu0 %v268
    %4043 = vmatpush.msra.mxu0 %v265
    %4044 = vmatpush.msra.mxu0 %v262
    %4045 = vmatpush.msra.mxu0 %v259
    %4046 = vmatpush.msra.mxu0 %v256
    %4047 = vmatmul.f32.gmra.mxu0 %v4009
    %v4048 = vpop.f32.mrf.mxu0
    %v4049 = vadd.f32 %v3980, %v4048
    %4050 = vdwg.mxu0
    %4051 = vmatpush.msra.mxu0 0.0
    %4052 = vmatpush.msra.mxu0 0.0
    %4053 = vmatpush.msra.mxu0 0.0
    %4054 = vmatpush.msra.mxu0 0.0
    %4055 = vmatpush.msra.mxu0 0.0
    %4056 = vmatpush.msra.mxu0 0.0
    %4057 = vmatpush.msra.mxu0 0.0
    %4058 = vmatpush.msra.mxu0 0.0
    %4059 = vmatpush.msra.mxu0 0.0
    %4060 = vmatpush.msra.mxu0 0.0
    %4061 = vmatpush.msra.mxu0 0.0
    %4062 = vmatpush.msra.mxu0 %v269
    %4063 = vmatpush.msra.mxu0 %v266
    %4064 = vmatpush.msra.mxu0 %v263
    %4065 = vmatpush.msra.mxu0 %v260
    %4066 = vmatpush.msra.mxu0 %v257
    %4067 = vmatmul.f32.gmra.mxu0 %v4009
    %v4068 = vpop.f32.mrf.mxu0
    %v4069 = vadd.f32 %v4000, %v4068
    %4070 = vdwg.mxu0
    %v4071 = vadd.f32 %v4029, %v691
    %v4072 = vadd.f32 %v4049, %v692
    %v4073 = vadd.f32 %v4069, %v693
    %v4074 = vxor.u32 %v4071, 2147483648
    %v4075 = vmul.f32 %v4074, 1.442695
    %v4076 = vpow.pop %v4075
    %v4077 = vadd.f32 %v4076, 1.0
    %v4078 = vrcp.pop %v4077
    %v4079 = vmul.f32 %v4077, %v4078
    %v4080 = vsub.f32 1.0, %v4079
    %v4081 = vmul.f32 %v4078, %v4080
    %v4082 = vadd.f32 %v4078, %v4081
    %vm4083 = vweird.f32 %v4077
    %vm4084 = vweird.f32 %v4078
    %vm4085 = vmor %vm4083, %vm4084
    %v4086 = vsel %vm4085, %v4078, %v4082
    %v4087 = vand.u32 2147483647, %v4077
    %vm4088 = vcmp.eq.f32.partialorder %v4087, 8.507059e+37
    %v4089 = vand.u32 %v4077, 2147483648
    %v4090 = vor.u32 1.1754944e-38, %v4089
    %v4091 = vsel %vm4088, %v4090, %v4086
    %v4092 = vmul.f32 1.0, %v4091
    %v4093 = vxor.u32 %v4072, 2147483648
    %v4094 = vmul.f32 %v4093, 1.442695
    %v4095 = vpow.pop %v4094
    %v4096 = vadd.f32 %v4095, 1.0
    %v4097 = vrcp.pop %v4096
    %v4098 = vmul.f32 %v4096, %v4097
    %v4099 = vsub.f32 1.0, %v4098
    %v4100 = vmul.f32 %v4097, %v4099
    %v4101 = vadd.f32 %v4097, %v4100
    %vm4102 = vweird.f32 %v4096
    %vm4103 = vweird.f32 %v4097
    %vm4104 = vmor %vm4102, %vm4103
    %v4105 = vsel %vm4104, %v4097, %v4101
    %v4106 = vand.u32 2147483647, %v4096
    %vm4107 = vcmp.eq.f32.partialorder %v4106, 8.507059e+37
    %v4108 = vand.u32 %v4096, 2147483648
    %v4109 = vor.u32 1.1754944e-38, %v4108
    %v4110 = vsel %vm4107, %v4109, %v4105
    %v4111 = vmul.f32 1.0, %v4110
    %v4112 = vtanh.pop %v4072
    %v4113 = vxor.u32 %v4073, 2147483648
    %v4114 = vmul.f32 %v4113, 1.442695
    %v4115 = vpow.pop %v4114
    %v4116 = vadd.f32 %v4115, 1.0
    %v4117 = vrcp.pop %v4116
    %v4118 = vmul.f32 %v4116, %v4117
    %v4119 = vsub.f32 1.0, %v4118
    %v4120 = vmul.f32 %v4117, %v4119
    %v4121 = vadd.f32 %v4117, %v4120
    %vm4122 = vweird.f32 %v4116
    %vm4123 = vweird.f32 %v4117
    %vm4124 = vmor %vm4122, %vm4123
    %v4125 = vsel %vm4124, %v4117, %v4121
    %v4126 = vand.u32 2147483647, %v4116
    %vm4127 = vcmp.eq.f32.partialorder %v4126, 8.507059e+37
    %v4128 = vand.u32 %v4116, 2147483648
    %v4129 = vor.u32 1.1754944e-38, %v4128
    %v4130 = vsel %vm4127, %v4129, %v4125
    %v4131 = vmul.f32 1.0, %v4130
    %v4132 = vmul.f32 %v4092, %v3660
    %v4133 = vmul.f32 %v4111, %v3661
    %4135 = vrot.lane.b32.xlu0 %v4112, 96
    %v4136 = vpop.permute.xlu0 %4135
    %v4138 = vmul.f32 %v4092, %v4136
    %4140 = vrot.lane.b32.xlu0 %v4138, 80
    %v4141 = vpop.permute.xlu0 %4140
    %v4143 = vadd.f32 %v4132, %v4141
    %v4144 = vadd.f32 %v4133, %v4141
    %v4145 = vtanh.pop %v4143
    %v4146 = vtanh.pop %v4144
    %4149 = vrot.lane.b32.xlu0 %v4145, 32
    %v4150 = vpop.permute.xlu0 %4149
    %4151 = vrot.lane.b32.xlu0 %v4146, 32
    %v4152 = vpop.permute.xlu0 %4151
    %v4153 = vsel %vm779, %v4150, %v4152
    %v4156 = vmul.f32 %v4111, %v4150
    %v4157 = vmul.f32 %v4131, %v4153
    %4160 = vrot.lane.b32.xlu0 %v4156, 16
    %v4161 = vpop.permute.xlu0 %4160
    %4162 = vrot.lane.b32.xlu0 %v4157, 16
    %v4163 = vpop.permute.xlu0 %4162
    %v4164 = vsel %vm171, %v4161, %v4163
    %vm4166 = vcmask 648192
    %4167 = vst.msk [vmem:[#allocation16] sm:$0x3] %vm4166, %v4164
    // Predicated region
    $region74: #{tpu_custom_call.1} parent=1 // pred_check
      _
    $region75: #{tpu_custom_call.1} parent=1 // pred_check_branch
      %4169 = sbr.rel (0) target = $region77
    $region76: #{tpu_custom_call.1} parent=1 // pred_region
      %4171 = vsyncadd [#allocation4], 0
      %s4173 = sshll.u32 [#allocation16], 4
      %s4174 = int_to_ptr.vmem [resolvable:$true] %s4173
      %s4175 = sshll.u32 %s10, 4
      %s4176 = int_to_ptr.hbm [resolvable:$true] %s4175
      %4178 = dma.vmem_to_hbm [thread:$0]  %s4174, 32, %s4176, [#allocation4]
    $region77: #{tpu_custom_call.1} parent=1 // pred_fallthru
      _
    // Predicated region
    $region78: #{tpu_custom_call.1} parent=1 // pred_check
      _
    $region79: #{tpu_custom_call.1} parent=1 // pred_check_branch
      %4180 = sbr.rel (0) target = $region81
    $region80: #{tpu_custom_call.1} parent=1 // pred_region
      %4182 = dma.done [#allocation4], 32
    $region81: #{tpu_custom_call.1} parent=1 // pred_fallthru
      _
    %4183 = vsyncpa [#allocation3], 1
    %4184 = vsyncpa [#allocation6], 1
    %4185 = vsyncpa [#allocation9], 1
    %4186 = vsyncpa [#allocation12], 1
    %4187 = vsyncpa [#allocation15], 1
    %4188 = vsyncpa [#allocation4], 1

</llo_original>
